<compile_context>
chip_gen: v7x
topology: tpu7x:2x2x1
jax: 0.10.0
libtpu: 0.0.40
codegen_flags: <defaults>
</compile_context>

<pallas_src>
import jax
import jax.numpy as jnp
from jax.experimental import pallas as pl
from jax.experimental.pallas import tpu as pltpu


def _round_up(v, m):
    return ((v + m - 1) // m) * m


def ginjk_kernel(eps_ref,                          # SMEM [L]        f32
                 x_ref,                            # VMEM [Np, H]    f32
                 g_ref,                            # VMEM [Ep, Np]   bf16 (0/1 src one-hot)
                 s_ref,                            # VMEM [Np, Ep]   bf16 (0/1 dst one-hot^T)
                 ea_ref,                           # VMEM [Ep, 1]    f32
                 inv_deg_ref,                      # VMEM [Np, 1]    f32
                 we_ref, be_ref,                   # VMEM [L, 1, H]  f32
                 w1_ref, b1_ref, w2_ref, b2_ref,   # VMEM [L, H, H] / [L, 1, H]
                 out_ref):                         # VMEM [Np, L*H]  f32
    num_layers, _, hidden = w1_ref.shape

    g = g_ref[...]                                 # bf16, loaded once
    s = s_ref[...]                                 # bf16, loaded once
    ea = ea_ref[...]                               # f32
    inv_deg = inv_deg_ref[...]                     # f32
    cur = x_ref[...]                               # f32 node state, carried in vregs/VMEM

    for l in range(num_layers):                    # unrolled in-kernel layer loop
        # edge_encoder: Linear(1, H) -> edge_attr * W_e^T + b_e
        edge_emb = ea * we_ref[l] + be_ref[l]                       # [Ep, H] f32

        # message: relu(x_j + edge_emb); gather via bf16 one-hot MXU matmul (exact 0/1)
        x_src = jnp.dot(g, cur.astype(jnp.bfloat16),
                        preferred_element_type=jnp.float32)        # [Ep, H] f32
        msg = jnp.maximum(x_src + edge_emb, 0.0)                    # [Ep, H]

        # aggregate: scatter-sum on the MXU (bf16), mean normalization on the VPU (f32)
        agg = jnp.dot(s, msg.astype(jnp.bfloat16),
                      preferred_element_type=jnp.float32) * inv_deg  # [Np, H]

        # GIN update: relu(mlp((1+eps)*x + agg)),  mlp = Lin -> ReLU -> Lin
        z = (1.0 + eps_ref[l]) * cur + agg                           # eps is an SMEM scalar
        h1 = jnp.maximum(
            jnp.dot(z, w1_ref[l], preferred_element_type=jnp.float32) + b1_ref[l],
            0.0)
        h = jnp.maximum(
            jnp.dot(h1, w2_ref[l], preferred_element_type=jnp.float32) + b2_ref[l],
            0.0)                                                     # [Np, H]

        # JK concat: write layer l's H-wide, lane-aligned column block
        out_ref[:, l * hidden:(l + 1) * hidden] = h
        cur = h


def ginjk_forward(x, edge_index, edge_attr, params):
    """GINJKFlag_node.forward (perturb=None, batch unused). Returns [N, L*H]."""
    N, H = x.shape
    E = edge_index.shape[1]
    L = params["w1"].shape[0]

    # Pad nodes / edges up to multiples of 128 for aligned MXU operands.
    Np = _round_up(max(N, 8), 128)
    Ep = _round_up(max(E, 8), 128)

    src, dst = edge_index[0], edge_index[1]

    # Gather operator G[e, src[e]] = 1 (bf16, exact). Padded edge rows are zero.
    G = jax.nn.one_hot(src, Np, dtype=jnp.bfloat16)                  # [E, Np]
    G = jnp.pad(G, ((0, Ep - E), (0, 0)))                            # [Ep, Np]

    # Scatter-SUM operator S[i, e] = (dst[e] == i) (bf16, exact);
    # mean normalization is applied separately in f32.
    dst_oh = jax.nn.one_hot(dst, Np, dtype=jnp.float32)              # [E, Np]
    deg = jnp.maximum(dst_oh.sum(axis=0), 1.0)                       # [Np]
    S = jnp.pad(dst_oh.T.astype(jnp.bfloat16), ((0, 0), (0, Ep - E)))  # [Np, Ep]
    inv_deg = (1.0 / deg)[:, None].astype(jnp.float32)               # [Np, 1]

    x_p = jnp.pad(x, ((0, Np - N), (0, 0)))                          # [Np, H]
    ea_p = jnp.pad(edge_attr, ((0, Ep - E), (0, 0)))                 # [Ep, 1]

    vmem = pl.BlockSpec(memory_space=pltpu.MemorySpace.VMEM)
    smem = pl.BlockSpec(memory_space=pltpu.MemorySpace.SMEM)

    out = pl.pallas_call(
        ginjk_kernel,
        out_shape=jax.ShapeDtypeStruct((Np, L * H), jnp.float32),
        in_specs=[smem] + [vmem] * 11,
        out_specs=vmem,
        compiler_params=pltpu.CompilerParams(
            vmem_limit_bytes=32 * 1024 * 1024),   # explicit, well under v7x's 64 MiB
    )(params["eps"], x_p, G, S, ea_p, inv_deg,
      params["we"], params["be"],
      params["w1"], params["b1"], params["w2"], params["b2"])

    return out[:N]


def ginjk_reference(x, edge_index, edge_attr, params):
    """Pure-JAX f32 reference mirroring the PyTorch semantics."""
    N, H = x.shape
    L = params["w1"].shape[0]
    src, dst = edge_index[0], edge_index[1]
    deg = jnp.maximum(jnp.zeros((N,), jnp.float32).at[dst].add(1.0), 1.0)
    h = x
    hs = []
    for l in range(L):
        edge_emb = edge_attr * params["we"][l, 0][None, :] + params["be"][l, 0][None, :]
        msg = jnp.maximum(h[src] + edge_emb, 0.0)
        agg = jnp.zeros((N, H), jnp.float32).at[dst].add(msg) / deg[:, None]
        z = (1.0 + params["eps"][l]) * h + agg
        h1 = jnp.maximum(z @ params["w1"][l] + params["b1"][l, 0], 0.0)
        h = jnp.maximum(h1 @ params["w2"][l] + params["b2"][l, 0], 0.0)
        hs.append(h)
    return jnp.concatenate(hs, axis=1)


def init_params(key, num_layers, hidden):
    ks = jax.random.split(key, 6)
    scale = 1.0 / jnp.sqrt(hidden)
    return {
        # edge_encoder Linear(1, hidden): weight stored as W^T row [1, H]
        "we": jax.random.normal(ks[0], (num_layers, 1, hidden), jnp.float32) * 0.5,
        "be": jax.random.normal(ks[1], (num_layers, 1, hidden), jnp.float32) * 0.1,
        # GIN eps initialized to 0 (as in the module); scalar-per-layer, lives in SMEM
        "eps": jnp.zeros((num_layers,), jnp.float32),
        # mlp Linear weights stored pre-transposed ([in, out]) for z @ W
        "w1": jax.random.normal(ks[2], (num_layers, hidden, hidden), jnp.float32) * scale,
        "b1": jax.random.normal(ks[3], (num_layers, 1, hidden), jnp.float32) * 0.1,
        "w2": jax.random.normal(ks[4], (num_layers, hidden, hidden), jnp.float32) * scale,
        "b2": jax.random.normal(ks[5], (num_layers, 1, hidden), jnp.float32) * 0.1,
    }


if __name__ == "__main__":
    N, H, E, L = 16, 128, 32, 4          # nodes, hidden, edges, num_layers
    key = jax.random.PRNGKey(0)
    kx, ke, ka, kp = jax.random.split(key, 4)

    x = jax.random.normal(kx, (N, H), jnp.float32)                  # node features [N, hidden]
    edge_index = jax.random.randint(ke, (2, E), 0, N, jnp.int32)    # [2, E]
    edge_attr = jax.random.normal(ka, (E, 1), jnp.float32)          # [E, 1]
    params = init_params(kp, L, H)

    out = ginjk_forward(x, edge_index, edge_attr, params)
    out = jax.block_until_ready(out)

    ref = ginjk_reference(x, edge_index, edge_attr, params)
    assert out.shape == (N, L * H)
    # Tolerance relaxed vs a pure-f32 kernel because the gather/scatter matmul
    # activations are intentionally cast to bf16 for the MXU (0/1 operators are
    # exact; only activation rounding ~0.4% relative remains).
    assert jnp.allclose(out, ref, atol=5e-2, rtol=5e-2), "mismatch vs reference"

    print("KERNEL_OK")
</pallas_src>

<mosaic_0001>
module attributes {stable_mosaic.version = 11 : i64} {
  func.func @ginjk_kernel(%arg0: memref<4xf32, #tpu.memory_space<smem>>, %arg1: memref<128x128xf32, #tpu.memory_space<vmem>>, %arg2: memref<128x128xbf16, #tpu.memory_space<vmem>>, %arg3: memref<128x128xbf16, #tpu.memory_space<vmem>>, %arg4: memref<128x1xf32, #tpu.memory_space<vmem>>, %arg5: memref<128x1xf32, #tpu.memory_space<vmem>>, %arg6: memref<4x1x128xf32, #tpu.memory_space<vmem>>, %arg7: memref<4x1x128xf32, #tpu.memory_space<vmem>>, %arg8: memref<4x128x128xf32, #tpu.memory_space<vmem>>, %arg9: memref<4x1x128xf32, #tpu.memory_space<vmem>>, %arg10: memref<4x128x128xf32, #tpu.memory_space<vmem>>, %arg11: memref<4x1x128xf32, #tpu.memory_space<vmem>>, %arg12: memref<128x512xf32, #tpu.memory_space<vmem>>) attributes {dimension_semantics = [], scalar_prefetch = 0 : i64, scratch_operands = 0 : i64, tpu.core_type = #tpu.core_type<tc>} {
    %c0 = arith.constant 0 : index
    %c0_0 = arith.constant 0 : index
    %0 = vector.load %arg2[%c0, %c0_0] : memref<128x128xbf16, #tpu.memory_space<vmem>>, vector<128x128xbf16>
    %c0_1 = arith.constant 0 : index
    %c0_2 = arith.constant 0 : index
    %1 = vector.load %arg3[%c0_1, %c0_2] : memref<128x128xbf16, #tpu.memory_space<vmem>>, vector<128x128xbf16>
    %c0_3 = arith.constant 0 : index
    %c0_4 = arith.constant 0 : index
    %2 = vector.load %arg4[%c0_3, %c0_4] : memref<128x1xf32, #tpu.memory_space<vmem>>, vector<128x1xf32>
    %c0_5 = arith.constant 0 : index
    %c0_6 = arith.constant 0 : index
    %3 = vector.load %arg5[%c0_5, %c0_6] : memref<128x1xf32, #tpu.memory_space<vmem>>, vector<128x1xf32>
    %c0_7 = arith.constant 0 : index
    %c0_8 = arith.constant 0 : index
    %4 = vector.load %arg1[%c0_7, %c0_8] : memref<128x128xf32, #tpu.memory_space<vmem>>, vector<128x128xf32>
    %c0_9 = arith.constant 0 : index
    %c0_10 = arith.constant 0 : index
    %c0_11 = arith.constant 0 : index
    %5 = vector.load %arg6[%c0_9, %c0_10, %c0_11] : memref<4x1x128xf32, #tpu.memory_space<vmem>>, vector<1x1x128xf32>
    %6 = vector.shape_cast %5 : vector<1x1x128xf32> to vector<1x128xf32>
    %7 = vector.broadcast %2 : vector<128x1xf32> to vector<128x128xf32>
    %8 = vector.broadcast %6 : vector<1x128xf32> to vector<128x128xf32>
    %9 = arith.mulf %7, %8 : vector<128x128xf32>
    %c0_12 = arith.constant 0 : index
    %c0_13 = arith.constant 0 : index
    %c0_14 = arith.constant 0 : index
    %10 = vector.load %arg7[%c0_12, %c0_13, %c0_14] : memref<4x1x128xf32, #tpu.memory_space<vmem>>, vector<1x1x128xf32>
    %11 = vector.shape_cast %10 : vector<1x1x128xf32> to vector<1x128xf32>
    %12 = vector.broadcast %11 : vector<1x128xf32> to vector<128x128xf32>
    %13 = arith.addf %9, %12 : vector<128x128xf32>
    %14 = arith.truncf %4 : vector<128x128xf32> to vector<128x128xbf16>
    %cst = arith.constant dense<0.000000e+00> : vector<128x128xf32>
    %15 = tpu.matmul %0, %14, %cst {dimension_numbers = #tpu.dot_dimension_numbers<[1], [0], [0], [1], [0, 0, 1, 1], [], []>} : vector<128x128xbf16>, vector<128x128xbf16>, vector<128x128xf32> -> vector<128x128xf32>
    %16 = arith.addf %15, %13 : vector<128x128xf32>
    %cst_15 = arith.constant 0.000000e+00 : f32
    %17 = vector.broadcast %cst_15 : f32 to vector<128x128xf32>
    %18 = arith.maximumf %16, %17 : vector<128x128xf32>
    %19 = arith.truncf %18 : vector<128x128xf32> to vector<128x128xbf16>
    %cst_16 = arith.constant dense<0.000000e+00> : vector<128x128xf32>
    %20 = tpu.matmul %1, %19, %cst_16 {dimension_numbers = #tpu.dot_dimension_numbers<[1], [0], [0], [1], [0, 0, 1, 1], [], []>} : vector<128x128xbf16>, vector<128x128xbf16>, vector<128x128xf32> -> vector<128x128xf32>
    %21 = vector.broadcast %3 : vector<128x1xf32> to vector<128x128xf32>
    %22 = arith.mulf %20, %21 : vector<128x128xf32>
    %c0_17 = arith.constant 0 : index
    %23 = memref.load %arg0[%c0_17] : memref<4xf32, #tpu.memory_space<smem>>
    %cst_18 = arith.constant 1.000000e+00 : f32
    %24 = arith.addf %cst_18, %23 : f32
    %25 = vector.broadcast %24 : f32 to vector<128x128xf32>
    %26 = arith.mulf %25, %4 : vector<128x128xf32>
    %27 = arith.addf %26, %22 : vector<128x128xf32>
    %c0_19 = arith.constant 0 : index
    %c0_20 = arith.constant 0 : index
    %c0_21 = arith.constant 0 : index
    %28 = vector.load %arg8[%c0_19, %c0_20, %c0_21] : memref<4x128x128xf32, #tpu.memory_space<vmem>>, vector<1x128x128xf32>
    %29 = vector.shape_cast %28 : vector<1x128x128xf32> to vector<128x128xf32>
    %cst_22 = arith.constant dense<0.000000e+00> : vector<128x128xf32>
    %30 = tpu.matmul %27, %29, %cst_22 {dimension_numbers = #tpu.dot_dimension_numbers<[1], [0], [0], [1], [0, 0, 1, 1], [], []>} : vector<128x128xf32>, vector<128x128xf32>, vector<128x128xf32> -> vector<128x128xf32>
    %c0_23 = arith.constant 0 : index
    %c0_24 = arith.constant 0 : index
    %c0_25 = arith.constant 0 : index
    %31 = vector.load %arg9[%c0_23, %c0_24, %c0_25] : memref<4x1x128xf32, #tpu.memory_space<vmem>>, vector<1x1x128xf32>
    %32 = vector.shape_cast %31 : vector<1x1x128xf32> to vector<1x128xf32>
    %33 = vector.broadcast %32 : vector<1x128xf32> to vector<128x128xf32>
    %34 = arith.addf %30, %33 : vector<128x128xf32>
    %cst_26 = arith.constant 0.000000e+00 : f32
    %35 = vector.broadcast %cst_26 : f32 to vector<128x128xf32>
    %36 = arith.maximumf %34, %35 : vector<128x128xf32>
    %c0_27 = arith.constant 0 : index
    %c0_28 = arith.constant 0 : index
    %c0_29 = arith.constant 0 : index
    %37 = vector.load %arg10[%c0_27, %c0_28, %c0_29] : memref<4x128x128xf32, #tpu.memory_space<vmem>>, vector<1x128x128xf32>
    %38 = vector.shape_cast %37 : vector<1x128x128xf32> to vector<128x128xf32>
    %cst_30 = arith.constant dense<0.000000e+00> : vector<128x128xf32>
    %39 = tpu.matmul %36, %38, %cst_30 {dimension_numbers = #tpu.dot_dimension_numbers<[1], [0], [0], [1], [0, 0, 1, 1], [], []>} : vector<128x128xf32>, vector<128x128xf32>, vector<128x128xf32> -> vector<128x128xf32>
    %c0_31 = arith.constant 0 : index
    %c0_32 = arith.constant 0 : index
    %c0_33 = arith.constant 0 : index
    %40 = vector.load %arg11[%c0_31, %c0_32, %c0_33] : memref<4x1x128xf32, #tpu.memory_space<vmem>>, vector<1x1x128xf32>
    %41 = vector.shape_cast %40 : vector<1x1x128xf32> to vector<1x128xf32>
    %42 = vector.broadcast %41 : vector<1x128xf32> to vector<128x128xf32>
    %43 = arith.addf %39, %42 : vector<128x128xf32>
    %cst_34 = arith.constant 0.000000e+00 : f32
    %44 = vector.broadcast %cst_34 : f32 to vector<128x128xf32>
    %45 = arith.maximumf %43, %44 : vector<128x128xf32>
    %c0_35 = arith.constant 0 : index
    %c0_36 = arith.constant 0 : index
    %46 = vector.load %arg12[%c0_35, %c0_36] : memref<128x512xf32, #tpu.memory_space<vmem>>, vector<128x128xf32>
    tpu.vector_store %arg12[%c0_35, %c0_36], %45 {strides = array<i32>} : memref<128x512xf32, #tpu.memory_space<vmem>>, vector<128x128xf32>,
    %c1 = arith.constant 1 : index
    %c0_37 = arith.constant 0 : index
    %c0_38 = arith.constant 0 : index
    %47 = vector.load %arg6[%c1, %c0_37, %c0_38] : memref<4x1x128xf32, #tpu.memory_space<vmem>>, vector<1x1x128xf32>
    %48 = vector.shape_cast %47 : vector<1x1x128xf32> to vector<1x128xf32>
    %49 = vector.broadcast %2 : vector<128x1xf32> to vector<128x128xf32>
    %50 = vector.broadcast %48 : vector<1x128xf32> to vector<128x128xf32>
    %51 = arith.mulf %49, %50 : vector<128x128xf32>
    %c1_39 = arith.constant 1 : index
    %c0_40 = arith.constant 0 : index
    %c0_41 = arith.constant 0 : index
    %52 = vector.load %arg7[%c1_39, %c0_40, %c0_41] : memref<4x1x128xf32, #tpu.memory_space<vmem>>, vector<1x1x128xf32>
    %53 = vector.shape_cast %52 : vector<1x1x128xf32> to vector<1x128xf32>
    %54 = vector.broadcast %53 : vector<1x128xf32> to vector<128x128xf32>
    %55 = arith.addf %51, %54 : vector<128x128xf32>
    %56 = arith.truncf %45 : vector<128x128xf32> to vector<128x128xbf16>
    %cst_42 = arith.constant dense<0.000000e+00> : vector<128x128xf32>
    %57 = tpu.matmul %0, %56, %cst_42 {dimension_numbers = #tpu.dot_dimension_numbers<[1], [0], [0], [1], [0, 0, 1, 1], [], []>} : vector<128x128xbf16>, vector<128x128xbf16>, vector<128x128xf32> -> vector<128x128xf32>
    %58 = arith.addf %57, %55 : vector<128x128xf32>
    %cst_43 = arith.constant 0.000000e+00 : f32
    %59 = vector.broadcast %cst_43 : f32 to vector<128x128xf32>
    %60 = arith.maximumf %58, %59 : vector<128x128xf32>
    %61 = arith.truncf %60 : vector<128x128xf32> to vector<128x128xbf16>
    %cst_44 = arith.constant dense<0.000000e+00> : vector<128x128xf32>
    %62 = tpu.matmul %1, %61, %cst_44 {dimension_numbers = #tpu.dot_dimension_numbers<[1], [0], [0], [1], [0, 0, 1, 1], [], []>} : vector<128x128xbf16>, vector<128x128xbf16>, vector<128x128xf32> -> vector<128x128xf32>
    %63 = vector.broadcast %3 : vector<128x1xf32> to vector<128x128xf32>
    %64 = arith.mulf %62, %63 : vector<128x128xf32>
    %c1_45 = arith.constant 1 : index
    %65 = memref.load %arg0[%c1_45] : memref<4xf32, #tpu.memory_space<smem>>
    %cst_46 = arith.constant 1.000000e+00 : f32
    %66 = arith.addf %cst_46, %65 : f32
    %67 = vector.broadcast %66 : f32 to vector<128x128xf32>
    %68 = arith.mulf %67, %45 : vector<128x128xf32>
    %69 = arith.addf %68, %64 : vector<128x128xf32>
    %c1_47 = arith.constant 1 : index
    %c0_48 = arith.constant 0 : index
    %c0_49 = arith.constant 0 : index
    %70 = vector.load %arg8[%c1_47, %c0_48, %c0_49] : memref<4x128x128xf32, #tpu.memory_space<vmem>>, vector<1x128x128xf32>
    %71 = vector.shape_cast %70 : vector<1x128x128xf32> to vector<128x128xf32>
    %cst_50 = arith.constant dense<0.000000e+00> : vector<128x128xf32>
    %72 = tpu.matmul %69, %71, %cst_50 {dimension_numbers = #tpu.dot_dimension_numbers<[1], [0], [0], [1], [0, 0, 1, 1], [], []>} : vector<128x128xf32>, vector<128x128xf32>, vector<128x128xf32> -> vector<128x128xf32>
    %c1_51 = arith.constant 1 : index
    %c0_52 = arith.constant 0 : index
    %c0_53 = arith.constant 0 : index
    %73 = vector.load %arg9[%c1_51, %c0_52, %c0_53] : memref<4x1x128xf32, #tpu.memory_space<vmem>>, vector<1x1x128xf32>
    %74 = vector.shape_cast %73 : vector<1x1x128xf32> to vector<1x128xf32>
    %75 = vector.broadcast %74 : vector<1x128xf32> to vector<128x128xf32>
    %76 = arith.addf %72, %75 : vector<128x128xf32>
    %cst_54 = arith.constant 0.000000e+00 : f32
    %77 = vector.broadcast %cst_54 : f32 to vector<128x128xf32>
    %78 = arith.maximumf %76, %77 : vector<128x128xf32>
    %c1_55 = arith.constant 1 : index
    %c0_56 = arith.constant 0 : index
    %c0_57 = arith.constant 0 : index
    %79 = vector.load %arg10[%c1_55, %c0_56, %c0_57] : memref<4x128x128xf32, #tpu.memory_space<vmem>>, vector<1x128x128xf32>
    %80 = vector.shape_cast %79 : vector<1x128x128xf32> to vector<128x128xf32>
    %cst_58 = arith.constant dense<0.000000e+00> : vector<128x128xf32>
    %81 = tpu.matmul %78, %80, %cst_58 {dimension_numbers = #tpu.dot_dimension_numbers<[1], [0], [0], [1], [0, 0, 1, 1], [], []>} : vector<128x128xf32>, vector<128x128xf32>, vector<128x128xf32> -> vector<128x128xf32>
    %c1_59 = arith.constant 1 : index
    %c0_60 = arith.constant 0 : index
    %c0_61 = arith.constant 0 : index
    %82 = vector.load %arg11[%c1_59, %c0_60, %c0_61] : memref<4x1x128xf32, #tpu.memory_space<vmem>>, vector<1x1x128xf32>
    %83 = vector.shape_cast %82 : vector<1x1x128xf32> to vector<1x128xf32>
    %84 = vector.broadcast %83 : vector<1x128xf32> to vector<128x128xf32>
    %85 = arith.addf %81, %84 : vector<128x128xf32>
    %cst_62 = arith.constant 0.000000e+00 : f32
    %86 = vector.broadcast %cst_62 : f32 to vector<128x128xf32>
    %87 = arith.maximumf %85, %86 : vector<128x128xf32>
    %c0_63 = arith.constant 0 : index
    %c128 = arith.constant 128 : index
    %88 = vector.load %arg12[%c0_63, %c128] : memref<128x512xf32, #tpu.memory_space<vmem>>, vector<128x128xf32>
    tpu.vector_store %arg12[%c0_63, %c128], %87 {strides = array<i32>} : memref<128x512xf32, #tpu.memory_space<vmem>>, vector<128x128xf32>,
    %c2 = arith.constant 2 : index
    %c0_64 = arith.constant 0 : index
    %c0_65 = arith.constant 0 : index
    %89 = vector.load %arg6[%c2, %c0_64, %c0_65] : memref<4x1x128xf32, #tpu.memory_space<vmem>>, vector<1x1x128xf32>
    %90 = vector.shape_cast %89 : vector<1x1x128xf32> to vector<1x128xf32>
    %91 = vector.broadcast %2 : vector<128x1xf32> to vector<128x128xf32>
    %92 = vector.broadcast %90 : vector<1x128xf32> to vector<128x128xf32>
    %93 = arith.mulf %91, %92 : vector<128x128xf32>
    %c2_66 = arith.constant 2 : index
    %c0_67 = arith.constant 0 : index
    %c0_68 = arith.constant 0 : index
    %94 = vector.load %arg7[%c2_66, %c0_67, %c0_68] : memref<4x1x128xf32, #tpu.memory_space<vmem>>, vector<1x1x128xf32>
    %95 = vector.shape_cast %94 : vector<1x1x128xf32> to vector<1x128xf32>
    %96 = vector.broadcast %95 : vector<1x128xf32> to vector<128x128xf32>
    %97 = arith.addf %93, %96 : vector<128x128xf32>
    %98 = arith.truncf %87 : vector<128x128xf32> to vector<128x128xbf16>
    %cst_69 = arith.constant dense<0.000000e+00> : vector<128x128xf32>
    %99 = tpu.matmul %0, %98, %cst_69 {dimension_numbers = #tpu.dot_dimension_numbers<[1], [0], [0], [1], [0, 0, 1, 1], [], []>} : vector<128x128xbf16>, vector<128x128xbf16>, vector<128x128xf32> -> vector<128x128xf32>
    %100 = arith.addf %99, %97 : vector<128x128xf32>
    %cst_70 = arith.constant 0.000000e+00 : f32
    %101 = vector.broadcast %cst_70 : f32 to vector<128x128xf32>
    %102 = arith.maximumf %100, %101 : vector<128x128xf32>
    %103 = arith.truncf %102 : vector<128x128xf32> to vector<128x128xbf16>
    %cst_71 = arith.constant dense<0.000000e+00> : vector<128x128xf32>
    %104 = tpu.matmul %1, %103, %cst_71 {dimension_numbers = #tpu.dot_dimension_numbers<[1], [0], [0], [1], [0, 0, 1, 1], [], []>} : vector<128x128xbf16>, vector<128x128xbf16>, vector<128x128xf32> -> vector<128x128xf32>
    %105 = vector.broadcast %3 : vector<128x1xf32> to vector<128x128xf32>
    %106 = arith.mulf %104, %105 : vector<128x128xf32>
    %c2_72 = arith.constant 2 : index
    %107 = memref.load %arg0[%c2_72] : memref<4xf32, #tpu.memory_space<smem>>
    %cst_73 = arith.constant 1.000000e+00 : f32
    %108 = arith.addf %cst_73, %107 : f32
    %109 = vector.broadcast %108 : f32 to vector<128x128xf32>
    %110 = arith.mulf %109, %87 : vector<128x128xf32>
    %111 = arith.addf %110, %106 : vector<128x128xf32>
    %c2_74 = arith.constant 2 : index
    %c0_75 = arith.constant 0 : index
    %c0_76 = arith.constant 0 : index
    %112 = vector.load %arg8[%c2_74, %c0_75, %c0_76] : memref<4x128x128xf32, #tpu.memory_space<vmem>>, vector<1x128x128xf32>
    %113 = vector.shape_cast %112 : vector<1x128x128xf32> to vector<128x128xf32>
    %cst_77 = arith.constant dense<0.000000e+00> : vector<128x128xf32>
    %114 = tpu.matmul %111, %113, %cst_77 {dimension_numbers = #tpu.dot_dimension_numbers<[1], [0], [0], [1], [0, 0, 1, 1], [], []>} : vector<128x128xf32>, vector<128x128xf32>, vector<128x128xf32> -> vector<128x128xf32>
    %c2_78 = arith.constant 2 : index
    %c0_79 = arith.constant 0 : index
    %c0_80 = arith.constant 0 : index
    %115 = vector.load %arg9[%c2_78, %c0_79, %c0_80] : memref<4x1x128xf32, #tpu.memory_space<vmem>>, vector<1x1x128xf32>
    %116 = vector.shape_cast %115 : vector<1x1x128xf32> to vector<1x128xf32>
    %117 = vector.broadcast %116 : vector<1x128xf32> to vector<128x128xf32>
    %118 = arith.addf %114, %117 : vector<128x128xf32>
    %cst_81 = arith.constant 0.000000e+00 : f32
    %119 = vector.broadcast %cst_81 : f32 to vector<128x128xf32>
    %120 = arith.maximumf %118, %119 : vector<128x128xf32>
    %c2_82 = arith.constant 2 : index
    %c0_83 = arith.constant 0 : index
    %c0_84 = arith.constant 0 : index
    %121 = vector.load %arg10[%c2_82, %c0_83, %c0_84] : memref<4x128x128xf32, #tpu.memory_space<vmem>>, vector<1x128x128xf32>
    %122 = vector.shape_cast %121 : vector<1x128x128xf32> to vector<128x128xf32>
    %cst_85 = arith.constant dense<0.000000e+00> : vector<128x128xf32>
    %123 = tpu.matmul %120, %122, %cst_85 {dimension_numbers = #tpu.dot_dimension_numbers<[1], [0], [0], [1], [0, 0, 1, 1], [], []>} : vector<128x128xf32>, vector<128x128xf32>, vector<128x128xf32> -> vector<128x128xf32>
    %c2_86 = arith.constant 2 : index
    %c0_87 = arith.constant 0 : index
    %c0_88 = arith.constant 0 : index
    %124 = vector.load %arg11[%c2_86, %c0_87, %c0_88] : memref<4x1x128xf32, #tpu.memory_space<vmem>>, vector<1x1x128xf32>
    %125 = vector.shape_cast %124 : vector<1x1x128xf32> to vector<1x128xf32>
    %126 = vector.broadcast %125 : vector<1x128xf32> to vector<128x128xf32>
    %127 = arith.addf %123, %126 : vector<128x128xf32>
    %cst_89 = arith.constant 0.000000e+00 : f32
    %128 = vector.broadcast %cst_89 : f32 to vector<128x128xf32>
    %129 = arith.maximumf %127, %128 : vector<128x128xf32>
    %c0_90 = arith.constant 0 : index
    %c256 = arith.constant 256 : index
    %130 = vector.load %arg12[%c0_90, %c256] : memref<128x512xf32, #tpu.memory_space<vmem>>, vector<128x128xf32>
    tpu.vector_store %arg12[%c0_90, %c256], %129 {strides = array<i32>} : memref<128x512xf32, #tpu.memory_space<vmem>>, vector<128x128xf32>,
    %c3 = arith.constant 3 : index
    %c0_91 = arith.constant 0 : index
    %c0_92 = arith.constant 0 : index
    %131 = vector.load %arg6[%c3, %c0_91, %c0_92] : memref<4x1x128xf32, #tpu.memory_space<vmem>>, vector<1x1x128xf32>
    %132 = vector.shape_cast %131 : vector<1x1x128xf32> to vector<1x128xf32>
    %133 = vector.broadcast %2 : vector<128x1xf32> to vector<128x128xf32>
    %134 = vector.broadcast %132 : vector<1x128xf32> to vector<128x128xf32>
    %135 = arith.mulf %133, %134 : vector<128x128xf32>
    %c3_93 = arith.constant 3 : index
    %c0_94 = arith.constant 0 : index
    %c0_95 = arith.constant 0 : index
    %136 = vector.load %arg7[%c3_93, %c0_94, %c0_95] : memref<4x1x128xf32, #tpu.memory_space<vmem>>, vector<1x1x128xf32>
    %137 = vector.shape_cast %136 : vector<1x1x128xf32> to vector<1x128xf32>
    %138 = vector.broadcast %137 : vector<1x128xf32> to vector<128x128xf32>
    %139 = arith.addf %135, %138 : vector<128x128xf32>
    %140 = arith.truncf %129 : vector<128x128xf32> to vector<128x128xbf16>
    %cst_96 = arith.constant dense<0.000000e+00> : vector<128x128xf32>
    %141 = tpu.matmul %0, %140, %cst_96 {dimension_numbers = #tpu.dot_dimension_numbers<[1], [0], [0], [1], [0, 0, 1, 1], [], []>} : vector<128x128xbf16>, vector<128x128xbf16>, vector<128x128xf32> -> vector<128x128xf32>
    %142 = arith.addf %141, %139 : vector<128x128xf32>
    %cst_97 = arith.constant 0.000000e+00 : f32
    %143 = vector.broadcast %cst_97 : f32 to vector<128x128xf32>
    %144 = arith.maximumf %142, %143 : vector<128x128xf32>
    %145 = arith.truncf %144 : vector<128x128xf32> to vector<128x128xbf16>
    %cst_98 = arith.constant dense<0.000000e+00> : vector<128x128xf32>
    %146 = tpu.matmul %1, %145, %cst_98 {dimension_numbers = #tpu.dot_dimension_numbers<[1], [0], [0], [1], [0, 0, 1, 1], [], []>} : vector<128x128xbf16>, vector<128x128xbf16>, vector<128x128xf32> -> vector<128x128xf32>
    %147 = vector.broadcast %3 : vector<128x1xf32> to vector<128x128xf32>
    %148 = arith.mulf %146, %147 : vector<128x128xf32>
    %c3_99 = arith.constant 3 : index
    %149 = memref.load %arg0[%c3_99] : memref<4xf32, #tpu.memory_space<smem>>
    %cst_100 = arith.constant 1.000000e+00 : f32
    %150 = arith.addf %cst_100, %149 : f32
    %151 = vector.broadcast %150 : f32 to vector<128x128xf32>
    %152 = arith.mulf %151, %129 : vector<128x128xf32>
    %153 = arith.addf %152, %148 : vector<128x128xf32>
    %c3_101 = arith.constant 3 : index
    %c0_102 = arith.constant 0 : index
    %c0_103 = arith.constant 0 : index
    %154 = vector.load %arg8[%c3_101, %c0_102, %c0_103] : memref<4x128x128xf32, #tpu.memory_space<vmem>>, vector<1x128x128xf32>
    %155 = vector.shape_cast %154 : vector<1x128x128xf32> to vector<128x128xf32>
    %cst_104 = arith.constant dense<0.000000e+00> : vector<128x128xf32>
    %156 = tpu.matmul %153, %155, %cst_104 {dimension_numbers = #tpu.dot_dimension_numbers<[1], [0], [0], [1], [0, 0, 1, 1], [], []>} : vector<128x128xf32>, vector<128x128xf32>, vector<128x128xf32> -> vector<128x128xf32>
    %c3_105 = arith.constant 3 : index
    %c0_106 = arith.constant 0 : index
    %c0_107 = arith.constant 0 : index
    %157 = vector.load %arg9[%c3_105, %c0_106, %c0_107] : memref<4x1x128xf32, #tpu.memory_space<vmem>>, vector<1x1x128xf32>
    %158 = vector.shape_cast %157 : vector<1x1x128xf32> to vector<1x128xf32>
    %159 = vector.broadcast %158 : vector<1x128xf32> to vector<128x128xf32>
    %160 = arith.addf %156, %159 : vector<128x128xf32>
    %cst_108 = arith.constant 0.000000e+00 : f32
    %161 = vector.broadcast %cst_108 : f32 to vector<128x128xf32>
    %162 = arith.maximumf %160, %161 : vector<128x128xf32>
    %c3_109 = arith.constant 3 : index
    %c0_110 = arith.constant 0 : index
    %c0_111 = arith.constant 0 : index
    %163 = vector.load %arg10[%c3_109, %c0_110, %c0_111] : memref<4x128x128xf32, #tpu.memory_space<vmem>>, vector<1x128x128xf32>
    %164 = vector.shape_cast %163 : vector<1x128x128xf32> to vector<128x128xf32>
    %cst_112 = arith.constant dense<0.000000e+00> : vector<128x128xf32>
    %165 = tpu.matmul %162, %164, %cst_112 {dimension_numbers = #tpu.dot_dimension_numbers<[1], [0], [0], [1], [0, 0, 1, 1], [], []>} : vector<128x128xf32>, vector<128x128xf32>, vector<128x128xf32> -> vector<128x128xf32>
    %c3_113 = arith.constant 3 : index
    %c0_114 = arith.constant 0 : index
    %c0_115 = arith.constant 0 : index
    %166 = vector.load %arg11[%c3_113, %c0_114, %c0_115] : memref<4x1x128xf32, #tpu.memory_space<vmem>>, vector<1x1x128xf32>
    %167 = vector.shape_cast %166 : vector<1x1x128xf32> to vector<1x128xf32>
    %168 = vector.broadcast %167 : vector<1x128xf32> to vector<128x128xf32>
    %169 = arith.addf %165, %168 : vector<128x128xf32>
    %cst_116 = arith.constant 0.000000e+00 : f32
    %170 = vector.broadcast %cst_116 : f32 to vector<128x128xf32>
    %171 = arith.maximumf %169, %170 : vector<128x128xf32>
    %c0_117 = arith.constant 0 : index
    %c384 = arith.constant 384 : index
    %172 = vector.load %arg12[%c0_117, %c384] : memref<128x512xf32, #tpu.memory_space<vmem>>, vector<128x128xf32>
    tpu.vector_store %arg12[%c0_117, %c384], %171 {strides = array<i32>} : memref<128x512xf32, #tpu.memory_space<vmem>>, vector<128x128xf32>,
    return
  }
}

</mosaic_0001>

<llo_original>
// kernel: tpu_custom_call.1
$region0: #{tpu_custom_call.1}
  #allocation0 [shape = 'u32[]', space=smem, size = 0x4, offset = 0x4, fixed_abs, tag = 'smem constant byte address 0x4 - core index']
  #allocation1 [shape = 'u32[144,128]{1,0:T(1,128)}', space=vmem, size = 0x12000, scoped, tag = 'internal scratch']
  %s0 = inlined_call_operand.hbm [shape: f32[4], index: 0, kind: input, shape index: {}]
  %s1 = inlined_call_operand.vmem [shape: f32[128,128], index: 1, kind: input, shape index: {}]
  %s2 = inlined_call_operand.vmem [shape: bf16[128,128], index: 2, kind: input, shape index: {}]
  %s3 = inlined_call_operand.vmem [shape: bf16[128,128], index: 3, kind: input, shape index: {}]
  %s4 = inlined_call_operand.vmem [shape: f32[128,1], index: 4, kind: input, shape index: {}]
  %s5 = inlined_call_operand.vmem [shape: f32[128,1], index: 5, kind: input, shape index: {}]
  %s6 = inlined_call_operand.vmem [shape: f32[4,1,128], index: 6, kind: input, shape index: {}]
  %s7 = inlined_call_operand.vmem [shape: f32[4,1,128], index: 7, kind: input, shape index: {}]
  %s8 = inlined_call_operand.hbm [shape: f32[4,128,128], index: 8, kind: input, shape index: {}]
  %s9 = inlined_call_operand.vmem [shape: f32[4,1,128], index: 9, kind: input, shape index: {}]
  %s10 = inlined_call_operand.hbm [shape: f32[4,128,128], index: 10, kind: input, shape index: {}]
  %s11 = inlined_call_operand.vmem [shape: f32[4,1,128], index: 11, kind: input, shape index: {}]
  %s12 = inlined_call_operand.hbm [shape: f32[128,512], index: 12, kind: output, shape index: {}]
  %s13 = sld [smem:[#allocation0]]
  $region70: #{tpu_custom_call.1} parent=0
    _
  %s15 = ssub.s32 1, %s13
  %s16 = scalar_select 0, %s15, %s13
  $region1: #{tpu_custom_call.1} parent=0
    #allocation2 [shape = 'u8[512]{0}', space=smem, size = 0x200, scoped, tag = 'input window, operand 0, single buffered']
    #allocation3 [shape = 's32[1]{0}', space=sflag, size = 0x4, scoped, tag = 'scoped memory for tpu_custom_call.1']
    #allocation4 [shape = 's32[1]{0}', space=sflag, size = 0x4, scoped, tag = 'scoped memory for tpu_custom_call.1']
    #allocation5 [shape = 's32[1]{0}', space=sflag, size = 0x4, scoped, tag = 'scoped memory for tpu_custom_call.1']
    #allocation6 [shape = 'u8[262144]{0}', space=vmem, size = 0x40000, scoped, tag = 'input window, operand 8, single buffered']
    #allocation7 [shape = 'u8[262144]{0}', space=vmem, size = 0x40000, scoped, tag = 'input window, operand 10, single buffered']
    #allocation8 [shape = 's32[1]{0}', space=sflag, size = 0x4, scoped, tag = 'scoped memory for tpu_custom_call.1']
    #allocation9 [shape = 'u8[262144]{0}', space=vmem, size = 0x40000, scoped, tag = 'output window, operand 0, single buffered']
    %17 = vsyncpa [#allocation5], 0
    %18 = vsyncpa [#allocation3], 0
    %19 = vsyncpa [#allocation8], 0
    %20 = vsyncpa [#allocation4], 0
    // Predicated region
    $region2: #{tpu_custom_call.1} parent=1 // pred_check
      _
    $region3: #{tpu_custom_call.1} parent=1 // pred_check_branch
      %22 = sbr.rel (0) target = $region5
    $region4: #{tpu_custom_call.1} parent=1 // pred_region
      %s24 = ssub.s32 16, 16
      %25 = vsyncadd [#allocation5], %s24
      %28 = dma.hbm_to_smem %s0, 16, [#allocation2], [#allocation5]
    $region5: #{tpu_custom_call.1} parent=1 // pred_fallthru
      _
    // Predicated region
    $region6: #{tpu_custom_call.1} parent=1 // pred_check
      _
    $region7: #{tpu_custom_call.1} parent=1 // pred_check_branch
      %30 = sbr.rel (0) target = $region9
    $region8: #{tpu_custom_call.1} parent=1 // pred_region
      _
    $region9: #{tpu_custom_call.1} parent=1 // pred_fallthru
      _
    // Predicated region
    $region10: #{tpu_custom_call.1} parent=1 // pred_check
      _
    $region11: #{tpu_custom_call.1} parent=1 // pred_check_branch
      %32 = sbr.rel (0) target = $region13
    $region12: #{tpu_custom_call.1} parent=1 // pred_region
      _
    $region13: #{tpu_custom_call.1} parent=1 // pred_fallthru
      _
    // Predicated region
    $region14: #{tpu_custom_call.1} parent=1 // pred_check
      _
    $region15: #{tpu_custom_call.1} parent=1 // pred_check_branch
      %34 = sbr.rel (0) target = $region17
    $region16: #{tpu_custom_call.1} parent=1 // pred_region
      _
    $region17: #{tpu_custom_call.1} parent=1 // pred_fallthru
      _
    // Predicated region
    $region18: #{tpu_custom_call.1} parent=1 // pred_check
      _
    $region19: #{tpu_custom_call.1} parent=1 // pred_check_branch
      %36 = sbr.rel (0) target = $region21
    $region20: #{tpu_custom_call.1} parent=1 // pred_region
      _
    $region21: #{tpu_custom_call.1} parent=1 // pred_fallthru
      _
    // Predicated region
    $region22: #{tpu_custom_call.1} parent=1 // pred_check
      _
    $region23: #{tpu_custom_call.1} parent=1 // pred_check_branch
      %38 = sbr.rel (0) target = $region25
    $region24: #{tpu_custom_call.1} parent=1 // pred_region
      _
    $region25: #{tpu_custom_call.1} parent=1 // pred_fallthru
      _
    // Predicated region
    $region26: #{tpu_custom_call.1} parent=1 // pred_check
      _
    $region27: #{tpu_custom_call.1} parent=1 // pred_check_branch
      %40 = sbr.rel (0) target = $region29
    $region28: #{tpu_custom_call.1} parent=1 // pred_region
      _
    $region29: #{tpu_custom_call.1} parent=1 // pred_fallthru
      _
    // Predicated region
    $region30: #{tpu_custom_call.1} parent=1 // pred_check
      _
    $region31: #{tpu_custom_call.1} parent=1 // pred_check_branch
      %42 = sbr.rel (0) target = $region33
    $region32: #{tpu_custom_call.1} parent=1 // pred_region
      _
    $region33: #{tpu_custom_call.1} parent=1 // pred_fallthru
      _
    // Predicated region
    $region34: #{tpu_custom_call.1} parent=1 // pred_check
      _
    $region35: #{tpu_custom_call.1} parent=1 // pred_check_branch
      %44 = sbr.rel (0) target = $region37
    $region36: #{tpu_custom_call.1} parent=1 // pred_region
      %s46 = ssub.s32 8192, 8192
      %47 = vsyncadd [#allocation3], %s46
      %s48 = sshll.u32 [#allocation6], 4
      %s49 = int_to_ptr.vmem [resolvable:$true] %s48
      %54 = dma.hbm_to_vmem [thread:$0]  %s8, 8192, %s49, [#allocation3], 128, 128, 8
    $region37: #{tpu_custom_call.1} parent=1 // pred_fallthru
      _
    // Predicated region
    $region38: #{tpu_custom_call.1} parent=1 // pred_check
      _
    $region39: #{tpu_custom_call.1} parent=1 // pred_check_branch
      %56 = sbr.rel (0) target = $region41
    $region40: #{tpu_custom_call.1} parent=1 // pred_region
      _
    $region41: #{tpu_custom_call.1} parent=1 // pred_fallthru
      _
    // Predicated region
    $region42: #{tpu_custom_call.1} parent=1 // pred_check
      _
    $region43: #{tpu_custom_call.1} parent=1 // pred_check_branch
      %58 = sbr.rel (0) target = $region45
    $region44: #{tpu_custom_call.1} parent=1 // pred_region
      %s60 = ssub.s32 8192, 8192
      %61 = vsyncadd [#allocation8], %s60
      %s62 = sshll.u32 [#allocation7], 4
      %s63 = int_to_ptr.vmem [resolvable:$true] %s62
      %68 = dma.hbm_to_vmem [thread:$0]  %s10, 8192, %s63, [#allocation8], 128, 128, 8
    $region45: #{tpu_custom_call.1} parent=1 // pred_fallthru
      _
    // Predicated region
    $region46: #{tpu_custom_call.1} parent=1 // pred_check
      _
    $region47: #{tpu_custom_call.1} parent=1 // pred_check_branch
      %70 = sbr.rel (0) target = $region49
    $region48: #{tpu_custom_call.1} parent=1 // pred_region
      _
    $region49: #{tpu_custom_call.1} parent=1 // pred_fallthru
      _
    // Predicated region
    $region50: #{tpu_custom_call.1} parent=1 // pred_check
      _
    $region51: #{tpu_custom_call.1} parent=1 // pred_check_branch
      %72 = sbr.rel (0) target = $region53
    $region52: #{tpu_custom_call.1} parent=1 // pred_region
      %73 = dma.done [#allocation5], 16
    $region53: #{tpu_custom_call.1} parent=1 // pred_fallthru
      _
    // Predicated region
    $region54: #{tpu_custom_call.1} parent=1 // pred_check
      _
    $region55: #{tpu_custom_call.1} parent=1 // pred_check_branch
      %75 = sbr.rel (0) target = $region57
    $region56: #{tpu_custom_call.1} parent=1 // pred_region
      %76 = dma.done [#allocation3], 8192
    $region57: #{tpu_custom_call.1} parent=1 // pred_fallthru
      _
    // Predicated region
    $region58: #{tpu_custom_call.1} parent=1 // pred_check
      _
    $region59: #{tpu_custom_call.1} parent=1 // pred_check_branch
      %78 = sbr.rel (0) target = $region61
    $region60: #{tpu_custom_call.1} parent=1 // pred_region
      %79 = dma.done [#allocation8], 8192
    $region61: #{tpu_custom_call.1} parent=1 // pred_fallthru
      _
    %80 = sfence
    %v82 = vld [vmem:[%s2] sm:$0xf]
    %v83 = vld [vmem:[%s2 + $0x4] sm:$0xf]
    %v84 = vld [vmem:[%s2 + $0x8] sm:$0xf]
    %v85 = vld [vmem:[%s2 + $0xc] sm:$0xf]
    %v86 = vld [vmem:[%s2 + $0x10] sm:$0xf]
    %v87 = vld [vmem:[%s2 + $0x14] sm:$0xf]
    %v88 = vld [vmem:[%s2 + $0x18] sm:$0xf]
    %v89 = vld [vmem:[%s2 + $0x1c] sm:$0xf]
    %v90 = vld [vmem:[%s2 + $0x20] sm:$0xf]
    %v91 = vld [vmem:[%s2 + $0x24] sm:$0xf]
    %v92 = vld [vmem:[%s2 + $0x28] sm:$0xf]
    %v93 = vld [vmem:[%s2 + $0x2c] sm:$0xf]
    %v94 = vld [vmem:[%s2 + $0x30] sm:$0xf]
    %v95 = vld [vmem:[%s2 + $0x34] sm:$0xf]
    %v96 = vld [vmem:[%s2 + $0x38] sm:$0xf]
    %v97 = vld [vmem:[%s2 + $0x3c] sm:$0xf]
    %v98 = vld [vmem:[%s3] sm:$0xf]
    %v99 = vld [vmem:[%s3 + $0x4] sm:$0xf]
    %v100 = vld [vmem:[%s3 + $0x8] sm:$0xf]
    %v101 = vld [vmem:[%s3 + $0xc] sm:$0xf]
    %v102 = vld [vmem:[%s3 + $0x10] sm:$0xf]
    %v103 = vld [vmem:[%s3 + $0x14] sm:$0xf]
    %v104 = vld [vmem:[%s3 + $0x18] sm:$0xf]
    %v105 = vld [vmem:[%s3 + $0x1c] sm:$0xf]
    %v106 = vld [vmem:[%s3 + $0x20] sm:$0xf]
    %v107 = vld [vmem:[%s3 + $0x24] sm:$0xf]
    %v108 = vld [vmem:[%s3 + $0x28] sm:$0xf]
    %v109 = vld [vmem:[%s3 + $0x2c] sm:$0xf]
    %v110 = vld [vmem:[%s3 + $0x30] sm:$0xf]
    %v111 = vld [vmem:[%s3 + $0x34] sm:$0xf]
    %v112 = vld [vmem:[%s3 + $0x38] sm:$0xf]
    %v113 = vld [vmem:[%s3 + $0x3c] sm:$0xf]
    %v114 = vld [vmem:[%s4] sm:$0xff]
    %v115 = vld [vmem:[%s4 + $0x8] sm:$0xff]
    %v116 = vld [vmem:[%s4 + $0x10] sm:$0xff]
    %v117 = vld [vmem:[%s4 + $0x18] sm:$0xff]
    %v118 = vld [vmem:[%s4 + $0x20] sm:$0xff]
    %v119 = vld [vmem:[%s4 + $0x28] sm:$0xff]
    %v120 = vld [vmem:[%s4 + $0x30] sm:$0xff]
    %v121 = vld [vmem:[%s4 + $0x38] sm:$0xff]
    %v122 = vld [vmem:[%s4 + $0x40] sm:$0xff]
    %v123 = vld [vmem:[%s4 + $0x48] sm:$0xff]
    %v124 = vld [vmem:[%s4 + $0x50] sm:$0xff]
    %v125 = vld [vmem:[%s4 + $0x58] sm:$0xff]
    %v126 = vld [vmem:[%s4 + $0x60] sm:$0xff]
    %v127 = vld [vmem:[%s4 + $0x68] sm:$0xff]
    %v128 = vld [vmem:[%s4 + $0x70] sm:$0xff]
    %v129 = vld [vmem:[%s4 + $0x78] sm:$0xff]
    %v130 = vld [vmem:[%s5] sm:$0xff]
    %v131 = vld [vmem:[%s5 + $0x8] sm:$0xff]
    %v132 = vld [vmem:[%s5 + $0x10] sm:$0xff]
    %v133 = vld [vmem:[%s5 + $0x18] sm:$0xff]
    %v134 = vld [vmem:[%s5 + $0x20] sm:$0xff]
    %v135 = vld [vmem:[%s5 + $0x28] sm:$0xff]
    %v136 = vld [vmem:[%s5 + $0x30] sm:$0xff]
    %v137 = vld [vmem:[%s5 + $0x38] sm:$0xff]
    %v138 = vld [vmem:[%s5 + $0x40] sm:$0xff]
    %v139 = vld [vmem:[%s5 + $0x48] sm:$0xff]
    %v140 = vld [vmem:[%s5 + $0x50] sm:$0xff]
    %v141 = vld [vmem:[%s5 + $0x58] sm:$0xff]
    %v142 = vld [vmem:[%s5 + $0x60] sm:$0xff]
    %v143 = vld [vmem:[%s5 + $0x68] sm:$0xff]
    %v144 = vld [vmem:[%s5 + $0x70] sm:$0xff]
    %v145 = vld [vmem:[%s5 + $0x78] sm:$0xff]
    %v146 = vld [vmem:[%s1] sm:$0xff]
    %v147 = vld [vmem:[%s1 + $0x8] sm:$0xff]
    %v148 = vld [vmem:[%s1 + $0x10] sm:$0xff]
    %v149 = vld [vmem:[%s1 + $0x18] sm:$0xff]
    %v150 = vld [vmem:[%s1 + $0x20] sm:$0xff]
    %v151 = vld [vmem:[%s1 + $0x28] sm:$0xff]
    %v152 = vld [vmem:[%s1 + $0x30] sm:$0xff]
    %v153 = vld [vmem:[%s1 + $0x38] sm:$0xff]
    %v154 = vld [vmem:[%s1 + $0x40] sm:$0xff]
    %v155 = vld [vmem:[%s1 + $0x48] sm:$0xff]
    %v156 = vld [vmem:[%s1 + $0x50] sm:$0xff]
    %v157 = vld [vmem:[%s1 + $0x58] sm:$0xff]
    %v158 = vld [vmem:[%s1 + $0x60] sm:$0xff]
    %v159 = vld [vmem:[%s1 + $0x68] sm:$0xff]
    %v160 = vld [vmem:[%s1 + $0x70] sm:$0xff]
    %v161 = vld [vmem:[%s1 + $0x78] sm:$0xff]
    %v162 = vld [vmem:[%s6] sm:$0x1]
    %164 = vset.pattern.permute.xlu0 0
    %165 = vperm.xlu0 %164, %v114
    %v166 = vpop.permute.xlu0 %165
    %169 = vset.pattern.permute.xlu0 0
    %170 = vperm.xlu0 %169, %v115
    %v171 = vpop.permute.xlu0 %170
    %174 = vset.pattern.permute.xlu0 0
    %175 = vperm.xlu0 %174, %v116
    %v176 = vpop.permute.xlu0 %175
    %179 = vset.pattern.permute.xlu0 0
    %180 = vperm.xlu0 %179, %v117
    %v181 = vpop.permute.xlu0 %180
    %184 = vset.pattern.permute.xlu0 0
    %185 = vperm.xlu0 %184, %v118
    %v186 = vpop.permute.xlu0 %185
    %189 = vset.pattern.permute.xlu0 0
    %190 = vperm.xlu0 %189, %v119
    %v191 = vpop.permute.xlu0 %190
    %194 = vset.pattern.permute.xlu0 0
    %195 = vperm.xlu0 %194, %v120
    %v196 = vpop.permute.xlu0 %195
    %199 = vset.pattern.permute.xlu0 0
    %200 = vperm.xlu0 %199, %v121
    %v201 = vpop.permute.xlu0 %200
    %204 = vset.pattern.permute.xlu0 0
    %205 = vperm.xlu0 %204, %v122
    %v206 = vpop.permute.xlu0 %205
    %209 = vset.pattern.permute.xlu0 0
    %210 = vperm.xlu0 %209, %v123
    %v211 = vpop.permute.xlu0 %210
    %214 = vset.pattern.permute.xlu0 0
    %215 = vperm.xlu0 %214, %v124
    %v216 = vpop.permute.xlu0 %215
    %219 = vset.pattern.permute.xlu0 0
    %220 = vperm.xlu0 %219, %v125
    %v221 = vpop.permute.xlu0 %220
    %224 = vset.pattern.permute.xlu0 0
    %225 = vperm.xlu0 %224, %v126
    %v226 = vpop.permute.xlu0 %225
    %229 = vset.pattern.permute.xlu0 0
    %230 = vperm.xlu0 %229, %v127
    %v231 = vpop.permute.xlu0 %230
    %234 = vset.pattern.permute.xlu0 0
    %235 = vperm.xlu0 %234, %v128
    %v236 = vpop.permute.xlu0 %235
    %239 = vset.pattern.permute.xlu0 0
    %240 = vperm.xlu0 %239, %v129
    %v241 = vpop.permute.xlu0 %240
    %v244 = vlaneseq
    %v245 = vshrl.u32 %v244, 7
    %v246 = vsub.s32 0, %v245
    %v247 = vrot.slane %v162, %v246
    %v249 = vmul.f32 %v166, %v247
    %v250 = vmul.f32 %v171, %v247
    %v251 = vmul.f32 %v176, %v247
    %v252 = vmul.f32 %v181, %v247
    %v253 = vmul.f32 %v186, %v247
    %v254 = vmul.f32 %v191, %v247
    %v255 = vmul.f32 %v196, %v247
    %v256 = vmul.f32 %v201, %v247
    %v257 = vmul.f32 %v206, %v247
    %v258 = vmul.f32 %v211, %v247
    %v259 = vmul.f32 %v216, %v247
    %v260 = vmul.f32 %v221, %v247
    %v261 = vmul.f32 %v226, %v247
    %v262 = vmul.f32 %v231, %v247
    %v263 = vmul.f32 %v236, %v247
    %v264 = vmul.f32 %v241, %v247
    %v265 = vld [vmem:[%s7] sm:$0x1]
    %v267 = vlaneseq
    %v268 = vshrl.u32 %v267, 7
    %v269 = vsub.s32 0, %v268
    %v270 = vrot.slane %v265, %v269
    %v272 = vadd.f32 %v249, %v270
    %v273 = vadd.f32 %v250, %v270
    %v274 = vadd.f32 %v251, %v270
    %v275 = vadd.f32 %v252, %v270
    %v276 = vadd.f32 %v253, %v270
    %v277 = vadd.f32 %v254, %v270
    %v278 = vadd.f32 %v255, %v270
    %v279 = vadd.f32 %v256, %v270
    %v280 = vadd.f32 %v257, %v270
    %v281 = vadd.f32 %v258, %v270
    %v282 = vadd.f32 %v259, %v270
    %v283 = vadd.f32 %v260, %v270
    %v284 = vadd.f32 %v261, %v270
    %v285 = vadd.f32 %v262, %v270
    %v286 = vadd.f32 %v263, %v270
    %v287 = vadd.f32 %v264, %v270
    %v288 = vpack.c.bf16 %v147, %v146
    %v289 = vpack.c.bf16 %v149, %v148
    %v290 = vpack.c.bf16 %v151, %v150
    %v291 = vpack.c.bf16 %v153, %v152
    %v292 = vpack.c.bf16 %v155, %v154
    %v293 = vpack.c.bf16 %v157, %v156
    %v294 = vpack.c.bf16 %v159, %v158
    %v295 = vpack.c.bf16 %v161, %v160
    %v312 = vunpack.c.l.b16 %v82
    %v313 = vunpack.c.l.b16 %v83
    %v314 = vunpack.c.l.b16 %v84
    %v315 = vunpack.c.l.b16 %v85
    %v316 = vunpack.c.l.b16 %v86
    %v317 = vunpack.c.l.b16 %v87
    %v318 = vunpack.c.l.b16 %v88
    %v319 = vunpack.c.l.b16 %v89
    %v320 = vunpack.c.l.b16 %v90
    %v321 = vunpack.c.l.b16 %v91
    %v322 = vunpack.c.l.b16 %v92
    %v323 = vunpack.c.l.b16 %v93
    %v324 = vunpack.c.l.b16 %v94
    %v325 = vunpack.c.l.b16 %v95
    %v326 = vunpack.c.l.b16 %v96
    %v327 = vunpack.c.l.b16 %v97
    %v328 = vpack.c.b16 %v313, %v312
    %v329 = vpack.c.b16 %v315, %v314
    %v330 = vpack.c.b16 %v317, %v316
    %v331 = vpack.c.b16 %v319, %v318
    %v332 = vpack.c.b16 %v321, %v320
    %v333 = vpack.c.b16 %v323, %v322
    %v334 = vpack.c.b16 %v325, %v324
    %v335 = vpack.c.b16 %v327, %v326
    %344 = vmatprep.subr.bf16.mxu0 0
    %345 = vmatpush1.bf16.msra.mxu0 %v288
    %346 = vmatprep.subr.bf16.mxu0 0
    %347 = vmatpush1.bf16.msra.mxu0 %v289
    %348 = vmatprep.subr.bf16.mxu0 0
    %349 = vmatpush1.bf16.msra.mxu0 %v290
    %350 = vmatprep.subr.bf16.mxu0 0
    %351 = vmatpush1.bf16.msra.mxu0 %v291
    %352 = vmatprep.subr.bf16.mxu0 0
    %353 = vmatpush1.bf16.msra.mxu0 %v292
    %354 = vmatprep.subr.bf16.mxu0 0
    %355 = vmatpush1.bf16.msra.mxu0 %v293
    %356 = vmatprep.subr.bf16.mxu0 0
    %357 = vmatpush1.bf16.msra.mxu0 %v294
    %358 = vmatprep.subr.bf16.mxu0 0
    %359 = vmatpush1.bf16.msra.mxu0 %v295
    %360 = vmatprep.subr.bf16.mxu0 0
    %361 = vmatpush1.bf16.msra.mxu0 0
    %362 = vmatprep.subr.bf16.mxu0 0
    %363 = vmatpush1.bf16.msra.mxu0 0
    %364 = vmatprep.subr.bf16.mxu0 0
    %365 = vmatpush1.bf16.msra.mxu0 0
    %366 = vmatprep.subr.bf16.mxu0 0
    %367 = vmatpush1.bf16.msra.mxu0 0
    %368 = vmatprep.subr.bf16.mxu0 0
    %369 = vmatpush1.bf16.msra.mxu0 0
    %370 = vmatprep.subr.bf16.mxu0 0
    %371 = vmatpush1.bf16.msra.mxu0 0
    %372 = vmatprep.subr.bf16.mxu0 0
    %373 = vmatpush1.bf16.msra.mxu0 0
    %374 = vmatprep.subr.bf16.mxu0 0
    %375 = vmatpush1.bf16.msra.mxu0 0
    %376 = vmatprep.mubr.bf16.mxu0 0
    %377 = vmatmul.mubr.bf16.gmra.mrb[0].mxu0 %v328
    %v378 = vpop.f32.mrb[0].mxu0
    %v379 = vadd.f32 %v272, %v378
    %v380 = vpop.f32.mrb[0].mxu0
    %v381 = vpop.f32.mrb[0].mxu0
    %v382 = vadd.f32 %v273, %v381
    %v383 = vpop.f32.mrb[0].mxu0
    %384 = vmatprep.mubr.bf16.mxu0 0
    %385 = vmatmul.mubr.bf16.gmra.mrb[0].mxu0 %v329
    %v386 = vpop.f32.mrb[0].mxu0
    %v387 = vadd.f32 %v274, %v386
    %v388 = vpop.f32.mrb[0].mxu0
    %v389 = vpop.f32.mrb[0].mxu0
    %v390 = vadd.f32 %v275, %v389
    %v391 = vpop.f32.mrb[0].mxu0
    %392 = vmatprep.mubr.bf16.mxu0 0
    %393 = vmatmul.mubr.bf16.gmra.mrb[0].mxu0 %v330
    %v394 = vpop.f32.mrb[0].mxu0
    %v395 = vadd.f32 %v276, %v394
    %v396 = vpop.f32.mrb[0].mxu0
    %v397 = vpop.f32.mrb[0].mxu0
    %v398 = vadd.f32 %v277, %v397
    %v399 = vpop.f32.mrb[0].mxu0
    %400 = vmatprep.mubr.bf16.mxu0 0
    %401 = vmatmul.mubr.bf16.gmra.mrb[0].mxu0 %v331
    %v402 = vpop.f32.mrb[0].mxu0
    %v403 = vadd.f32 %v278, %v402
    %v404 = vpop.f32.mrb[0].mxu0
    %v405 = vpop.f32.mrb[0].mxu0
    %v406 = vadd.f32 %v279, %v405
    %v407 = vpop.f32.mrb[0].mxu0
    %408 = vmatprep.mubr.bf16.mxu0 0
    %409 = vmatmul.mubr.bf16.gmra.mrb[0].mxu0 %v332
    %v410 = vpop.f32.mrb[0].mxu0
    %v411 = vadd.f32 %v280, %v410
    %v412 = vpop.f32.mrb[0].mxu0
    %v413 = vpop.f32.mrb[0].mxu0
    %v414 = vadd.f32 %v281, %v413
    %v415 = vpop.f32.mrb[0].mxu0
    %416 = vmatprep.mubr.bf16.mxu0 0
    %417 = vmatmul.mubr.bf16.gmra.mrb[0].mxu0 %v333
    %v418 = vpop.f32.mrb[0].mxu0
    %v419 = vadd.f32 %v282, %v418
    %v420 = vpop.f32.mrb[0].mxu0
    %v421 = vpop.f32.mrb[0].mxu0
    %v422 = vadd.f32 %v283, %v421
    %v423 = vpop.f32.mrb[0].mxu0
    %424 = vmatprep.mubr.bf16.mxu0 0
    %425 = vmatmul.mubr.bf16.gmra.mrb[0].mxu0 %v334
    %v426 = vpop.f32.mrb[0].mxu0
    %v427 = vadd.f32 %v284, %v426
    %v428 = vpop.f32.mrb[0].mxu0
    %v429 = vpop.f32.mrb[0].mxu0
    %v430 = vadd.f32 %v285, %v429
    %v431 = vpop.f32.mrb[0].mxu0
    %432 = vmatprep.mubr.bf16.mxu0 0
    %433 = vmatmul.mubr.bf16.gmra.mrb[0].mxu0 %v335
    %v434 = vpop.f32.mrb[0].mxu0
    %v435 = vadd.f32 %v286, %v434
    %v436 = vpop.f32.mrb[0].mxu0
    %v437 = vpop.f32.mrb[0].mxu0
    %v438 = vadd.f32 %v287, %v437
    %v439 = vpop.f32.mrb[0].mxu0
    %440 = vdwg.mxu0
    %v441 = vmax.f32 %v379, 0.0
    %v442 = vmax.f32 %v382, 0.0
    %v443 = vmax.f32 %v387, 0.0
    %v444 = vmax.f32 %v390, 0.0
    %v445 = vmax.f32 %v395, 0.0
    %v446 = vmax.f32 %v398, 0.0
    %v447 = vmax.f32 %v403, 0.0
    %v448 = vmax.f32 %v406, 0.0
    %v449 = vmax.f32 %v411, 0.0
    %v450 = vmax.f32 %v414, 0.0
    %v451 = vmax.f32 %v419, 0.0
    %v452 = vmax.f32 %v422, 0.0
    %v453 = vmax.f32 %v427, 0.0
    %v454 = vmax.f32 %v430, 0.0
    %v455 = vmax.f32 %v435, 0.0
    %v456 = vmax.f32 %v438, 0.0
    %v457 = vpack.c.bf16 %v442, %v441
    %v458 = vpack.c.bf16 %v444, %v443
    %v459 = vpack.c.bf16 %v446, %v445
    %v460 = vpack.c.bf16 %v448, %v447
    %v461 = vpack.c.bf16 %v450, %v449
    %v462 = vpack.c.bf16 %v452, %v451
    %v463 = vpack.c.bf16 %v454, %v453
    %v464 = vpack.c.bf16 %v456, %v455
    %v481 = vunpack.c.l.b16 %v98
    %v482 = vunpack.c.l.b16 %v99
    %v483 = vunpack.c.l.b16 %v100
    %v484 = vunpack.c.l.b16 %v101
    %v485 = vunpack.c.l.b16 %v102
    %v486 = vunpack.c.l.b16 %v103
    %v487 = vunpack.c.l.b16 %v104
    %v488 = vunpack.c.l.b16 %v105
    %v489 = vunpack.c.l.b16 %v106
    %v490 = vunpack.c.l.b16 %v107
    %v491 = vunpack.c.l.b16 %v108
    %v492 = vunpack.c.l.b16 %v109
    %v493 = vunpack.c.l.b16 %v110
    %v494 = vunpack.c.l.b16 %v111
    %v495 = vunpack.c.l.b16 %v112
    %v496 = vunpack.c.l.b16 %v113
    %v497 = vpack.c.b16 %v482, %v481
    %v498 = vpack.c.b16 %v484, %v483
    %v499 = vpack.c.b16 %v486, %v485
    %v500 = vpack.c.b16 %v488, %v487
    %v501 = vpack.c.b16 %v490, %v489
    %v502 = vpack.c.b16 %v492, %v491
    %v503 = vpack.c.b16 %v494, %v493
    %v504 = vpack.c.b16 %v496, %v495
    %513 = vmatprep.subr.bf16.mxu0 0
    %514 = vmatpush1.bf16.msra.mxu0 %v457
    %515 = vmatprep.subr.bf16.mxu0 0
    %516 = vmatpush1.bf16.msra.mxu0 %v458
    %517 = vmatprep.subr.bf16.mxu0 0
    %518 = vmatpush1.bf16.msra.mxu0 %v459
    %519 = vmatprep.subr.bf16.mxu0 0
    %520 = vmatpush1.bf16.msra.mxu0 %v460
    %521 = vmatprep.subr.bf16.mxu0 0
    %522 = vmatpush1.bf16.msra.mxu0 %v461
    %523 = vmatprep.subr.bf16.mxu0 0
    %524 = vmatpush1.bf16.msra.mxu0 %v462
    %525 = vmatprep.subr.bf16.mxu0 0
    %526 = vmatpush1.bf16.msra.mxu0 %v463
    %527 = vmatprep.subr.bf16.mxu0 0
    %528 = vmatpush1.bf16.msra.mxu0 %v464
    %529 = vmatprep.subr.bf16.mxu0 0
    %530 = vmatpush1.bf16.msra.mxu0 0
    %531 = vmatprep.subr.bf16.mxu0 0
    %532 = vmatpush1.bf16.msra.mxu0 0
    %533 = vmatprep.subr.bf16.mxu0 0
    %534 = vmatpush1.bf16.msra.mxu0 0
    %535 = vmatprep.subr.bf16.mxu0 0
    %536 = vmatpush1.bf16.msra.mxu0 0
    %537 = vmatprep.subr.bf16.mxu0 0
    %538 = vmatpush1.bf16.msra.mxu0 0
    %539 = vmatprep.subr.bf16.mxu0 0
    %540 = vmatpush1.bf16.msra.mxu0 0
    %541 = vmatprep.subr.bf16.mxu0 0
    %542 = vmatpush1.bf16.msra.mxu0 0
    %543 = vmatprep.subr.bf16.mxu0 0
    %544 = vmatpush1.bf16.msra.mxu0 0
    %545 = vmatprep.mubr.bf16.mxu0 0
    %546 = vmatmul.mubr.bf16.gmra.mrb[0].mxu0 %v497
    %v547 = vpop.f32.mrb[0].mxu0
    %v548 = vadd.f32 0.0, %v547
    %v549 = vpop.f32.mrb[0].mxu0
    %v550 = vpop.f32.mrb[0].mxu0
    %v551 = vadd.f32 0.0, %v550
    %v552 = vpop.f32.mrb[0].mxu0
    %553 = vmatprep.mubr.bf16.mxu0 0
    %554 = vmatmul.mubr.bf16.gmra.mrb[0].mxu0 %v498
    %v555 = vpop.f32.mrb[0].mxu0
    %v556 = vadd.f32 0.0, %v555
    %v557 = vpop.f32.mrb[0].mxu0
    %v558 = vpop.f32.mrb[0].mxu0
    %v559 = vadd.f32 0.0, %v558
    %v560 = vpop.f32.mrb[0].mxu0
    %561 = vmatprep.mubr.bf16.mxu0 0
    %562 = vmatmul.mubr.bf16.gmra.mrb[0].mxu0 %v499
    %v563 = vpop.f32.mrb[0].mxu0
    %v564 = vadd.f32 0.0, %v563
    %v565 = vpop.f32.mrb[0].mxu0
    %v566 = vpop.f32.mrb[0].mxu0
    %v567 = vadd.f32 0.0, %v566
    %v568 = vpop.f32.mrb[0].mxu0
    %569 = vmatprep.mubr.bf16.mxu0 0
    %570 = vmatmul.mubr.bf16.gmra.mrb[0].mxu0 %v500
    %v571 = vpop.f32.mrb[0].mxu0
    %v572 = vadd.f32 0.0, %v571
    %v573 = vpop.f32.mrb[0].mxu0
    %v574 = vpop.f32.mrb[0].mxu0
    %v575 = vadd.f32 0.0, %v574
    %v576 = vpop.f32.mrb[0].mxu0
    %577 = vmatprep.mubr.bf16.mxu0 0
    %578 = vmatmul.mubr.bf16.gmra.mrb[0].mxu0 %v501
    %v579 = vpop.f32.mrb[0].mxu0
    %v580 = vadd.f32 0.0, %v579
    %v581 = vpop.f32.mrb[0].mxu0
    %v582 = vpop.f32.mrb[0].mxu0
    %v583 = vadd.f32 0.0, %v582
    %v584 = vpop.f32.mrb[0].mxu0
    %585 = vmatprep.mubr.bf16.mxu0 0
    %586 = vmatmul.mubr.bf16.gmra.mrb[0].mxu0 %v502
    %v587 = vpop.f32.mrb[0].mxu0
    %v588 = vadd.f32 0.0, %v587
    %v589 = vpop.f32.mrb[0].mxu0
    %v590 = vpop.f32.mrb[0].mxu0
    %v591 = vadd.f32 0.0, %v590
    %v592 = vpop.f32.mrb[0].mxu0
    %593 = vmatprep.mubr.bf16.mxu0 0
    %594 = vmatmul.mubr.bf16.gmra.mrb[0].mxu0 %v503
    %v595 = vpop.f32.mrb[0].mxu0
    %v596 = vadd.f32 0.0, %v595
    %v597 = vpop.f32.mrb[0].mxu0
    %v598 = vpop.f32.mrb[0].mxu0
    %v599 = vadd.f32 0.0, %v598
    %v600 = vpop.f32.mrb[0].mxu0
    %601 = vmatprep.mubr.bf16.mxu0 0
    %602 = vmatmul.mubr.bf16.gmra.mrb[0].mxu0 %v504
    %v603 = vpop.f32.mrb[0].mxu0
    %v604 = vadd.f32 0.0, %v603
    %v605 = vpop.f32.mrb[0].mxu0
    %v606 = vpop.f32.mrb[0].mxu0
    %v607 = vadd.f32 0.0, %v606
    %v608 = vpop.f32.mrb[0].mxu0
    %609 = vdwg.mxu0
    %611 = vset.pattern.permute.xlu0 0
    %612 = vperm.xlu0 %611, %v130
    %v613 = vpop.permute.xlu0 %612
    %616 = vset.pattern.permute.xlu0 0
    %617 = vperm.xlu0 %616, %v131
    %v618 = vpop.permute.xlu0 %617
    %621 = vset.pattern.permute.xlu0 0
    %622 = vperm.xlu0 %621, %v132
    %v623 = vpop.permute.xlu0 %622
    %626 = vset.pattern.permute.xlu0 0
    %627 = vperm.xlu0 %626, %v133
    %v628 = vpop.permute.xlu0 %627
    %631 = vset.pattern.permute.xlu0 0
    %632 = vperm.xlu0 %631, %v134
    %v633 = vpop.permute.xlu0 %632
    %636 = vset.pattern.permute.xlu0 0
    %637 = vperm.xlu0 %636, %v135
    %v638 = vpop.permute.xlu0 %637
    %641 = vset.pattern.permute.xlu0 0
    %642 = vperm.xlu0 %641, %v136
    %v643 = vpop.permute.xlu0 %642
    %646 = vset.pattern.permute.xlu0 0
    %647 = vperm.xlu0 %646, %v137
    %v648 = vpop.permute.xlu0 %647
    %651 = vset.pattern.permute.xlu0 0
    %652 = vperm.xlu0 %651, %v138
    %v653 = vpop.permute.xlu0 %652
    %656 = vset.pattern.permute.xlu0 0
    %657 = vperm.xlu0 %656, %v139
    %v658 = vpop.permute.xlu0 %657
    %661 = vset.pattern.permute.xlu0 0
    %662 = vperm.xlu0 %661, %v140
    %v663 = vpop.permute.xlu0 %662
    %666 = vset.pattern.permute.xlu0 0
    %667 = vperm.xlu0 %666, %v141
    %v668 = vpop.permute.xlu0 %667
    %671 = vset.pattern.permute.xlu0 0
    %672 = vperm.xlu0 %671, %v142
    %v673 = vpop.permute.xlu0 %672
    %676 = vset.pattern.permute.xlu0 0
    %677 = vperm.xlu0 %676, %v143
    %v678 = vpop.permute.xlu0 %677
    %681 = vset.pattern.permute.xlu0 0
    %682 = vperm.xlu0 %681, %v144
    %v683 = vpop.permute.xlu0 %682
    %686 = vset.pattern.permute.xlu0 0
    %687 = vperm.xlu0 %686, %v145
    %v688 = vpop.permute.xlu0 %687
    %v690 = vmul.f32 %v548, %v613
    %v691 = vmul.f32 %v551, %v618
    %v692 = vmul.f32 %v556, %v623
    %v693 = vmul.f32 %v559, %v628
    %v694 = vmul.f32 %v564, %v633
    %v695 = vmul.f32 %v567, %v638
    %v696 = vmul.f32 %v572, %v643
    %v697 = vmul.f32 %v575, %v648
    %v698 = vmul.f32 %v580, %v653
    %v699 = vmul.f32 %v583, %v658
    %v700 = vmul.f32 %v588, %v663
    %v701 = vmul.f32 %v591, %v668
    %v702 = vmul.f32 %v596, %v673
    %v703 = vmul.f32 %v599, %v678
    %v704 = vmul.f32 %v604, %v683
    %v705 = vmul.f32 %v607, %v688
    %s706 = sld [smem:[#allocation2]]
    %s707 = sadd.f32 %s706, 1.0
    %v708 = vstv %s707
    %v709 = vmul.f32 %v708, %v146
    %v710 = vmul.f32 %v708, %v147
    %v711 = vmul.f32 %v708, %v148
    %v712 = vmul.f32 %v708, %v149
    %v713 = vmul.f32 %v708, %v150
    %v714 = vmul.f32 %v708, %v151
    %v715 = vmul.f32 %v708, %v152
    %v716 = vmul.f32 %v708, %v153
    %v717 = vmul.f32 %v708, %v154
    %v718 = vmul.f32 %v708, %v155
    %v719 = vmul.f32 %v708, %v156
    %v720 = vmul.f32 %v708, %v157
    %v721 = vmul.f32 %v708, %v158
    %v722 = vmul.f32 %v708, %v159
    %v723 = vmul.f32 %v708, %v160
    %v724 = vmul.f32 %v708, %v161
    %v725 = vadd.f32 %v709, %v690
    %v726 = vadd.f32 %v710, %v691
    %v727 = vadd.f32 %v711, %v692
    %v728 = vadd.f32 %v712, %v693
    %v729 = vadd.f32 %v713, %v694
    %v730 = vadd.f32 %v714, %v695
    %v731 = vadd.f32 %v715, %v696
    %v732 = vadd.f32 %v716, %v697
    %v733 = vadd.f32 %v717, %v698
    %v734 = vadd.f32 %v718, %v699
    %v735 = vadd.f32 %v719, %v700
    %v736 = vadd.f32 %v720, %v701
    %v737 = vadd.f32 %v721, %v702
    %v738 = vadd.f32 %v722, %v703
    %v739 = vadd.f32 %v723, %v704
    %v740 = vadd.f32 %v724, %v705
    %v741 = vld [vmem:[#allocation6] sm:$0xff]
    %v742 = vld [vmem:[#allocation6 + $0x8] sm:$0xff]
    %v743 = vld [vmem:[#allocation6 + $0x10] sm:$0xff]
    %v744 = vld [vmem:[#allocation6 + $0x18] sm:$0xff]
    %v745 = vld [vmem:[#allocation6 + $0x20] sm:$0xff]
    %v746 = vld [vmem:[#allocation6 + $0x28] sm:$0xff]
    %v747 = vld [vmem:[#allocation6 + $0x30] sm:$0xff]
    %v748 = vld [vmem:[#allocation6 + $0x38] sm:$0xff]
    %v749 = vld [vmem:[#allocation6 + $0x40] sm:$0xff]
    %v750 = vld [vmem:[#allocation6 + $0x48] sm:$0xff]
    %v751 = vld [vmem:[#allocation6 + $0x50] sm:$0xff]
    %v752 = vld [vmem:[#allocation6 + $0x58] sm:$0xff]
    %v753 = vld [vmem:[#allocation6 + $0x60] sm:$0xff]
    %v754 = vld [vmem:[#allocation6 + $0x68] sm:$0xff]
    %v755 = vld [vmem:[#allocation6 + $0x70] sm:$0xff]
    %v756 = vld [vmem:[#allocation6 + $0x78] sm:$0xff]
    %v757 = vld [vmem:[%s9] sm:$0x1]
    %v759 = vlaneseq
    %v760 = vshrl.u32 %v759, 7
    %v761 = vsub.s32 0, %v760
    %v762 = vrot.slane %v757, %v761
    %764 = vmatprep.subr.mxu0 0.0
    %765 = vmatpush1.msra.mxu0 %v741
    %766 = vmatprep.subr.mxu0 0.0
    %767 = vmatpush1.msra.mxu0 %v742
    %768 = vmatprep.subr.mxu0 0.0
    %769 = vmatpush1.msra.mxu0 %v743
    %770 = vmatprep.subr.mxu0 0.0
    %771 = vmatpush1.msra.mxu0 %v744
    %772 = vmatprep.subr.mxu0 0.0
    %773 = vmatpush1.msra.mxu0 %v745
    %774 = vmatprep.subr.mxu0 0.0
    %775 = vmatpush1.msra.mxu0 %v746
    %776 = vmatprep.subr.mxu0 0.0
    %777 = vmatpush1.msra.mxu0 %v747
    %778 = vmatprep.subr.mxu0 0.0
    %779 = vmatpush1.msra.mxu0 %v748
    %780 = vmatprep.subr.mxu0 0.0
    %781 = vmatpush1.msra.mxu0 %v749
    %782 = vmatprep.subr.mxu0 0.0
    %783 = vmatpush1.msra.mxu0 %v750
    %784 = vmatprep.subr.mxu0 0.0
    %785 = vmatpush1.msra.mxu0 %v751
    %786 = vmatprep.subr.mxu0 0.0
    %787 = vmatpush1.msra.mxu0 %v752
    %788 = vmatprep.subr.mxu0 0.0
    %789 = vmatpush1.msra.mxu0 %v753
    %790 = vmatprep.subr.mxu0 0.0
    %791 = vmatpush1.msra.mxu0 %v754
    %792 = vmatprep.subr.mxu0 0.0
    %793 = vmatpush1.msra.mxu0 %v755
    %794 = vmatprep.subr.mxu0 0.0
    %795 = vmatpush1.msra.mxu0 %v756
    %796 = vmatprep.subr.mxu0 0.0
    %797 = vmatpush1.msra.mxu0 0.0
    %798 = vmatprep.subr.mxu0 0.0
    %799 = vmatpush1.msra.mxu0 0.0
    %800 = vmatprep.subr.mxu0 0.0
    %801 = vmatpush1.msra.mxu0 0.0
    %802 = vmatprep.subr.mxu0 0.0
    %803 = vmatpush1.msra.mxu0 0.0
    %804 = vmatprep.subr.mxu0 0.0
    %805 = vmatpush1.msra.mxu0 0.0
    %806 = vmatprep.subr.mxu0 0.0
    %807 = vmatpush1.msra.mxu0 0.0
    %808 = vmatprep.subr.mxu0 0.0
    %809 = vmatpush1.msra.mxu0 0.0
    %810 = vmatprep.subr.mxu0 0.0
    %811 = vmatpush1.msra.mxu0 0.0
    %812 = vmatprep.subr.mxu0 0.0
    %813 = vmatpush1.msra.mxu0 0.0
    %814 = vmatprep.subr.mxu0 0.0
    %815 = vmatpush1.msra.mxu0 0.0
    %816 = vmatprep.subr.mxu0 0.0
    %817 = vmatpush1.msra.mxu0 0.0
    %818 = vmatprep.subr.mxu0 0.0
    %819 = vmatpush1.msra.mxu0 0.0
    %820 = vmatprep.subr.mxu0 0.0
    %821 = vmatpush1.msra.mxu0 0.0
    %822 = vmatprep.subr.mxu0 0.0
    %823 = vmatpush1.msra.mxu0 0.0
    %824 = vmatprep.subr.mxu0 0.0
    %825 = vmatpush1.msra.mxu0 0.0
    %826 = vmatprep.subr.mxu0 0.0
    %827 = vmatpush1.msra.mxu0 0.0
    %828 = vmatprep.mubr.f32.mxu0 0.0
    %829 = vmatmul.mubr.f32.gmra.mrb[0].mxu0 %v725
    %v830 = vpop.f32.mrb[0].mxu0
    %v831 = vadd.f32 %v762, %v830
    %v832 = vpop.f32.mrb[0].mxu0
    %833 = vmatprep.mubr.f32.mxu0 0.0
    %834 = vmatmul.mubr.f32.gmra.mrb[0].mxu0 %v726
    %v835 = vpop.f32.mrb[0].mxu0
    %v836 = vadd.f32 %v762, %v835
    %v837 = vpop.f32.mrb[0].mxu0
    %838 = vmatprep.mubr.f32.mxu0 0.0
    %839 = vmatmul.mubr.f32.gmra.mrb[0].mxu0 %v727
    %v840 = vpop.f32.mrb[0].mxu0
    %v841 = vadd.f32 %v762, %v840
    %v842 = vpop.f32.mrb[0].mxu0
    %843 = vmatprep.mubr.f32.mxu0 0.0
    %844 = vmatmul.mubr.f32.gmra.mrb[0].mxu0 %v728
    %v845 = vpop.f32.mrb[0].mxu0
    %v846 = vadd.f32 %v762, %v845
    %v847 = vpop.f32.mrb[0].mxu0
    %848 = vmatprep.mubr.f32.mxu0 0.0
    %849 = vmatmul.mubr.f32.gmra.mrb[0].mxu0 %v729
    %v850 = vpop.f32.mrb[0].mxu0
    %v851 = vadd.f32 %v762, %v850
    %v852 = vpop.f32.mrb[0].mxu0
    %853 = vmatprep.mubr.f32.mxu0 0.0
    %854 = vmatmul.mubr.f32.gmra.mrb[0].mxu0 %v730
    %v855 = vpop.f32.mrb[0].mxu0
    %v856 = vadd.f32 %v762, %v855
    %v857 = vpop.f32.mrb[0].mxu0
    %858 = vmatprep.mubr.f32.mxu0 0.0
    %859 = vmatmul.mubr.f32.gmra.mrb[0].mxu0 %v731
    %v860 = vpop.f32.mrb[0].mxu0
    %v861 = vadd.f32 %v762, %v860
    %v862 = vpop.f32.mrb[0].mxu0
    %863 = vmatprep.mubr.f32.mxu0 0.0
    %864 = vmatmul.mubr.f32.gmra.mrb[0].mxu0 %v732
    %v865 = vpop.f32.mrb[0].mxu0
    %v866 = vadd.f32 %v762, %v865
    %v867 = vpop.f32.mrb[0].mxu0
    %868 = vmatprep.mubr.f32.mxu0 0.0
    %869 = vmatmul.mubr.f32.gmra.mrb[0].mxu0 %v733
    %v870 = vpop.f32.mrb[0].mxu0
    %v871 = vadd.f32 %v762, %v870
    %v872 = vpop.f32.mrb[0].mxu0
    %873 = vmatprep.mubr.f32.mxu0 0.0
    %874 = vmatmul.mubr.f32.gmra.mrb[0].mxu0 %v734
    %v875 = vpop.f32.mrb[0].mxu0
    %v876 = vadd.f32 %v762, %v875
    %v877 = vpop.f32.mrb[0].mxu0
    %878 = vmatprep.mubr.f32.mxu0 0.0
    %879 = vmatmul.mubr.f32.gmra.mrb[0].mxu0 %v735
    %v880 = vpop.f32.mrb[0].mxu0
    %v881 = vadd.f32 %v762, %v880
    %v882 = vpop.f32.mrb[0].mxu0
    %883 = vmatprep.mubr.f32.mxu0 0.0
    %884 = vmatmul.mubr.f32.gmra.mrb[0].mxu0 %v736
    %v885 = vpop.f32.mrb[0].mxu0
    %v886 = vadd.f32 %v762, %v885
    %v887 = vpop.f32.mrb[0].mxu0
    %888 = vmatprep.mubr.f32.mxu0 0.0
    %889 = vmatmul.mubr.f32.gmra.mrb[0].mxu0 %v737
    %v890 = vpop.f32.mrb[0].mxu0
    %v891 = vadd.f32 %v762, %v890
    %v892 = vpop.f32.mrb[0].mxu0
    %893 = vmatprep.mubr.f32.mxu0 0.0
    %894 = vmatmul.mubr.f32.gmra.mrb[0].mxu0 %v738
    %v895 = vpop.f32.mrb[0].mxu0
    %v896 = vadd.f32 %v762, %v895
    %v897 = vpop.f32.mrb[0].mxu0
    %898 = vmatprep.mubr.f32.mxu0 0.0
    %899 = vmatmul.mubr.f32.gmra.mrb[0].mxu0 %v739
    %v900 = vpop.f32.mrb[0].mxu0
    %v901 = vadd.f32 %v762, %v900
    %v902 = vpop.f32.mrb[0].mxu0
    %903 = vmatprep.mubr.f32.mxu0 0.0
    %904 = vmatmul.mubr.f32.gmra.mrb[0].mxu0 %v740
    %v905 = vpop.f32.mrb[0].mxu0
    %v906 = vadd.f32 %v762, %v905
    %v907 = vpop.f32.mrb[0].mxu0
    %908 = vdwg.mxu0
    %v909 = vmax.f32 %v831, 0.0
    %v910 = vmax.f32 %v836, 0.0
    %v911 = vmax.f32 %v841, 0.0
    %v912 = vmax.f32 %v846, 0.0
    %v913 = vmax.f32 %v851, 0.0
    %v914 = vmax.f32 %v856, 0.0
    %v915 = vmax.f32 %v861, 0.0
    %v916 = vmax.f32 %v866, 0.0
    %v917 = vmax.f32 %v871, 0.0
    %v918 = vmax.f32 %v876, 0.0
    %v919 = vmax.f32 %v881, 0.0
    %v920 = vmax.f32 %v886, 0.0
    %v921 = vmax.f32 %v891, 0.0
    %v922 = vmax.f32 %v896, 0.0
    %v923 = vmax.f32 %v901, 0.0
    %v924 = vmax.f32 %v906, 0.0
    %v925 = vld [vmem:[#allocation7] sm:$0xff]
    %v926 = vld [vmem:[#allocation7 + $0x8] sm:$0xff]
    %v927 = vld [vmem:[#allocation7 + $0x10] sm:$0xff]
    %v928 = vld [vmem:[#allocation7 + $0x18] sm:$0xff]
    %v929 = vld [vmem:[#allocation7 + $0x20] sm:$0xff]
    %v930 = vld [vmem:[#allocation7 + $0x28] sm:$0xff]
    %v931 = vld [vmem:[#allocation7 + $0x30] sm:$0xff]
    %v932 = vld [vmem:[#allocation7 + $0x38] sm:$0xff]
    %v933 = vld [vmem:[#allocation7 + $0x40] sm:$0xff]
    %v934 = vld [vmem:[#allocation7 + $0x48] sm:$0xff]
    %v935 = vld [vmem:[#allocation7 + $0x50] sm:$0xff]
    %v936 = vld [vmem:[#allocation7 + $0x58] sm:$0xff]
    %v937 = vld [vmem:[#allocation7 + $0x60] sm:$0xff]
    %v938 = vld [vmem:[#allocation7 + $0x68] sm:$0xff]
    %v939 = vld [vmem:[#allocation7 + $0x70] sm:$0xff]
    %v940 = vld [vmem:[#allocation7 + $0x78] sm:$0xff]
    %v941 = vld [vmem:[%s11] sm:$0x1]
    %v943 = vlaneseq
    %v944 = vshrl.u32 %v943, 7
    %v945 = vsub.s32 0, %v944
    %v946 = vrot.slane %v941, %v945
    %948 = vmatprep.subr.mxu0 0.0
    %949 = vmatpush1.msra.mxu0 %v925
    %950 = vmatprep.subr.mxu0 0.0
    %951 = vmatpush1.msra.mxu0 %v926
    %952 = vmatprep.subr.mxu0 0.0
    %953 = vmatpush1.msra.mxu0 %v927
    %954 = vmatprep.subr.mxu0 0.0
    %955 = vmatpush1.msra.mxu0 %v928
    %956 = vmatprep.subr.mxu0 0.0
    %957 = vmatpush1.msra.mxu0 %v929
    %958 = vmatprep.subr.mxu0 0.0
    %959 = vmatpush1.msra.mxu0 %v930
    %960 = vmatprep.subr.mxu0 0.0
    %961 = vmatpush1.msra.mxu0 %v931
    %962 = vmatprep.subr.mxu0 0.0
    %963 = vmatpush1.msra.mxu0 %v932
    %964 = vmatprep.subr.mxu0 0.0
    %965 = vmatpush1.msra.mxu0 %v933
    %966 = vmatprep.subr.mxu0 0.0
    %967 = vmatpush1.msra.mxu0 %v934
    %968 = vmatprep.subr.mxu0 0.0
    %969 = vmatpush1.msra.mxu0 %v935
    %970 = vmatprep.subr.mxu0 0.0
    %971 = vmatpush1.msra.mxu0 %v936
    %972 = vmatprep.subr.mxu0 0.0
    %973 = vmatpush1.msra.mxu0 %v937
    %974 = vmatprep.subr.mxu0 0.0
    %975 = vmatpush1.msra.mxu0 %v938
    %976 = vmatprep.subr.mxu0 0.0
    %977 = vmatpush1.msra.mxu0 %v939
    %978 = vmatprep.subr.mxu0 0.0
    %979 = vmatpush1.msra.mxu0 %v940
    %980 = vmatprep.subr.mxu0 0.0
    %981 = vmatpush1.msra.mxu0 0.0
    %982 = vmatprep.subr.mxu0 0.0
    %983 = vmatpush1.msra.mxu0 0.0
    %984 = vmatprep.subr.mxu0 0.0
    %985 = vmatpush1.msra.mxu0 0.0
    %986 = vmatprep.subr.mxu0 0.0
    %987 = vmatpush1.msra.mxu0 0.0
    %988 = vmatprep.subr.mxu0 0.0
    %989 = vmatpush1.msra.mxu0 0.0
    %990 = vmatprep.subr.mxu0 0.0
    %991 = vmatpush1.msra.mxu0 0.0
    %992 = vmatprep.subr.mxu0 0.0
    %993 = vmatpush1.msra.mxu0 0.0
    %994 = vmatprep.subr.mxu0 0.0
    %995 = vmatpush1.msra.mxu0 0.0
    %996 = vmatprep.subr.mxu0 0.0
    %997 = vmatpush1.msra.mxu0 0.0
    %998 = vmatprep.subr.mxu0 0.0
    %999 = vmatpush1.msra.mxu0 0.0
    %1000 = vmatprep.subr.mxu0 0.0
    %1001 = vmatpush1.msra.mxu0 0.0
    %1002 = vmatprep.subr.mxu0 0.0
    %1003 = vmatpush1.msra.mxu0 0.0
    %1004 = vmatprep.subr.mxu0 0.0
    %1005 = vmatpush1.msra.mxu0 0.0
    %1006 = vmatprep.subr.mxu0 0.0
    %1007 = vmatpush1.msra.mxu0 0.0
    %1008 = vmatprep.subr.mxu0 0.0
    %1009 = vmatpush1.msra.mxu0 0.0
    %1010 = vmatprep.subr.mxu0 0.0
    %1011 = vmatpush1.msra.mxu0 0.0
    %1012 = vmatprep.mubr.f32.mxu0 0.0
    %1013 = vmatmul.mubr.f32.gmra.mrb[0].mxu0 %v909
    %v1014 = vpop.f32.mrb[0].mxu0
    %v1015 = vadd.f32 %v946, %v1014
    %v1016 = vpop.f32.mrb[0].mxu0
    %1017 = vmatprep.mubr.f32.mxu0 0.0
    %1018 = vmatmul.mubr.f32.gmra.mrb[0].mxu0 %v910
    %v1019 = vpop.f32.mrb[0].mxu0
    %v1020 = vadd.f32 %v946, %v1019
    %v1021 = vpop.f32.mrb[0].mxu0
    %1022 = vmatprep.mubr.f32.mxu0 0.0
    %1023 = vmatmul.mubr.f32.gmra.mrb[0].mxu0 %v911
    %v1024 = vpop.f32.mrb[0].mxu0
    %v1025 = vadd.f32 %v946, %v1024
    %v1026 = vpop.f32.mrb[0].mxu0
    %1027 = vmatprep.mubr.f32.mxu0 0.0
    %1028 = vmatmul.mubr.f32.gmra.mrb[0].mxu0 %v912
    %v1029 = vpop.f32.mrb[0].mxu0
    %v1030 = vadd.f32 %v946, %v1029
    %v1031 = vpop.f32.mrb[0].mxu0
    %1032 = vmatprep.mubr.f32.mxu0 0.0
    %1033 = vmatmul.mubr.f32.gmra.mrb[0].mxu0 %v913
    %v1034 = vpop.f32.mrb[0].mxu0
    %v1035 = vadd.f32 %v946, %v1034
    %v1036 = vpop.f32.mrb[0].mxu0
    %1037 = vmatprep.mubr.f32.mxu0 0.0
    %1038 = vmatmul.mubr.f32.gmra.mrb[0].mxu0 %v914
    %v1039 = vpop.f32.mrb[0].mxu0
    %v1040 = vadd.f32 %v946, %v1039
    %v1041 = vpop.f32.mrb[0].mxu0
    %1042 = vmatprep.mubr.f32.mxu0 0.0
    %1043 = vmatmul.mubr.f32.gmra.mrb[0].mxu0 %v915
    %v1044 = vpop.f32.mrb[0].mxu0
    %v1045 = vadd.f32 %v946, %v1044
    %v1046 = vpop.f32.mrb[0].mxu0
    %1047 = vmatprep.mubr.f32.mxu0 0.0
    %1048 = vmatmul.mubr.f32.gmra.mrb[0].mxu0 %v916
    %v1049 = vpop.f32.mrb[0].mxu0
    %v1050 = vadd.f32 %v946, %v1049
    %v1051 = vpop.f32.mrb[0].mxu0
    %1052 = vmatprep.mubr.f32.mxu0 0.0
    %1053 = vmatmul.mubr.f32.gmra.mrb[0].mxu0 %v917
    %v1054 = vpop.f32.mrb[0].mxu0
    %v1055 = vadd.f32 %v946, %v1054
    %v1056 = vpop.f32.mrb[0].mxu0
    %1057 = vmatprep.mubr.f32.mxu0 0.0
    %1058 = vmatmul.mubr.f32.gmra.mrb[0].mxu0 %v918
    %v1059 = vpop.f32.mrb[0].mxu0
    %v1060 = vadd.f32 %v946, %v1059
    %v1061 = vpop.f32.mrb[0].mxu0
    %1062 = vmatprep.mubr.f32.mxu0 0.0
    %1063 = vmatmul.mubr.f32.gmra.mrb[0].mxu0 %v919
    %v1064 = vpop.f32.mrb[0].mxu0
    %v1065 = vadd.f32 %v946, %v1064
    %v1066 = vpop.f32.mrb[0].mxu0
    %1067 = vmatprep.mubr.f32.mxu0 0.0
    %1068 = vmatmul.mubr.f32.gmra.mrb[0].mxu0 %v920
    %v1069 = vpop.f32.mrb[0].mxu0
    %v1070 = vadd.f32 %v946, %v1069
    %v1071 = vpop.f32.mrb[0].mxu0
    %1072 = vmatprep.mubr.f32.mxu0 0.0
    %1073 = vmatmul.mubr.f32.gmra.mrb[0].mxu0 %v921
    %v1074 = vpop.f32.mrb[0].mxu0
    %v1075 = vadd.f32 %v946, %v1074
    %v1076 = vpop.f32.mrb[0].mxu0
    %1077 = vmatprep.mubr.f32.mxu0 0.0
    %1078 = vmatmul.mubr.f32.gmra.mrb[0].mxu0 %v922
    %v1079 = vpop.f32.mrb[0].mxu0
    %v1080 = vadd.f32 %v946, %v1079
    %v1081 = vpop.f32.mrb[0].mxu0
    %1082 = vmatprep.mubr.f32.mxu0 0.0
    %1083 = vmatmul.mubr.f32.gmra.mrb[0].mxu0 %v923
    %v1084 = vpop.f32.mrb[0].mxu0
    %v1085 = vadd.f32 %v946, %v1084
    %v1086 = vpop.f32.mrb[0].mxu0
    %1087 = vmatprep.mubr.f32.mxu0 0.0
    %1088 = vmatmul.mubr.f32.gmra.mrb[0].mxu0 %v924
    %v1089 = vpop.f32.mrb[0].mxu0
    %v1090 = vadd.f32 %v946, %v1089
    %v1091 = vpop.f32.mrb[0].mxu0
    %1092 = vdwg.mxu0
    %v1093 = vmax.f32 %v1015, 0.0
    %v1094 = vmax.f32 %v1020, 0.0
    %v1095 = vmax.f32 %v1025, 0.0
    %v1096 = vmax.f32 %v1030, 0.0
    %v1097 = vmax.f32 %v1035, 0.0
    %v1098 = vmax.f32 %v1040, 0.0
    %v1099 = vmax.f32 %v1045, 0.0
    %v1100 = vmax.f32 %v1050, 0.0
    %v1101 = vmax.f32 %v1055, 0.0
    %v1102 = vmax.f32 %v1060, 0.0
    %v1103 = vmax.f32 %v1065, 0.0
    %v1104 = vmax.f32 %v1070, 0.0
    %v1105 = vmax.f32 %v1075, 0.0
    %v1106 = vmax.f32 %v1080, 0.0
    %v1107 = vmax.f32 %v1085, 0.0
    %v1108 = vmax.f32 %v1090, 0.0
    %1109 = vst [vmem:[#allocation9] sm:$0xff] %v1093
    %1110 = vst [vmem:[#allocation9 + $0x20] sm:$0xff] %v1094
    %1111 = vst [vmem:[#allocation9 + $0x40] sm:$0xff] %v1095
    %1112 = vst [vmem:[#allocation9 + $0x60] sm:$0xff] %v1096
    %1113 = vst [vmem:[#allocation9 + $0x80] sm:$0xff] %v1097
    %1114 = vst [vmem:[#allocation9 + $0xa0] sm:$0xff] %v1098
    %1115 = vst [vmem:[#allocation9 + $0xc0] sm:$0xff] %v1099
    %1116 = vst [vmem:[#allocation9 + $0xe0] sm:$0xff] %v1100
    %1117 = vst [vmem:[#allocation9 + $0x100] sm:$0xff] %v1101
    %1118 = vst [vmem:[#allocation9 + $0x120] sm:$0xff] %v1102
    %1119 = vst [vmem:[#allocation9 + $0x140] sm:$0xff] %v1103
    %1120 = vst [vmem:[#allocation9 + $0x160] sm:$0xff] %v1104
    %1121 = vst [vmem:[#allocation9 + $0x180] sm:$0xff] %v1105
    %1122 = vst [vmem:[#allocation9 + $0x1a0] sm:$0xff] %v1106
    %1123 = vst [vmem:[#allocation9 + $0x1c0] sm:$0xff] %v1107
    %1124 = vst [vmem:[#allocation9 + $0x1e0] sm:$0xff] %v1108
    %s1125 = scalar_lea.vmem %s6, 1
    %v1126 = vld [vmem:[%s1125] sm:$0x1]
    %v1128 = vlaneseq
    %v1129 = vshrl.u32 %v1128, 7
    %v1130 = vsub.s32 0, %v1129
    %v1131 = vrot.slane %v1126, %v1130
    %v1133 = vmul.f32 %v166, %v1131
    %v1134 = vmul.f32 %v171, %v1131
    %v1135 = vmul.f32 %v176, %v1131
    %v1136 = vmul.f32 %v181, %v1131
    %v1137 = vmul.f32 %v186, %v1131
    %v1138 = vmul.f32 %v191, %v1131
    %v1139 = vmul.f32 %v196, %v1131
    %v1140 = vmul.f32 %v201, %v1131
    %v1141 = vmul.f32 %v206, %v1131
    %v1142 = vmul.f32 %v211, %v1131
    %v1143 = vmul.f32 %v216, %v1131
    %v1144 = vmul.f32 %v221, %v1131
    %v1145 = vmul.f32 %v226, %v1131
    %v1146 = vmul.f32 %v231, %v1131
    %v1147 = vmul.f32 %v236, %v1131
    %v1148 = vmul.f32 %v241, %v1131
    %s1149 = scalar_lea.vmem %s7, 1
    %v1150 = vld [vmem:[%s1149] sm:$0x1]
    %v1152 = vlaneseq
    %v1153 = vshrl.u32 %v1152, 7
    %v1154 = vsub.s32 0, %v1153
    %v1155 = vrot.slane %v1150, %v1154
    %v1157 = vadd.f32 %v1133, %v1155
    %v1158 = vadd.f32 %v1134, %v1155
    %v1159 = vadd.f32 %v1135, %v1155
    %v1160 = vadd.f32 %v1136, %v1155
    %v1161 = vadd.f32 %v1137, %v1155
    %v1162 = vadd.f32 %v1138, %v1155
    %v1163 = vadd.f32 %v1139, %v1155
    %v1164 = vadd.f32 %v1140, %v1155
    %v1165 = vadd.f32 %v1141, %v1155
    %v1166 = vadd.f32 %v1142, %v1155
    %v1167 = vadd.f32 %v1143, %v1155
    %v1168 = vadd.f32 %v1144, %v1155
    %v1169 = vadd.f32 %v1145, %v1155
    %v1170 = vadd.f32 %v1146, %v1155
    %v1171 = vadd.f32 %v1147, %v1155
    %v1172 = vadd.f32 %v1148, %v1155
    %v1173 = vpack.c.bf16 %v1094, %v1093
    %v1174 = vpack.c.bf16 %v1096, %v1095
    %v1175 = vpack.c.bf16 %v1098, %v1097
    %v1176 = vpack.c.bf16 %v1100, %v1099
    %v1177 = vpack.c.bf16 %v1102, %v1101
    %v1178 = vpack.c.bf16 %v1104, %v1103
    %v1179 = vpack.c.bf16 %v1106, %v1105
    %v1180 = vpack.c.bf16 %v1108, %v1107
    %1181 = vmatprep.subr.bf16.mxu0 0
    %1182 = vmatpush1.bf16.msra.mxu0 %v1173
    %1183 = vmatprep.subr.bf16.mxu0 0
    %1184 = vmatpush1.bf16.msra.mxu0 %v1174
    %1185 = vmatprep.subr.bf16.mxu0 0
    %1186 = vmatpush1.bf16.msra.mxu0 %v1175
    %1187 = vmatprep.subr.bf16.mxu0 0
    %1188 = vmatpush1.bf16.msra.mxu0 %v1176
    %1189 = vmatprep.subr.bf16.mxu0 0
    %1190 = vmatpush1.bf16.msra.mxu0 %v1177
    %1191 = vmatprep.subr.bf16.mxu0 0
    %1192 = vmatpush1.bf16.msra.mxu0 %v1178
    %1193 = vmatprep.subr.bf16.mxu0 0
    %1194 = vmatpush1.bf16.msra.mxu0 %v1179
    %1195 = vmatprep.subr.bf16.mxu0 0
    %1196 = vmatpush1.bf16.msra.mxu0 %v1180
    %1197 = vmatprep.subr.bf16.mxu0 0
    %1198 = vmatpush1.bf16.msra.mxu0 0
    %1199 = vmatprep.subr.bf16.mxu0 0
    %1200 = vmatpush1.bf16.msra.mxu0 0
    %1201 = vmatprep.subr.bf16.mxu0 0
    %1202 = vmatpush1.bf16.msra.mxu0 0
    %1203 = vmatprep.subr.bf16.mxu0 0
    %1204 = vmatpush1.bf16.msra.mxu0 0
    %1205 = vmatprep.subr.bf16.mxu0 0
    %1206 = vmatpush1.bf16.msra.mxu0 0
    %1207 = vmatprep.subr.bf16.mxu0 0
    %1208 = vmatpush1.bf16.msra.mxu0 0
    %1209 = vmatprep.subr.bf16.mxu0 0
    %1210 = vmatpush1.bf16.msra.mxu0 0
    %1211 = vmatprep.subr.bf16.mxu0 0
    %1212 = vmatpush1.bf16.msra.mxu0 0
    %1213 = vmatprep.mubr.bf16.mxu0 0
    %1214 = vmatmul.mubr.bf16.gmra.mrb[0].mxu0 %v328
    %v1215 = vpop.f32.mrb[0].mxu0
    %v1216 = vadd.f32 %v1157, %v1215
    %v1217 = vpop.f32.mrb[0].mxu0
    %v1218 = vpop.f32.mrb[0].mxu0
    %v1219 = vadd.f32 %v1158, %v1218
    %v1220 = vpop.f32.mrb[0].mxu0
    %1221 = vmatprep.mubr.bf16.mxu0 0
    %1222 = vmatmul.mubr.bf16.gmra.mrb[0].mxu0 %v329
    %v1223 = vpop.f32.mrb[0].mxu0
    %v1224 = vadd.f32 %v1159, %v1223
    %v1225 = vpop.f32.mrb[0].mxu0
    %v1226 = vpop.f32.mrb[0].mxu0
    %v1227 = vadd.f32 %v1160, %v1226
    %v1228 = vpop.f32.mrb[0].mxu0
    %1229 = vmatprep.mubr.bf16.mxu0 0
    %1230 = vmatmul.mubr.bf16.gmra.mrb[0].mxu0 %v330
    %v1231 = vpop.f32.mrb[0].mxu0
    %v1232 = vadd.f32 %v1161, %v1231
    %v1233 = vpop.f32.mrb[0].mxu0
    %v1234 = vpop.f32.mrb[0].mxu0
    %v1235 = vadd.f32 %v1162, %v1234
    %v1236 = vpop.f32.mrb[0].mxu0
    %1237 = vmatprep.mubr.bf16.mxu0 0
    %1238 = vmatmul.mubr.bf16.gmra.mrb[0].mxu0 %v331
    %v1239 = vpop.f32.mrb[0].mxu0
    %v1240 = vadd.f32 %v1163, %v1239
    %v1241 = vpop.f32.mrb[0].mxu0
    %v1242 = vpop.f32.mrb[0].mxu0
    %v1243 = vadd.f32 %v1164, %v1242
    %v1244 = vpop.f32.mrb[0].mxu0
    %1245 = vmatprep.mubr.bf16.mxu0 0
    %1246 = vmatmul.mubr.bf16.gmra.mrb[0].mxu0 %v332
    %v1247 = vpop.f32.mrb[0].mxu0
    %v1248 = vadd.f32 %v1165, %v1247
    %v1249 = vpop.f32.mrb[0].mxu0
    %v1250 = vpop.f32.mrb[0].mxu0
    %v1251 = vadd.f32 %v1166, %v1250
    %v1252 = vpop.f32.mrb[0].mxu0
    %1253 = vmatprep.mubr.bf16.mxu0 0
    %1254 = vmatmul.mubr.bf16.gmra.mrb[0].mxu0 %v333
    %v1255 = vpop.f32.mrb[0].mxu0
    %v1256 = vadd.f32 %v1167, %v1255
    %v1257 = vpop.f32.mrb[0].mxu0
    %v1258 = vpop.f32.mrb[0].mxu0
    %v1259 = vadd.f32 %v1168, %v1258
    %v1260 = vpop.f32.mrb[0].mxu0
    %1261 = vmatprep.mubr.bf16.mxu0 0
    %1262 = vmatmul.mubr.bf16.gmra.mrb[0].mxu0 %v334
    %v1263 = vpop.f32.mrb[0].mxu0
    %v1264 = vadd.f32 %v1169, %v1263
    %v1265 = vpop.f32.mrb[0].mxu0
    %v1266 = vpop.f32.mrb[0].mxu0
    %v1267 = vadd.f32 %v1170, %v1266
    %v1268 = vpop.f32.mrb[0].mxu0
    %1269 = vmatprep.mubr.bf16.mxu0 0
    %1270 = vmatmul.mubr.bf16.gmra.mrb[0].mxu0 %v335
    %v1271 = vpop.f32.mrb[0].mxu0
    %v1272 = vadd.f32 %v1171, %v1271
    %v1273 = vpop.f32.mrb[0].mxu0
    %v1274 = vpop.f32.mrb[0].mxu0
    %v1275 = vadd.f32 %v1172, %v1274
    %v1276 = vpop.f32.mrb[0].mxu0
    %1277 = vdwg.mxu0
    %v1278 = vmax.f32 %v1216, 0.0
    %v1279 = vmax.f32 %v1219, 0.0
    %v1280 = vmax.f32 %v1224, 0.0
    %v1281 = vmax.f32 %v1227, 0.0
    %v1282 = vmax.f32 %v1232, 0.0
    %v1283 = vmax.f32 %v1235, 0.0
    %v1284 = vmax.f32 %v1240, 0.0
    %v1285 = vmax.f32 %v1243, 0.0
    %v1286 = vmax.f32 %v1248, 0.0
    %v1287 = vmax.f32 %v1251, 0.0
    %v1288 = vmax.f32 %v1256, 0.0
    %v1289 = vmax.f32 %v1259, 0.0
    %v1290 = vmax.f32 %v1264, 0.0
    %v1291 = vmax.f32 %v1267, 0.0
    %v1292 = vmax.f32 %v1272, 0.0
    %v1293 = vmax.f32 %v1275, 0.0
    %v1294 = vpack.c.bf16 %v1279, %v1278
    %v1295 = vpack.c.bf16 %v1281, %v1280
    %v1296 = vpack.c.bf16 %v1283, %v1282
    %v1297 = vpack.c.bf16 %v1285, %v1284
    %v1298 = vpack.c.bf16 %v1287, %v1286
    %v1299 = vpack.c.bf16 %v1289, %v1288
    %v1300 = vpack.c.bf16 %v1291, %v1290
    %v1301 = vpack.c.bf16 %v1293, %v1292
    %1302 = vmatprep.subr.bf16.mxu0 0
    %1303 = vmatpush1.bf16.msra.mxu0 %v1294
    %1304 = vmatprep.subr.bf16.mxu0 0
    %1305 = vmatpush1.bf16.msra.mxu0 %v1295
    %1306 = vmatprep.subr.bf16.mxu0 0
    %1307 = vmatpush1.bf16.msra.mxu0 %v1296
    %1308 = vmatprep.subr.bf16.mxu0 0
    %1309 = vmatpush1.bf16.msra.mxu0 %v1297
    %1310 = vmatprep.subr.bf16.mxu0 0
    %1311 = vmatpush1.bf16.msra.mxu0 %v1298
    %1312 = vmatprep.subr.bf16.mxu0 0
    %1313 = vmatpush1.bf16.msra.mxu0 %v1299
    %1314 = vmatprep.subr.bf16.mxu0 0
    %1315 = vmatpush1.bf16.msra.mxu0 %v1300
    %1316 = vmatprep.subr.bf16.mxu0 0
    %1317 = vmatpush1.bf16.msra.mxu0 %v1301
    %1318 = vmatprep.subr.bf16.mxu0 0
    %1319 = vmatpush1.bf16.msra.mxu0 0
    %1320 = vmatprep.subr.bf16.mxu0 0
    %1321 = vmatpush1.bf16.msra.mxu0 0
    %1322 = vmatprep.subr.bf16.mxu0 0
    %1323 = vmatpush1.bf16.msra.mxu0 0
    %1324 = vmatprep.subr.bf16.mxu0 0
    %1325 = vmatpush1.bf16.msra.mxu0 0
    %1326 = vmatprep.subr.bf16.mxu0 0
    %1327 = vmatpush1.bf16.msra.mxu0 0
    %1328 = vmatprep.subr.bf16.mxu0 0
    %1329 = vmatpush1.bf16.msra.mxu0 0
    %1330 = vmatprep.subr.bf16.mxu0 0
    %1331 = vmatpush1.bf16.msra.mxu0 0
    %1332 = vmatprep.subr.bf16.mxu0 0
    %1333 = vmatpush1.bf16.msra.mxu0 0
    %1334 = vmatprep.mubr.bf16.mxu0 0
    %1335 = vmatmul.mubr.bf16.gmra.mrb[0].mxu0 %v497
    %v1336 = vpop.f32.mrb[0].mxu0
    %v1337 = vadd.f32 0.0, %v1336
    %v1338 = vpop.f32.mrb[0].mxu0
    %v1339 = vpop.f32.mrb[0].mxu0
    %v1340 = vadd.f32 0.0, %v1339
    %v1341 = vpop.f32.mrb[0].mxu0
    %1342 = vmatprep.mubr.bf16.mxu0 0
    %1343 = vmatmul.mubr.bf16.gmra.mrb[0].mxu0 %v498
    %v1344 = vpop.f32.mrb[0].mxu0
    %v1345 = vadd.f32 0.0, %v1344
    %v1346 = vpop.f32.mrb[0].mxu0
    %v1347 = vpop.f32.mrb[0].mxu0
    %v1348 = vadd.f32 0.0, %v1347
    %v1349 = vpop.f32.mrb[0].mxu0
    %1350 = vmatprep.mubr.bf16.mxu0 0
    %1351 = vmatmul.mubr.bf16.gmra.mrb[0].mxu0 %v499
    %v1352 = vpop.f32.mrb[0].mxu0
    %v1353 = vadd.f32 0.0, %v1352
    %v1354 = vpop.f32.mrb[0].mxu0
    %v1355 = vpop.f32.mrb[0].mxu0
    %v1356 = vadd.f32 0.0, %v1355
    %v1357 = vpop.f32.mrb[0].mxu0
    %1358 = vmatprep.mubr.bf16.mxu0 0
    %1359 = vmatmul.mubr.bf16.gmra.mrb[0].mxu0 %v500
    %v1360 = vpop.f32.mrb[0].mxu0
    %v1361 = vadd.f32 0.0, %v1360
    %v1362 = vpop.f32.mrb[0].mxu0
    %v1363 = vpop.f32.mrb[0].mxu0
    %v1364 = vadd.f32 0.0, %v1363
    %v1365 = vpop.f32.mrb[0].mxu0
    %1366 = vmatprep.mubr.bf16.mxu0 0
    %1367 = vmatmul.mubr.bf16.gmra.mrb[0].mxu0 %v501
    %v1368 = vpop.f32.mrb[0].mxu0
    %v1369 = vadd.f32 0.0, %v1368
    %v1370 = vpop.f32.mrb[0].mxu0
    %v1371 = vpop.f32.mrb[0].mxu0
    %v1372 = vadd.f32 0.0, %v1371
    %v1373 = vpop.f32.mrb[0].mxu0
    %1374 = vmatprep.mubr.bf16.mxu0 0
    %1375 = vmatmul.mubr.bf16.gmra.mrb[0].mxu0 %v502
    %v1376 = vpop.f32.mrb[0].mxu0
    %v1377 = vadd.f32 0.0, %v1376
    %v1378 = vpop.f32.mrb[0].mxu0
    %v1379 = vpop.f32.mrb[0].mxu0
    %v1380 = vadd.f32 0.0, %v1379
    %v1381 = vpop.f32.mrb[0].mxu0
    %1382 = vmatprep.mubr.bf16.mxu0 0
    %1383 = vmatmul.mubr.bf16.gmra.mrb[0].mxu0 %v503
    %v1384 = vpop.f32.mrb[0].mxu0
    %v1385 = vadd.f32 0.0, %v1384
    %v1386 = vpop.f32.mrb[0].mxu0
    %v1387 = vpop.f32.mrb[0].mxu0
    %v1388 = vadd.f32 0.0, %v1387
    %v1389 = vpop.f32.mrb[0].mxu0
    %1390 = vmatprep.mubr.bf16.mxu0 0
    %1391 = vmatmul.mubr.bf16.gmra.mrb[0].mxu0 %v504
    %v1392 = vpop.f32.mrb[0].mxu0
    %v1393 = vadd.f32 0.0, %v1392
    %v1394 = vpop.f32.mrb[0].mxu0
    %v1395 = vpop.f32.mrb[0].mxu0
    %v1396 = vadd.f32 0.0, %v1395
    %v1397 = vpop.f32.mrb[0].mxu0
    %1398 = vdwg.mxu0
    %v1399 = vmul.f32 %v1337, %v613
    %v1400 = vmul.f32 %v1340, %v618
    %v1401 = vmul.f32 %v1345, %v623
    %v1402 = vmul.f32 %v1348, %v628
    %v1403 = vmul.f32 %v1353, %v633
    %v1404 = vmul.f32 %v1356, %v638
    %v1405 = vmul.f32 %v1361, %v643
    %v1406 = vmul.f32 %v1364, %v648
    %v1407 = vmul.f32 %v1369, %v653
    %v1408 = vmul.f32 %v1372, %v658
    %v1409 = vmul.f32 %v1377, %v663
    %v1410 = vmul.f32 %v1380, %v668
    %v1411 = vmul.f32 %v1385, %v673
    %v1412 = vmul.f32 %v1388, %v678
    %v1413 = vmul.f32 %v1393, %v683
    %v1414 = vmul.f32 %v1396, %v688
    %s1415 = sld [smem:[#allocation2 + $0x1]]
    %s1416 = sadd.f32 %s1415, 1.0
    %v1417 = vstv %s1416
    %v1418 = vmul.f32 %v1417, %v1093
    %v1419 = vmul.f32 %v1417, %v1094
    %v1420 = vmul.f32 %v1417, %v1095
    %v1421 = vmul.f32 %v1417, %v1096
    %v1422 = vmul.f32 %v1417, %v1097
    %v1423 = vmul.f32 %v1417, %v1098
    %v1424 = vmul.f32 %v1417, %v1099
    %v1425 = vmul.f32 %v1417, %v1100
    %v1426 = vmul.f32 %v1417, %v1101
    %v1427 = vmul.f32 %v1417, %v1102
    %v1428 = vmul.f32 %v1417, %v1103
    %v1429 = vmul.f32 %v1417, %v1104
    %v1430 = vmul.f32 %v1417, %v1105
    %v1431 = vmul.f32 %v1417, %v1106
    %v1432 = vmul.f32 %v1417, %v1107
    %v1433 = vmul.f32 %v1417, %v1108
    %v1434 = vadd.f32 %v1418, %v1399
    %v1435 = vadd.f32 %v1419, %v1400
    %v1436 = vadd.f32 %v1420, %v1401
    %v1437 = vadd.f32 %v1421, %v1402
    %v1438 = vadd.f32 %v1422, %v1403
    %v1439 = vadd.f32 %v1423, %v1404
    %v1440 = vadd.f32 %v1424, %v1405
    %v1441 = vadd.f32 %v1425, %v1406
    %v1442 = vadd.f32 %v1426, %v1407
    %v1443 = vadd.f32 %v1427, %v1408
    %v1444 = vadd.f32 %v1428, %v1409
    %v1445 = vadd.f32 %v1429, %v1410
    %v1446 = vadd.f32 %v1430, %v1411
    %v1447 = vadd.f32 %v1431, %v1412
    %v1448 = vadd.f32 %v1432, %v1413
    %v1449 = vadd.f32 %v1433, %v1414
    %s1450 = scalar_lea.vmem [#allocation6], 128
    %v1451 = vld [vmem:[%s1450] sm:$0xff]
    %v1452 = vld [vmem:[%s1450 + $0x8] sm:$0xff]
    %v1453 = vld [vmem:[%s1450 + $0x10] sm:$0xff]
    %v1454 = vld [vmem:[%s1450 + $0x18] sm:$0xff]
    %v1455 = vld [vmem:[%s1450 + $0x20] sm:$0xff]
    %v1456 = vld [vmem:[%s1450 + $0x28] sm:$0xff]
    %v1457 = vld [vmem:[%s1450 + $0x30] sm:$0xff]
    %v1458 = vld [vmem:[%s1450 + $0x38] sm:$0xff]
    %v1459 = vld [vmem:[%s1450 + $0x40] sm:$0xff]
    %v1460 = vld [vmem:[%s1450 + $0x48] sm:$0xff]
    %v1461 = vld [vmem:[%s1450 + $0x50] sm:$0xff]
    %v1462 = vld [vmem:[%s1450 + $0x58] sm:$0xff]
    %v1463 = vld [vmem:[%s1450 + $0x60] sm:$0xff]
    %v1464 = vld [vmem:[%s1450 + $0x68] sm:$0xff]
    %v1465 = vld [vmem:[%s1450 + $0x70] sm:$0xff]
    %v1466 = vld [vmem:[%s1450 + $0x78] sm:$0xff]
    %s1467 = scalar_lea.vmem %s9, 1
    %v1468 = vld [vmem:[%s1467] sm:$0x1]
    %v1470 = vlaneseq
    %v1471 = vshrl.u32 %v1470, 7
    %v1472 = vsub.s32 0, %v1471
    %v1473 = vrot.slane %v1468, %v1472
    %1475 = vmatprep.subr.mxu0 0.0
    %1476 = vmatpush1.msra.mxu0 %v1451
    %1477 = vmatprep.subr.mxu0 0.0
    %1478 = vmatpush1.msra.mxu0 %v1452
    %1479 = vmatprep.subr.mxu0 0.0
    %1480 = vmatpush1.msra.mxu0 %v1453
    %1481 = vmatprep.subr.mxu0 0.0
    %1482 = vmatpush1.msra.mxu0 %v1454
    %1483 = vmatprep.subr.mxu0 0.0
    %1484 = vmatpush1.msra.mxu0 %v1455
    %1485 = vmatprep.subr.mxu0 0.0
    %1486 = vmatpush1.msra.mxu0 %v1456
    %1487 = vmatprep.subr.mxu0 0.0
    %1488 = vmatpush1.msra.mxu0 %v1457
    %1489 = vmatprep.subr.mxu0 0.0
    %1490 = vmatpush1.msra.mxu0 %v1458
    %1491 = vmatprep.subr.mxu0 0.0
    %1492 = vmatpush1.msra.mxu0 %v1459
    %1493 = vmatprep.subr.mxu0 0.0
    %1494 = vmatpush1.msra.mxu0 %v1460
    %1495 = vmatprep.subr.mxu0 0.0
    %1496 = vmatpush1.msra.mxu0 %v1461
    %1497 = vmatprep.subr.mxu0 0.0
    %1498 = vmatpush1.msra.mxu0 %v1462
    %1499 = vmatprep.subr.mxu0 0.0
    %1500 = vmatpush1.msra.mxu0 %v1463
    %1501 = vmatprep.subr.mxu0 0.0
    %1502 = vmatpush1.msra.mxu0 %v1464
    %1503 = vmatprep.subr.mxu0 0.0
    %1504 = vmatpush1.msra.mxu0 %v1465
    %1505 = vmatprep.subr.mxu0 0.0
    %1506 = vmatpush1.msra.mxu0 %v1466
    %1507 = vmatprep.subr.mxu0 0.0
    %1508 = vmatpush1.msra.mxu0 0.0
    %1509 = vmatprep.subr.mxu0 0.0
    %1510 = vmatpush1.msra.mxu0 0.0
    %1511 = vmatprep.subr.mxu0 0.0
    %1512 = vmatpush1.msra.mxu0 0.0
    %1513 = vmatprep.subr.mxu0 0.0
    %1514 = vmatpush1.msra.mxu0 0.0
    %1515 = vmatprep.subr.mxu0 0.0
    %1516 = vmatpush1.msra.mxu0 0.0
    %1517 = vmatprep.subr.mxu0 0.0
    %1518 = vmatpush1.msra.mxu0 0.0
    %1519 = vmatprep.subr.mxu0 0.0
    %1520 = vmatpush1.msra.mxu0 0.0
    %1521 = vmatprep.subr.mxu0 0.0
    %1522 = vmatpush1.msra.mxu0 0.0
    %1523 = vmatprep.subr.mxu0 0.0
    %1524 = vmatpush1.msra.mxu0 0.0
    %1525 = vmatprep.subr.mxu0 0.0
    %1526 = vmatpush1.msra.mxu0 0.0
    %1527 = vmatprep.subr.mxu0 0.0
    %1528 = vmatpush1.msra.mxu0 0.0
    %1529 = vmatprep.subr.mxu0 0.0
    %1530 = vmatpush1.msra.mxu0 0.0
    %1531 = vmatprep.subr.mxu0 0.0
    %1532 = vmatpush1.msra.mxu0 0.0
    %1533 = vmatprep.subr.mxu0 0.0
    %1534 = vmatpush1.msra.mxu0 0.0
    %1535 = vmatprep.subr.mxu0 0.0
    %1536 = vmatpush1.msra.mxu0 0.0
    %1537 = vmatprep.subr.mxu0 0.0
    %1538 = vmatpush1.msra.mxu0 0.0
    %1539 = vmatprep.mubr.f32.mxu0 0.0
    %1540 = vmatmul.mubr.f32.gmra.mrb[0].mxu0 %v1434
    %v1541 = vpop.f32.mrb[0].mxu0
    %v1542 = vadd.f32 %v1473, %v1541
    %v1543 = vpop.f32.mrb[0].mxu0
    %1544 = vmatprep.mubr.f32.mxu0 0.0
    %1545 = vmatmul.mubr.f32.gmra.mrb[0].mxu0 %v1435
    %v1546 = vpop.f32.mrb[0].mxu0
    %v1547 = vadd.f32 %v1473, %v1546
    %v1548 = vpop.f32.mrb[0].mxu0
    %1549 = vmatprep.mubr.f32.mxu0 0.0
    %1550 = vmatmul.mubr.f32.gmra.mrb[0].mxu0 %v1436
    %v1551 = vpop.f32.mrb[0].mxu0
    %v1552 = vadd.f32 %v1473, %v1551
    %v1553 = vpop.f32.mrb[0].mxu0
    %1554 = vmatprep.mubr.f32.mxu0 0.0
    %1555 = vmatmul.mubr.f32.gmra.mrb[0].mxu0 %v1437
    %v1556 = vpop.f32.mrb[0].mxu0
    %v1557 = vadd.f32 %v1473, %v1556
    %v1558 = vpop.f32.mrb[0].mxu0
    %1559 = vmatprep.mubr.f32.mxu0 0.0
    %1560 = vmatmul.mubr.f32.gmra.mrb[0].mxu0 %v1438
    %v1561 = vpop.f32.mrb[0].mxu0
    %v1562 = vadd.f32 %v1473, %v1561
    %v1563 = vpop.f32.mrb[0].mxu0
    %1564 = vmatprep.mubr.f32.mxu0 0.0
    %1565 = vmatmul.mubr.f32.gmra.mrb[0].mxu0 %v1439
    %v1566 = vpop.f32.mrb[0].mxu0
    %v1567 = vadd.f32 %v1473, %v1566
    %v1568 = vpop.f32.mrb[0].mxu0
    %1569 = vmatprep.mubr.f32.mxu0 0.0
    %1570 = vmatmul.mubr.f32.gmra.mrb[0].mxu0 %v1440
    %v1571 = vpop.f32.mrb[0].mxu0
    %v1572 = vadd.f32 %v1473, %v1571
    %v1573 = vpop.f32.mrb[0].mxu0
    %1574 = vmatprep.mubr.f32.mxu0 0.0
    %1575 = vmatmul.mubr.f32.gmra.mrb[0].mxu0 %v1441
    %v1576 = vpop.f32.mrb[0].mxu0
    %v1577 = vadd.f32 %v1473, %v1576
    %v1578 = vpop.f32.mrb[0].mxu0
    %1579 = vmatprep.mubr.f32.mxu0 0.0
    %1580 = vmatmul.mubr.f32.gmra.mrb[0].mxu0 %v1442
    %v1581 = vpop.f32.mrb[0].mxu0
    %v1582 = vadd.f32 %v1473, %v1581
    %v1583 = vpop.f32.mrb[0].mxu0
    %1584 = vmatprep.mubr.f32.mxu0 0.0
    %1585 = vmatmul.mubr.f32.gmra.mrb[0].mxu0 %v1443
    %v1586 = vpop.f32.mrb[0].mxu0
    %v1587 = vadd.f32 %v1473, %v1586
    %v1588 = vpop.f32.mrb[0].mxu0
    %1589 = vmatprep.mubr.f32.mxu0 0.0
    %1590 = vmatmul.mubr.f32.gmra.mrb[0].mxu0 %v1444
    %v1591 = vpop.f32.mrb[0].mxu0
    %v1592 = vadd.f32 %v1473, %v1591
    %v1593 = vpop.f32.mrb[0].mxu0
    %1594 = vmatprep.mubr.f32.mxu0 0.0
    %1595 = vmatmul.mubr.f32.gmra.mrb[0].mxu0 %v1445
    %v1596 = vpop.f32.mrb[0].mxu0
    %v1597 = vadd.f32 %v1473, %v1596
    %v1598 = vpop.f32.mrb[0].mxu0
    %1599 = vmatprep.mubr.f32.mxu0 0.0
    %1600 = vmatmul.mubr.f32.gmra.mrb[0].mxu0 %v1446
    %v1601 = vpop.f32.mrb[0].mxu0
    %v1602 = vadd.f32 %v1473, %v1601
    %v1603 = vpop.f32.mrb[0].mxu0
    %1604 = vmatprep.mubr.f32.mxu0 0.0
    %1605 = vmatmul.mubr.f32.gmra.mrb[0].mxu0 %v1447
    %v1606 = vpop.f32.mrb[0].mxu0
    %v1607 = vadd.f32 %v1473, %v1606
    %v1608 = vpop.f32.mrb[0].mxu0
    %1609 = vmatprep.mubr.f32.mxu0 0.0
    %1610 = vmatmul.mubr.f32.gmra.mrb[0].mxu0 %v1448
    %v1611 = vpop.f32.mrb[0].mxu0
    %v1612 = vadd.f32 %v1473, %v1611
    %v1613 = vpop.f32.mrb[0].mxu0
    %1614 = vmatprep.mubr.f32.mxu0 0.0
    %1615 = vmatmul.mubr.f32.gmra.mrb[0].mxu0 %v1449
    %v1616 = vpop.f32.mrb[0].mxu0
    %v1617 = vadd.f32 %v1473, %v1616
    %v1618 = vpop.f32.mrb[0].mxu0
    %1619 = vdwg.mxu0
    %v1620 = vmax.f32 %v1542, 0.0
    %v1621 = vmax.f32 %v1547, 0.0
    %v1622 = vmax.f32 %v1552, 0.0
    %v1623 = vmax.f32 %v1557, 0.0
    %v1624 = vmax.f32 %v1562, 0.0
    %v1625 = vmax.f32 %v1567, 0.0
    %v1626 = vmax.f32 %v1572, 0.0
    %v1627 = vmax.f32 %v1577, 0.0
    %v1628 = vmax.f32 %v1582, 0.0
    %v1629 = vmax.f32 %v1587, 0.0
    %v1630 = vmax.f32 %v1592, 0.0
    %v1631 = vmax.f32 %v1597, 0.0
    %v1632 = vmax.f32 %v1602, 0.0
    %v1633 = vmax.f32 %v1607, 0.0
    %v1634 = vmax.f32 %v1612, 0.0
    %v1635 = vmax.f32 %v1617, 0.0
    %s1636 = scalar_lea.vmem [#allocation7], 128
    %v1637 = vld [vmem:[%s1636] sm:$0xff]
    %v1638 = vld [vmem:[%s1636 + $0x8] sm:$0xff]
    %v1639 = vld [vmem:[%s1636 + $0x10] sm:$0xff]
    %v1640 = vld [vmem:[%s1636 + $0x18] sm:$0xff]
    %v1641 = vld [vmem:[%s1636 + $0x20] sm:$0xff]
    %v1642 = vld [vmem:[%s1636 + $0x28] sm:$0xff]
    %v1643 = vld [vmem:[%s1636 + $0x30] sm:$0xff]
    %v1644 = vld [vmem:[%s1636 + $0x38] sm:$0xff]
    %v1645 = vld [vmem:[%s1636 + $0x40] sm:$0xff]
    %v1646 = vld [vmem:[%s1636 + $0x48] sm:$0xff]
    %v1647 = vld [vmem:[%s1636 + $0x50] sm:$0xff]
    %v1648 = vld [vmem:[%s1636 + $0x58] sm:$0xff]
    %v1649 = vld [vmem:[%s1636 + $0x60] sm:$0xff]
    %v1650 = vld [vmem:[%s1636 + $0x68] sm:$0xff]
    %v1651 = vld [vmem:[%s1636 + $0x70] sm:$0xff]
    %v1652 = vld [vmem:[%s1636 + $0x78] sm:$0xff]
    %s1653 = scalar_lea.vmem %s11, 1
    %v1654 = vld [vmem:[%s1653] sm:$0x1]
    %v1656 = vlaneseq
    %v1657 = vshrl.u32 %v1656, 7
    %v1658 = vsub.s32 0, %v1657
    %v1659 = vrot.slane %v1654, %v1658
    %1661 = vmatprep.subr.mxu0 0.0
    %1662 = vmatpush1.msra.mxu0 %v1637
    %1663 = vmatprep.subr.mxu0 0.0
    %1664 = vmatpush1.msra.mxu0 %v1638
    %1665 = vmatprep.subr.mxu0 0.0
    %1666 = vmatpush1.msra.mxu0 %v1639
    %1667 = vmatprep.subr.mxu0 0.0
    %1668 = vmatpush1.msra.mxu0 %v1640
    %1669 = vmatprep.subr.mxu0 0.0
    %1670 = vmatpush1.msra.mxu0 %v1641
    %1671 = vmatprep.subr.mxu0 0.0
    %1672 = vmatpush1.msra.mxu0 %v1642
    %1673 = vmatprep.subr.mxu0 0.0
    %1674 = vmatpush1.msra.mxu0 %v1643
    %1675 = vmatprep.subr.mxu0 0.0
    %1676 = vmatpush1.msra.mxu0 %v1644
    %1677 = vmatprep.subr.mxu0 0.0
    %1678 = vmatpush1.msra.mxu0 %v1645
    %1679 = vmatprep.subr.mxu0 0.0
    %1680 = vmatpush1.msra.mxu0 %v1646
    %1681 = vmatprep.subr.mxu0 0.0
    %1682 = vmatpush1.msra.mxu0 %v1647
    %1683 = vmatprep.subr.mxu0 0.0
    %1684 = vmatpush1.msra.mxu0 %v1648
    %1685 = vmatprep.subr.mxu0 0.0
    %1686 = vmatpush1.msra.mxu0 %v1649
    %1687 = vmatprep.subr.mxu0 0.0
    %1688 = vmatpush1.msra.mxu0 %v1650
    %1689 = vmatprep.subr.mxu0 0.0
    %1690 = vmatpush1.msra.mxu0 %v1651
    %1691 = vmatprep.subr.mxu0 0.0
    %1692 = vmatpush1.msra.mxu0 %v1652
    %1693 = vmatprep.subr.mxu0 0.0
    %1694 = vmatpush1.msra.mxu0 0.0
    %1695 = vmatprep.subr.mxu0 0.0
    %1696 = vmatpush1.msra.mxu0 0.0
    %1697 = vmatprep.subr.mxu0 0.0
    %1698 = vmatpush1.msra.mxu0 0.0
    %1699 = vmatprep.subr.mxu0 0.0
    %1700 = vmatpush1.msra.mxu0 0.0
    %1701 = vmatprep.subr.mxu0 0.0
    %1702 = vmatpush1.msra.mxu0 0.0
    %1703 = vmatprep.subr.mxu0 0.0
    %1704 = vmatpush1.msra.mxu0 0.0
    %1705 = vmatprep.subr.mxu0 0.0
    %1706 = vmatpush1.msra.mxu0 0.0
    %1707 = vmatprep.subr.mxu0 0.0
    %1708 = vmatpush1.msra.mxu0 0.0
    %1709 = vmatprep.subr.mxu0 0.0
    %1710 = vmatpush1.msra.mxu0 0.0
    %1711 = vmatprep.subr.mxu0 0.0
    %1712 = vmatpush1.msra.mxu0 0.0
    %1713 = vmatprep.subr.mxu0 0.0
    %1714 = vmatpush1.msra.mxu0 0.0
    %1715 = vmatprep.subr.mxu0 0.0
    %1716 = vmatpush1.msra.mxu0 0.0
    %1717 = vmatprep.subr.mxu0 0.0
    %1718 = vmatpush1.msra.mxu0 0.0
    %1719 = vmatprep.subr.mxu0 0.0
    %1720 = vmatpush1.msra.mxu0 0.0
    %1721 = vmatprep.subr.mxu0 0.0
    %1722 = vmatpush1.msra.mxu0 0.0
    %1723 = vmatprep.subr.mxu0 0.0
    %1724 = vmatpush1.msra.mxu0 0.0
    %1725 = vmatprep.mubr.f32.mxu0 0.0
    %1726 = vmatmul.mubr.f32.gmra.mrb[0].mxu0 %v1620
    %v1727 = vpop.f32.mrb[0].mxu0
    %v1728 = vadd.f32 %v1659, %v1727
    %v1729 = vpop.f32.mrb[0].mxu0
    %1730 = vmatprep.mubr.f32.mxu0 0.0
    %1731 = vmatmul.mubr.f32.gmra.mrb[0].mxu0 %v1621
    %v1732 = vpop.f32.mrb[0].mxu0
    %v1733 = vadd.f32 %v1659, %v1732
    %v1734 = vpop.f32.mrb[0].mxu0
    %1735 = vmatprep.mubr.f32.mxu0 0.0
    %1736 = vmatmul.mubr.f32.gmra.mrb[0].mxu0 %v1622
    %v1737 = vpop.f32.mrb[0].mxu0
    %v1738 = vadd.f32 %v1659, %v1737
    %v1739 = vpop.f32.mrb[0].mxu0
    %1740 = vmatprep.mubr.f32.mxu0 0.0
    %1741 = vmatmul.mubr.f32.gmra.mrb[0].mxu0 %v1623
    %v1742 = vpop.f32.mrb[0].mxu0
    %v1743 = vadd.f32 %v1659, %v1742
    %v1744 = vpop.f32.mrb[0].mxu0
    %1745 = vmatprep.mubr.f32.mxu0 0.0
    %1746 = vmatmul.mubr.f32.gmra.mrb[0].mxu0 %v1624
    %v1747 = vpop.f32.mrb[0].mxu0
    %v1748 = vadd.f32 %v1659, %v1747
    %v1749 = vpop.f32.mrb[0].mxu0
    %1750 = vmatprep.mubr.f32.mxu0 0.0
    %1751 = vmatmul.mubr.f32.gmra.mrb[0].mxu0 %v1625
    %v1752 = vpop.f32.mrb[0].mxu0
    %v1753 = vadd.f32 %v1659, %v1752
    %v1754 = vpop.f32.mrb[0].mxu0
    %1755 = vmatprep.mubr.f32.mxu0 0.0
    %1756 = vmatmul.mubr.f32.gmra.mrb[0].mxu0 %v1626
    %v1757 = vpop.f32.mrb[0].mxu0
    %v1758 = vadd.f32 %v1659, %v1757
    %v1759 = vpop.f32.mrb[0].mxu0
    %1760 = vmatprep.mubr.f32.mxu0 0.0
    %1761 = vmatmul.mubr.f32.gmra.mrb[0].mxu0 %v1627
    %v1762 = vpop.f32.mrb[0].mxu0
    %v1763 = vadd.f32 %v1659, %v1762
    %v1764 = vpop.f32.mrb[0].mxu0
    %1765 = vmatprep.mubr.f32.mxu0 0.0
    %1766 = vmatmul.mubr.f32.gmra.mrb[0].mxu0 %v1628
    %v1767 = vpop.f32.mrb[0].mxu0
    %v1768 = vadd.f32 %v1659, %v1767
    %v1769 = vpop.f32.mrb[0].mxu0
    %1770 = vmatprep.mubr.f32.mxu0 0.0
    %1771 = vmatmul.mubr.f32.gmra.mrb[0].mxu0 %v1629
    %v1772 = vpop.f32.mrb[0].mxu0
    %v1773 = vadd.f32 %v1659, %v1772
    %v1774 = vpop.f32.mrb[0].mxu0
    %1775 = vmatprep.mubr.f32.mxu0 0.0
    %1776 = vmatmul.mubr.f32.gmra.mrb[0].mxu0 %v1630
    %v1777 = vpop.f32.mrb[0].mxu0
    %v1778 = vadd.f32 %v1659, %v1777
    %v1779 = vpop.f32.mrb[0].mxu0
    %1780 = vmatprep.mubr.f32.mxu0 0.0
    %1781 = vmatmul.mubr.f32.gmra.mrb[0].mxu0 %v1631
    %v1782 = vpop.f32.mrb[0].mxu0
    %v1783 = vadd.f32 %v1659, %v1782
    %v1784 = vpop.f32.mrb[0].mxu0
    %1785 = vmatprep.mubr.f32.mxu0 0.0
    %1786 = vmatmul.mubr.f32.gmra.mrb[0].mxu0 %v1632
    %v1787 = vpop.f32.mrb[0].mxu0
    %v1788 = vadd.f32 %v1659, %v1787
    %v1789 = vpop.f32.mrb[0].mxu0
    %1790 = vmatprep.mubr.f32.mxu0 0.0
    %1791 = vmatmul.mubr.f32.gmra.mrb[0].mxu0 %v1633
    %v1792 = vpop.f32.mrb[0].mxu0
    %v1793 = vadd.f32 %v1659, %v1792
    %v1794 = vpop.f32.mrb[0].mxu0
    %1795 = vmatprep.mubr.f32.mxu0 0.0
    %1796 = vmatmul.mubr.f32.gmra.mrb[0].mxu0 %v1634
    %v1797 = vpop.f32.mrb[0].mxu0
    %v1798 = vadd.f32 %v1659, %v1797
    %v1799 = vpop.f32.mrb[0].mxu0
    %1800 = vmatprep.mubr.f32.mxu0 0.0
    %1801 = vmatmul.mubr.f32.gmra.mrb[0].mxu0 %v1635
    %v1802 = vpop.f32.mrb[0].mxu0
    %v1803 = vadd.f32 %v1659, %v1802
    %v1804 = vpop.f32.mrb[0].mxu0
    %1805 = vdwg.mxu0
    %v1806 = vmax.f32 %v1728, 0.0
    %v1807 = vmax.f32 %v1733, 0.0
    %v1808 = vmax.f32 %v1738, 0.0
    %v1809 = vmax.f32 %v1743, 0.0
    %v1810 = vmax.f32 %v1748, 0.0
    %v1811 = vmax.f32 %v1753, 0.0
    %v1812 = vmax.f32 %v1758, 0.0
    %v1813 = vmax.f32 %v1763, 0.0
    %v1814 = vmax.f32 %v1768, 0.0
    %v1815 = vmax.f32 %v1773, 0.0
    %v1816 = vmax.f32 %v1778, 0.0
    %v1817 = vmax.f32 %v1783, 0.0
    %v1818 = vmax.f32 %v1788, 0.0
    %v1819 = vmax.f32 %v1793, 0.0
    %v1820 = vmax.f32 %v1798, 0.0
    %v1821 = vmax.f32 %v1803, 0.0
    %1822 = vst [vmem:[#allocation9 + $0x8] sm:$0xff] %v1806
    %1823 = vst [vmem:[#allocation9 + $0x28] sm:$0xff] %v1807
    %1824 = vst [vmem:[#allocation9 + $0x48] sm:$0xff] %v1808
    %1825 = vst [vmem:[#allocation9 + $0x68] sm:$0xff] %v1809
    %1826 = vst [vmem:[#allocation9 + $0x88] sm:$0xff] %v1810
    %1827 = vst [vmem:[#allocation9 + $0xa8] sm:$0xff] %v1811
    %1828 = vst [vmem:[#allocation9 + $0xc8] sm:$0xff] %v1812
    %1829 = vst [vmem:[#allocation9 + $0xe8] sm:$0xff] %v1813
    %1830 = vst [vmem:[#allocation9 + $0x108] sm:$0xff] %v1814
    %1831 = vst [vmem:[#allocation9 + $0x128] sm:$0xff] %v1815
    %1832 = vst [vmem:[#allocation9 + $0x148] sm:$0xff] %v1816
    %1833 = vst [vmem:[#allocation9 + $0x168] sm:$0xff] %v1817
    %1834 = vst [vmem:[#allocation9 + $0x188] sm:$0xff] %v1818
    %1835 = vst [vmem:[#allocation9 + $0x1a8] sm:$0xff] %v1819
    %1836 = vst [vmem:[#allocation9 + $0x1c8] sm:$0xff] %v1820
    %1837 = vst [vmem:[#allocation9 + $0x1e8] sm:$0xff] %v1821
    %s1838 = scalar_lea.vmem %s6, 2
    %v1839 = vld [vmem:[%s1838] sm:$0x1]
    %v1841 = vlaneseq
    %v1842 = vshrl.u32 %v1841, 7
    %v1843 = vsub.s32 0, %v1842
    %v1844 = vrot.slane %v1839, %v1843
    %v1846 = vmul.f32 %v166, %v1844
    %v1847 = vmul.f32 %v171, %v1844
    %v1848 = vmul.f32 %v176, %v1844
    %v1849 = vmul.f32 %v181, %v1844
    %v1850 = vmul.f32 %v186, %v1844
    %v1851 = vmul.f32 %v191, %v1844
    %v1852 = vmul.f32 %v196, %v1844
    %v1853 = vmul.f32 %v201, %v1844
    %v1854 = vmul.f32 %v206, %v1844
    %v1855 = vmul.f32 %v211, %v1844
    %v1856 = vmul.f32 %v216, %v1844
    %v1857 = vmul.f32 %v221, %v1844
    %v1858 = vmul.f32 %v226, %v1844
    %v1859 = vmul.f32 %v231, %v1844
    %v1860 = vmul.f32 %v236, %v1844
    %v1861 = vmul.f32 %v241, %v1844
    %s1862 = scalar_lea.vmem %s7, 2
    %v1863 = vld [vmem:[%s1862] sm:$0x1]
    %v1865 = vlaneseq
    %v1866 = vshrl.u32 %v1865, 7
    %v1867 = vsub.s32 0, %v1866
    %v1868 = vrot.slane %v1863, %v1867
    %v1870 = vadd.f32 %v1846, %v1868
    %v1871 = vadd.f32 %v1847, %v1868
    %v1872 = vadd.f32 %v1848, %v1868
    %v1873 = vadd.f32 %v1849, %v1868
    %v1874 = vadd.f32 %v1850, %v1868
    %v1875 = vadd.f32 %v1851, %v1868
    %v1876 = vadd.f32 %v1852, %v1868
    %v1877 = vadd.f32 %v1853, %v1868
    %v1878 = vadd.f32 %v1854, %v1868
    %v1879 = vadd.f32 %v1855, %v1868
    %v1880 = vadd.f32 %v1856, %v1868
    %v1881 = vadd.f32 %v1857, %v1868
    %v1882 = vadd.f32 %v1858, %v1868
    %v1883 = vadd.f32 %v1859, %v1868
    %v1884 = vadd.f32 %v1860, %v1868
    %v1885 = vadd.f32 %v1861, %v1868
    %v1886 = vpack.c.bf16 %v1807, %v1806
    %v1887 = vpack.c.bf16 %v1809, %v1808
    %v1888 = vpack.c.bf16 %v1811, %v1810
    %v1889 = vpack.c.bf16 %v1813, %v1812
    %v1890 = vpack.c.bf16 %v1815, %v1814
    %v1891 = vpack.c.bf16 %v1817, %v1816
    %v1892 = vpack.c.bf16 %v1819, %v1818
    %v1893 = vpack.c.bf16 %v1821, %v1820
    %1894 = vmatprep.subr.bf16.mxu0 0
    %1895 = vmatpush1.bf16.msra.mxu0 %v1886
    %1896 = vmatprep.subr.bf16.mxu0 0
    %1897 = vmatpush1.bf16.msra.mxu0 %v1887
    %1898 = vmatprep.subr.bf16.mxu0 0
    %1899 = vmatpush1.bf16.msra.mxu0 %v1888
    %1900 = vmatprep.subr.bf16.mxu0 0
    %1901 = vmatpush1.bf16.msra.mxu0 %v1889
    %1902 = vmatprep.subr.bf16.mxu0 0
    %1903 = vmatpush1.bf16.msra.mxu0 %v1890
    %1904 = vmatprep.subr.bf16.mxu0 0
    %1905 = vmatpush1.bf16.msra.mxu0 %v1891
    %1906 = vmatprep.subr.bf16.mxu0 0
    %1907 = vmatpush1.bf16.msra.mxu0 %v1892
    %1908 = vmatprep.subr.bf16.mxu0 0
    %1909 = vmatpush1.bf16.msra.mxu0 %v1893
    %1910 = vmatprep.subr.bf16.mxu0 0
    %1911 = vmatpush1.bf16.msra.mxu0 0
    %1912 = vmatprep.subr.bf16.mxu0 0
    %1913 = vmatpush1.bf16.msra.mxu0 0
    %1914 = vmatprep.subr.bf16.mxu0 0
    %1915 = vmatpush1.bf16.msra.mxu0 0
    %1916 = vmatprep.subr.bf16.mxu0 0
    %1917 = vmatpush1.bf16.msra.mxu0 0
    %1918 = vmatprep.subr.bf16.mxu0 0
    %1919 = vmatpush1.bf16.msra.mxu0 0
    %1920 = vmatprep.subr.bf16.mxu0 0
    %1921 = vmatpush1.bf16.msra.mxu0 0
    %1922 = vmatprep.subr.bf16.mxu0 0
    %1923 = vmatpush1.bf16.msra.mxu0 0
    %1924 = vmatprep.subr.bf16.mxu0 0
    %1925 = vmatpush1.bf16.msra.mxu0 0
    %1926 = vmatprep.mubr.bf16.mxu0 0
    %1927 = vmatmul.mubr.bf16.gmra.mrb[0].mxu0 %v328
    %v1928 = vpop.f32.mrb[0].mxu0
    %v1929 = vadd.f32 %v1870, %v1928
    %v1930 = vpop.f32.mrb[0].mxu0
    %v1931 = vpop.f32.mrb[0].mxu0
    %v1932 = vadd.f32 %v1871, %v1931
    %v1933 = vpop.f32.mrb[0].mxu0
    %1934 = vmatprep.mubr.bf16.mxu0 0
    %1935 = vmatmul.mubr.bf16.gmra.mrb[0].mxu0 %v329
    %v1936 = vpop.f32.mrb[0].mxu0
    %v1937 = vadd.f32 %v1872, %v1936
    %v1938 = vpop.f32.mrb[0].mxu0
    %v1939 = vpop.f32.mrb[0].mxu0
    %v1940 = vadd.f32 %v1873, %v1939
    %v1941 = vpop.f32.mrb[0].mxu0
    %1942 = vmatprep.mubr.bf16.mxu0 0
    %1943 = vmatmul.mubr.bf16.gmra.mrb[0].mxu0 %v330
    %v1944 = vpop.f32.mrb[0].mxu0
    %v1945 = vadd.f32 %v1874, %v1944
    %v1946 = vpop.f32.mrb[0].mxu0
    %v1947 = vpop.f32.mrb[0].mxu0
    %v1948 = vadd.f32 %v1875, %v1947
    %v1949 = vpop.f32.mrb[0].mxu0
    %1950 = vmatprep.mubr.bf16.mxu0 0
    %1951 = vmatmul.mubr.bf16.gmra.mrb[0].mxu0 %v331
    %v1952 = vpop.f32.mrb[0].mxu0
    %v1953 = vadd.f32 %v1876, %v1952
    %v1954 = vpop.f32.mrb[0].mxu0
    %v1955 = vpop.f32.mrb[0].mxu0
    %v1956 = vadd.f32 %v1877, %v1955
    %v1957 = vpop.f32.mrb[0].mxu0
    %1958 = vmatprep.mubr.bf16.mxu0 0
    %1959 = vmatmul.mubr.bf16.gmra.mrb[0].mxu0 %v332
    %v1960 = vpop.f32.mrb[0].mxu0
    %v1961 = vadd.f32 %v1878, %v1960
    %v1962 = vpop.f32.mrb[0].mxu0
    %v1963 = vpop.f32.mrb[0].mxu0
    %v1964 = vadd.f32 %v1879, %v1963
    %v1965 = vpop.f32.mrb[0].mxu0
    %1966 = vmatprep.mubr.bf16.mxu0 0
    %1967 = vmatmul.mubr.bf16.gmra.mrb[0].mxu0 %v333
    %v1968 = vpop.f32.mrb[0].mxu0
    %v1969 = vadd.f32 %v1880, %v1968
    %v1970 = vpop.f32.mrb[0].mxu0
    %v1971 = vpop.f32.mrb[0].mxu0
    %v1972 = vadd.f32 %v1881, %v1971
    %v1973 = vpop.f32.mrb[0].mxu0
    %1974 = vmatprep.mubr.bf16.mxu0 0
    %1975 = vmatmul.mubr.bf16.gmra.mrb[0].mxu0 %v334
    %v1976 = vpop.f32.mrb[0].mxu0
    %v1977 = vadd.f32 %v1882, %v1976
    %v1978 = vpop.f32.mrb[0].mxu0
    %v1979 = vpop.f32.mrb[0].mxu0
    %v1980 = vadd.f32 %v1883, %v1979
    %v1981 = vpop.f32.mrb[0].mxu0
    %1982 = vmatprep.mubr.bf16.mxu0 0
    %1983 = vmatmul.mubr.bf16.gmra.mrb[0].mxu0 %v335
    %v1984 = vpop.f32.mrb[0].mxu0
    %v1985 = vadd.f32 %v1884, %v1984
    %v1986 = vpop.f32.mrb[0].mxu0
    %v1987 = vpop.f32.mrb[0].mxu0
    %v1988 = vadd.f32 %v1885, %v1987
    %v1989 = vpop.f32.mrb[0].mxu0
    %1990 = vdwg.mxu0
    %v1991 = vmax.f32 %v1929, 0.0
    %v1992 = vmax.f32 %v1932, 0.0
    %v1993 = vmax.f32 %v1937, 0.0
    %v1994 = vmax.f32 %v1940, 0.0
    %v1995 = vmax.f32 %v1945, 0.0
    %v1996 = vmax.f32 %v1948, 0.0
    %v1997 = vmax.f32 %v1953, 0.0
    %v1998 = vmax.f32 %v1956, 0.0
    %v1999 = vmax.f32 %v1961, 0.0
    %v2000 = vmax.f32 %v1964, 0.0
    %v2001 = vmax.f32 %v1969, 0.0
    %v2002 = vmax.f32 %v1972, 0.0
    %v2003 = vmax.f32 %v1977, 0.0
    %v2004 = vmax.f32 %v1980, 0.0
    %v2005 = vmax.f32 %v1985, 0.0
    %v2006 = vmax.f32 %v1988, 0.0
    %v2007 = vpack.c.bf16 %v1992, %v1991
    %v2008 = vpack.c.bf16 %v1994, %v1993
    %v2009 = vpack.c.bf16 %v1996, %v1995
    %v2010 = vpack.c.bf16 %v1998, %v1997
    %v2011 = vpack.c.bf16 %v2000, %v1999
    %v2012 = vpack.c.bf16 %v2002, %v2001
    %v2013 = vpack.c.bf16 %v2004, %v2003
    %v2014 = vpack.c.bf16 %v2006, %v2005
    %2015 = vmatprep.subr.bf16.mxu0 0
    %2016 = vmatpush1.bf16.msra.mxu0 %v2007
    %2017 = vmatprep.subr.bf16.mxu0 0
    %2018 = vmatpush1.bf16.msra.mxu0 %v2008
    %2019 = vmatprep.subr.bf16.mxu0 0
    %2020 = vmatpush1.bf16.msra.mxu0 %v2009
    %2021 = vmatprep.subr.bf16.mxu0 0
    %2022 = vmatpush1.bf16.msra.mxu0 %v2010
    %2023 = vmatprep.subr.bf16.mxu0 0
    %2024 = vmatpush1.bf16.msra.mxu0 %v2011
    %2025 = vmatprep.subr.bf16.mxu0 0
    %2026 = vmatpush1.bf16.msra.mxu0 %v2012
    %2027 = vmatprep.subr.bf16.mxu0 0
    %2028 = vmatpush1.bf16.msra.mxu0 %v2013
    %2029 = vmatprep.subr.bf16.mxu0 0
    %2030 = vmatpush1.bf16.msra.mxu0 %v2014
    %2031 = vmatprep.subr.bf16.mxu0 0
    %2032 = vmatpush1.bf16.msra.mxu0 0
    %2033 = vmatprep.subr.bf16.mxu0 0
    %2034 = vmatpush1.bf16.msra.mxu0 0
    %2035 = vmatprep.subr.bf16.mxu0 0
    %2036 = vmatpush1.bf16.msra.mxu0 0
    %2037 = vmatprep.subr.bf16.mxu0 0
    %2038 = vmatpush1.bf16.msra.mxu0 0
    %2039 = vmatprep.subr.bf16.mxu0 0
    %2040 = vmatpush1.bf16.msra.mxu0 0
    %2041 = vmatprep.subr.bf16.mxu0 0
    %2042 = vmatpush1.bf16.msra.mxu0 0
    %2043 = vmatprep.subr.bf16.mxu0 0
    %2044 = vmatpush1.bf16.msra.mxu0 0
    %2045 = vmatprep.subr.bf16.mxu0 0
    %2046 = vmatpush1.bf16.msra.mxu0 0
    %2047 = vmatprep.mubr.bf16.mxu0 0
    %2048 = vmatmul.mubr.bf16.gmra.mrb[0].mxu0 %v497
    %v2049 = vpop.f32.mrb[0].mxu0
    %v2050 = vadd.f32 0.0, %v2049
    %v2051 = vpop.f32.mrb[0].mxu0
    %v2052 = vpop.f32.mrb[0].mxu0
    %v2053 = vadd.f32 0.0, %v2052
    %v2054 = vpop.f32.mrb[0].mxu0
    %2055 = vmatprep.mubr.bf16.mxu0 0
    %2056 = vmatmul.mubr.bf16.gmra.mrb[0].mxu0 %v498
    %v2057 = vpop.f32.mrb[0].mxu0
    %v2058 = vadd.f32 0.0, %v2057
    %v2059 = vpop.f32.mrb[0].mxu0
    %v2060 = vpop.f32.mrb[0].mxu0
    %v2061 = vadd.f32 0.0, %v2060
    %v2062 = vpop.f32.mrb[0].mxu0
    %2063 = vmatprep.mubr.bf16.mxu0 0
    %2064 = vmatmul.mubr.bf16.gmra.mrb[0].mxu0 %v499
    %v2065 = vpop.f32.mrb[0].mxu0
    %v2066 = vadd.f32 0.0, %v2065
    %v2067 = vpop.f32.mrb[0].mxu0
    %v2068 = vpop.f32.mrb[0].mxu0
    %v2069 = vadd.f32 0.0, %v2068
    %v2070 = vpop.f32.mrb[0].mxu0
    %2071 = vmatprep.mubr.bf16.mxu0 0
    %2072 = vmatmul.mubr.bf16.gmra.mrb[0].mxu0 %v500
    %v2073 = vpop.f32.mrb[0].mxu0
    %v2074 = vadd.f32 0.0, %v2073
    %v2075 = vpop.f32.mrb[0].mxu0
    %v2076 = vpop.f32.mrb[0].mxu0
    %v2077 = vadd.f32 0.0, %v2076
    %v2078 = vpop.f32.mrb[0].mxu0
    %2079 = vmatprep.mubr.bf16.mxu0 0
    %2080 = vmatmul.mubr.bf16.gmra.mrb[0].mxu0 %v501
    %v2081 = vpop.f32.mrb[0].mxu0
    %v2082 = vadd.f32 0.0, %v2081
    %v2083 = vpop.f32.mrb[0].mxu0
    %v2084 = vpop.f32.mrb[0].mxu0
    %v2085 = vadd.f32 0.0, %v2084
    %v2086 = vpop.f32.mrb[0].mxu0
    %2087 = vmatprep.mubr.bf16.mxu0 0
    %2088 = vmatmul.mubr.bf16.gmra.mrb[0].mxu0 %v502
    %v2089 = vpop.f32.mrb[0].mxu0
    %v2090 = vadd.f32 0.0, %v2089
    %v2091 = vpop.f32.mrb[0].mxu0
    %v2092 = vpop.f32.mrb[0].mxu0
    %v2093 = vadd.f32 0.0, %v2092
    %v2094 = vpop.f32.mrb[0].mxu0
    %2095 = vmatprep.mubr.bf16.mxu0 0
    %2096 = vmatmul.mubr.bf16.gmra.mrb[0].mxu0 %v503
    %v2097 = vpop.f32.mrb[0].mxu0
    %v2098 = vadd.f32 0.0, %v2097
    %v2099 = vpop.f32.mrb[0].mxu0
    %v2100 = vpop.f32.mrb[0].mxu0
    %v2101 = vadd.f32 0.0, %v2100
    %v2102 = vpop.f32.mrb[0].mxu0
    %2103 = vmatprep.mubr.bf16.mxu0 0
    %2104 = vmatmul.mubr.bf16.gmra.mrb[0].mxu0 %v504
    %v2105 = vpop.f32.mrb[0].mxu0
    %v2106 = vadd.f32 0.0, %v2105
    %v2107 = vpop.f32.mrb[0].mxu0
    %v2108 = vpop.f32.mrb[0].mxu0
    %v2109 = vadd.f32 0.0, %v2108
    %v2110 = vpop.f32.mrb[0].mxu0
    %2111 = vdwg.mxu0
    %v2112 = vmul.f32 %v2050, %v613
    %v2113 = vmul.f32 %v2053, %v618
    %v2114 = vmul.f32 %v2058, %v623
    %v2115 = vmul.f32 %v2061, %v628
    %v2116 = vmul.f32 %v2066, %v633
    %v2117 = vmul.f32 %v2069, %v638
    %v2118 = vmul.f32 %v2074, %v643
    %v2119 = vmul.f32 %v2077, %v648
    %v2120 = vmul.f32 %v2082, %v653
    %v2121 = vmul.f32 %v2085, %v658
    %v2122 = vmul.f32 %v2090, %v663
    %v2123 = vmul.f32 %v2093, %v668
    %v2124 = vmul.f32 %v2098, %v673
    %v2125 = vmul.f32 %v2101, %v678
    %v2126 = vmul.f32 %v2106, %v683
    %v2127 = vmul.f32 %v2109, %v688
    %s2128 = sld [smem:[#allocation2 + $0x2]]
    %s2129 = sadd.f32 %s2128, 1.0
    %v2130 = vstv %s2129
    %v2131 = vmul.f32 %v2130, %v1806
    %v2132 = vmul.f32 %v2130, %v1807
    %v2133 = vmul.f32 %v2130, %v1808
    %v2134 = vmul.f32 %v2130, %v1809
    %v2135 = vmul.f32 %v2130, %v1810
    %v2136 = vmul.f32 %v2130, %v1811
    %v2137 = vmul.f32 %v2130, %v1812
    %v2138 = vmul.f32 %v2130, %v1813
    %v2139 = vmul.f32 %v2130, %v1814
    %v2140 = vmul.f32 %v2130, %v1815
    %v2141 = vmul.f32 %v2130, %v1816
    %v2142 = vmul.f32 %v2130, %v1817
    %v2143 = vmul.f32 %v2130, %v1818
    %v2144 = vmul.f32 %v2130, %v1819
    %v2145 = vmul.f32 %v2130, %v1820
    %v2146 = vmul.f32 %v2130, %v1821
    %v2147 = vadd.f32 %v2131, %v2112
    %v2148 = vadd.f32 %v2132, %v2113
    %v2149 = vadd.f32 %v2133, %v2114
    %v2150 = vadd.f32 %v2134, %v2115
    %v2151 = vadd.f32 %v2135, %v2116
    %v2152 = vadd.f32 %v2136, %v2117
    %v2153 = vadd.f32 %v2137, %v2118
    %v2154 = vadd.f32 %v2138, %v2119
    %v2155 = vadd.f32 %v2139, %v2120
    %v2156 = vadd.f32 %v2140, %v2121
    %v2157 = vadd.f32 %v2141, %v2122
    %v2158 = vadd.f32 %v2142, %v2123
    %v2159 = vadd.f32 %v2143, %v2124
    %v2160 = vadd.f32 %v2144, %v2125
    %v2161 = vadd.f32 %v2145, %v2126
    %v2162 = vadd.f32 %v2146, %v2127
    %s2163 = scalar_lea.vmem [#allocation6], 256
    %v2164 = vld [vmem:[%s2163] sm:$0xff]
    %v2165 = vld [vmem:[%s2163 + $0x8] sm:$0xff]
    %v2166 = vld [vmem:[%s2163 + $0x10] sm:$0xff]
    %v2167 = vld [vmem:[%s2163 + $0x18] sm:$0xff]
    %v2168 = vld [vmem:[%s2163 + $0x20] sm:$0xff]
    %v2169 = vld [vmem:[%s2163 + $0x28] sm:$0xff]
    %v2170 = vld [vmem:[%s2163 + $0x30] sm:$0xff]
    %v2171 = vld [vmem:[%s2163 + $0x38] sm:$0xff]
    %v2172 = vld [vmem:[%s2163 + $0x40] sm:$0xff]
    %v2173 = vld [vmem:[%s2163 + $0x48] sm:$0xff]
    %v2174 = vld [vmem:[%s2163 + $0x50] sm:$0xff]
    %v2175 = vld [vmem:[%s2163 + $0x58] sm:$0xff]
    %v2176 = vld [vmem:[%s2163 + $0x60] sm:$0xff]
    %v2177 = vld [vmem:[%s2163 + $0x68] sm:$0xff]
    %v2178 = vld [vmem:[%s2163 + $0x70] sm:$0xff]
    %v2179 = vld [vmem:[%s2163 + $0x78] sm:$0xff]
    %s2180 = scalar_lea.vmem %s9, 2
    %v2181 = vld [vmem:[%s2180] sm:$0x1]
    %v2183 = vlaneseq
    %v2184 = vshrl.u32 %v2183, 7
    %v2185 = vsub.s32 0, %v2184
    %v2186 = vrot.slane %v2181, %v2185
    %2188 = vmatprep.subr.mxu0 0.0
    %2189 = vmatpush1.msra.mxu0 %v2164
    %2190 = vmatprep.subr.mxu0 0.0
    %2191 = vmatpush1.msra.mxu0 %v2165
    %2192 = vmatprep.subr.mxu0 0.0
    %2193 = vmatpush1.msra.mxu0 %v2166
    %2194 = vmatprep.subr.mxu0 0.0
    %2195 = vmatpush1.msra.mxu0 %v2167
    %2196 = vmatprep.subr.mxu0 0.0
    %2197 = vmatpush1.msra.mxu0 %v2168
    %2198 = vmatprep.subr.mxu0 0.0
    %2199 = vmatpush1.msra.mxu0 %v2169
    %2200 = vmatprep.subr.mxu0 0.0
    %2201 = vmatpush1.msra.mxu0 %v2170
    %2202 = vmatprep.subr.mxu0 0.0
    %2203 = vmatpush1.msra.mxu0 %v2171
    %2204 = vmatprep.subr.mxu0 0.0
    %2205 = vmatpush1.msra.mxu0 %v2172
    %2206 = vmatprep.subr.mxu0 0.0
    %2207 = vmatpush1.msra.mxu0 %v2173
    %2208 = vmatprep.subr.mxu0 0.0
    %2209 = vmatpush1.msra.mxu0 %v2174
    %2210 = vmatprep.subr.mxu0 0.0
    %2211 = vmatpush1.msra.mxu0 %v2175
    %2212 = vmatprep.subr.mxu0 0.0
    %2213 = vmatpush1.msra.mxu0 %v2176
    %2214 = vmatprep.subr.mxu0 0.0
    %2215 = vmatpush1.msra.mxu0 %v2177
    %2216 = vmatprep.subr.mxu0 0.0
    %2217 = vmatpush1.msra.mxu0 %v2178
    %2218 = vmatprep.subr.mxu0 0.0
    %2219 = vmatpush1.msra.mxu0 %v2179
    %2220 = vmatprep.subr.mxu0 0.0
    %2221 = vmatpush1.msra.mxu0 0.0
    %2222 = vmatprep.subr.mxu0 0.0
    %2223 = vmatpush1.msra.mxu0 0.0
    %2224 = vmatprep.subr.mxu0 0.0
    %2225 = vmatpush1.msra.mxu0 0.0
    %2226 = vmatprep.subr.mxu0 0.0
    %2227 = vmatpush1.msra.mxu0 0.0
    %2228 = vmatprep.subr.mxu0 0.0
    %2229 = vmatpush1.msra.mxu0 0.0
    %2230 = vmatprep.subr.mxu0 0.0
    %2231 = vmatpush1.msra.mxu0 0.0
    %2232 = vmatprep.subr.mxu0 0.0
    %2233 = vmatpush1.msra.mxu0 0.0
    %2234 = vmatprep.subr.mxu0 0.0
    %2235 = vmatpush1.msra.mxu0 0.0
    %2236 = vmatprep.subr.mxu0 0.0
    %2237 = vmatpush1.msra.mxu0 0.0
    %2238 = vmatprep.subr.mxu0 0.0
    %2239 = vmatpush1.msra.mxu0 0.0
    %2240 = vmatprep.subr.mxu0 0.0
    %2241 = vmatpush1.msra.mxu0 0.0
    %2242 = vmatprep.subr.mxu0 0.0
    %2243 = vmatpush1.msra.mxu0 0.0
    %2244 = vmatprep.subr.mxu0 0.0
    %2245 = vmatpush1.msra.mxu0 0.0
    %2246 = vmatprep.subr.mxu0 0.0
    %2247 = vmatpush1.msra.mxu0 0.0
    %2248 = vmatprep.subr.mxu0 0.0
    %2249 = vmatpush1.msra.mxu0 0.0
    %2250 = vmatprep.subr.mxu0 0.0
    %2251 = vmatpush1.msra.mxu0 0.0
    %2252 = vmatprep.mubr.f32.mxu0 0.0
    %2253 = vmatmul.mubr.f32.gmra.mrb[0].mxu0 %v2147
    %v2254 = vpop.f32.mrb[0].mxu0
    %v2255 = vadd.f32 %v2186, %v2254
    %v2256 = vpop.f32.mrb[0].mxu0
    %2257 = vmatprep.mubr.f32.mxu0 0.0
    %2258 = vmatmul.mubr.f32.gmra.mrb[0].mxu0 %v2148
    %v2259 = vpop.f32.mrb[0].mxu0
    %v2260 = vadd.f32 %v2186, %v2259
    %v2261 = vpop.f32.mrb[0].mxu0
    %2262 = vmatprep.mubr.f32.mxu0 0.0
    %2263 = vmatmul.mubr.f32.gmra.mrb[0].mxu0 %v2149
    %v2264 = vpop.f32.mrb[0].mxu0
    %v2265 = vadd.f32 %v2186, %v2264
    %v2266 = vpop.f32.mrb[0].mxu0
    %2267 = vmatprep.mubr.f32.mxu0 0.0
    %2268 = vmatmul.mubr.f32.gmra.mrb[0].mxu0 %v2150
    %v2269 = vpop.f32.mrb[0].mxu0
    %v2270 = vadd.f32 %v2186, %v2269
    %v2271 = vpop.f32.mrb[0].mxu0
    %2272 = vmatprep.mubr.f32.mxu0 0.0
    %2273 = vmatmul.mubr.f32.gmra.mrb[0].mxu0 %v2151
    %v2274 = vpop.f32.mrb[0].mxu0
    %v2275 = vadd.f32 %v2186, %v2274
    %v2276 = vpop.f32.mrb[0].mxu0
    %2277 = vmatprep.mubr.f32.mxu0 0.0
    %2278 = vmatmul.mubr.f32.gmra.mrb[0].mxu0 %v2152
    %v2279 = vpop.f32.mrb[0].mxu0
    %v2280 = vadd.f32 %v2186, %v2279
    %v2281 = vpop.f32.mrb[0].mxu0
    %2282 = vmatprep.mubr.f32.mxu0 0.0
    %2283 = vmatmul.mubr.f32.gmra.mrb[0].mxu0 %v2153
    %v2284 = vpop.f32.mrb[0].mxu0
    %v2285 = vadd.f32 %v2186, %v2284
    %v2286 = vpop.f32.mrb[0].mxu0
    %2287 = vmatprep.mubr.f32.mxu0 0.0
    %2288 = vmatmul.mubr.f32.gmra.mrb[0].mxu0 %v2154
    %v2289 = vpop.f32.mrb[0].mxu0
    %v2290 = vadd.f32 %v2186, %v2289
    %v2291 = vpop.f32.mrb[0].mxu0
    %2292 = vmatprep.mubr.f32.mxu0 0.0
    %2293 = vmatmul.mubr.f32.gmra.mrb[0].mxu0 %v2155
    %v2294 = vpop.f32.mrb[0].mxu0
    %v2295 = vadd.f32 %v2186, %v2294
    %v2296 = vpop.f32.mrb[0].mxu0
    %2297 = vmatprep.mubr.f32.mxu0 0.0
    %2298 = vmatmul.mubr.f32.gmra.mrb[0].mxu0 %v2156
    %v2299 = vpop.f32.mrb[0].mxu0
    %v2300 = vadd.f32 %v2186, %v2299
    %v2301 = vpop.f32.mrb[0].mxu0
    %2302 = vmatprep.mubr.f32.mxu0 0.0
    %2303 = vmatmul.mubr.f32.gmra.mrb[0].mxu0 %v2157
    %v2304 = vpop.f32.mrb[0].mxu0
    %v2305 = vadd.f32 %v2186, %v2304
    %v2306 = vpop.f32.mrb[0].mxu0
    %2307 = vmatprep.mubr.f32.mxu0 0.0
    %2308 = vmatmul.mubr.f32.gmra.mrb[0].mxu0 %v2158
    %v2309 = vpop.f32.mrb[0].mxu0
    %v2310 = vadd.f32 %v2186, %v2309
    %v2311 = vpop.f32.mrb[0].mxu0
    %2312 = vmatprep.mubr.f32.mxu0 0.0
    %2313 = vmatmul.mubr.f32.gmra.mrb[0].mxu0 %v2159
    %v2314 = vpop.f32.mrb[0].mxu0
    %v2315 = vadd.f32 %v2186, %v2314
    %v2316 = vpop.f32.mrb[0].mxu0
    %2317 = vmatprep.mubr.f32.mxu0 0.0
    %2318 = vmatmul.mubr.f32.gmra.mrb[0].mxu0 %v2160
    %v2319 = vpop.f32.mrb[0].mxu0
    %v2320 = vadd.f32 %v2186, %v2319
    %v2321 = vpop.f32.mrb[0].mxu0
    %2322 = vmatprep.mubr.f32.mxu0 0.0
    %2323 = vmatmul.mubr.f32.gmra.mrb[0].mxu0 %v2161
    %v2324 = vpop.f32.mrb[0].mxu0
    %v2325 = vadd.f32 %v2186, %v2324
    %v2326 = vpop.f32.mrb[0].mxu0
    %2327 = vmatprep.mubr.f32.mxu0 0.0
    %2328 = vmatmul.mubr.f32.gmra.mrb[0].mxu0 %v2162
    %v2329 = vpop.f32.mrb[0].mxu0
    %v2330 = vadd.f32 %v2186, %v2329
    %v2331 = vpop.f32.mrb[0].mxu0
    %2332 = vdwg.mxu0
    %v2333 = vmax.f32 %v2255, 0.0
    %v2334 = vmax.f32 %v2260, 0.0
    %v2335 = vmax.f32 %v2265, 0.0
    %v2336 = vmax.f32 %v2270, 0.0
    %v2337 = vmax.f32 %v2275, 0.0
    %v2338 = vmax.f32 %v2280, 0.0
    %v2339 = vmax.f32 %v2285, 0.0
    %v2340 = vmax.f32 %v2290, 0.0
    %v2341 = vmax.f32 %v2295, 0.0
    %v2342 = vmax.f32 %v2300, 0.0
    %v2343 = vmax.f32 %v2305, 0.0
    %v2344 = vmax.f32 %v2310, 0.0
    %v2345 = vmax.f32 %v2315, 0.0
    %v2346 = vmax.f32 %v2320, 0.0
    %v2347 = vmax.f32 %v2325, 0.0
    %v2348 = vmax.f32 %v2330, 0.0
    %s2349 = scalar_lea.vmem [#allocation7], 256
    %v2350 = vld [vmem:[%s2349] sm:$0xff]
    %v2351 = vld [vmem:[%s2349 + $0x8] sm:$0xff]
    %v2352 = vld [vmem:[%s2349 + $0x10] sm:$0xff]
    %v2353 = vld [vmem:[%s2349 + $0x18] sm:$0xff]
    %v2354 = vld [vmem:[%s2349 + $0x20] sm:$0xff]
    %v2355 = vld [vmem:[%s2349 + $0x28] sm:$0xff]
    %v2356 = vld [vmem:[%s2349 + $0x30] sm:$0xff]
    %v2357 = vld [vmem:[%s2349 + $0x38] sm:$0xff]
    %v2358 = vld [vmem:[%s2349 + $0x40] sm:$0xff]
    %v2359 = vld [vmem:[%s2349 + $0x48] sm:$0xff]
    %v2360 = vld [vmem:[%s2349 + $0x50] sm:$0xff]
    %v2361 = vld [vmem:[%s2349 + $0x58] sm:$0xff]
    %v2362 = vld [vmem:[%s2349 + $0x60] sm:$0xff]
    %v2363 = vld [vmem:[%s2349 + $0x68] sm:$0xff]
    %v2364 = vld [vmem:[%s2349 + $0x70] sm:$0xff]
    %v2365 = vld [vmem:[%s2349 + $0x78] sm:$0xff]
    %s2366 = scalar_lea.vmem %s11, 2
    %v2367 = vld [vmem:[%s2366] sm:$0x1]
    %v2369 = vlaneseq
    %v2370 = vshrl.u32 %v2369, 7
    %v2371 = vsub.s32 0, %v2370
    %v2372 = vrot.slane %v2367, %v2371
    %2374 = vmatprep.subr.mxu0 0.0
    %2375 = vmatpush1.msra.mxu0 %v2350
    %2376 = vmatprep.subr.mxu0 0.0
    %2377 = vmatpush1.msra.mxu0 %v2351
    %2378 = vmatprep.subr.mxu0 0.0
    %2379 = vmatpush1.msra.mxu0 %v2352
    %2380 = vmatprep.subr.mxu0 0.0
    %2381 = vmatpush1.msra.mxu0 %v2353
    %2382 = vmatprep.subr.mxu0 0.0
    %2383 = vmatpush1.msra.mxu0 %v2354
    %2384 = vmatprep.subr.mxu0 0.0
    %2385 = vmatpush1.msra.mxu0 %v2355
    %2386 = vmatprep.subr.mxu0 0.0
    %2387 = vmatpush1.msra.mxu0 %v2356
    %2388 = vmatprep.subr.mxu0 0.0
    %2389 = vmatpush1.msra.mxu0 %v2357
    %2390 = vmatprep.subr.mxu0 0.0
    %2391 = vmatpush1.msra.mxu0 %v2358
    %2392 = vmatprep.subr.mxu0 0.0
    %2393 = vmatpush1.msra.mxu0 %v2359
    %2394 = vmatprep.subr.mxu0 0.0
    %2395 = vmatpush1.msra.mxu0 %v2360
    %2396 = vmatprep.subr.mxu0 0.0
    %2397 = vmatpush1.msra.mxu0 %v2361
    %2398 = vmatprep.subr.mxu0 0.0
    %2399 = vmatpush1.msra.mxu0 %v2362
    %2400 = vmatprep.subr.mxu0 0.0
    %2401 = vmatpush1.msra.mxu0 %v2363
    %2402 = vmatprep.subr.mxu0 0.0
    %2403 = vmatpush1.msra.mxu0 %v2364
    %2404 = vmatprep.subr.mxu0 0.0
    %2405 = vmatpush1.msra.mxu0 %v2365
    %2406 = vmatprep.subr.mxu0 0.0
    %2407 = vmatpush1.msra.mxu0 0.0
    %2408 = vmatprep.subr.mxu0 0.0
    %2409 = vmatpush1.msra.mxu0 0.0
    %2410 = vmatprep.subr.mxu0 0.0
    %2411 = vmatpush1.msra.mxu0 0.0
    %2412 = vmatprep.subr.mxu0 0.0
    %2413 = vmatpush1.msra.mxu0 0.0
    %2414 = vmatprep.subr.mxu0 0.0
    %2415 = vmatpush1.msra.mxu0 0.0
    %2416 = vmatprep.subr.mxu0 0.0
    %2417 = vmatpush1.msra.mxu0 0.0
    %2418 = vmatprep.subr.mxu0 0.0
    %2419 = vmatpush1.msra.mxu0 0.0
    %2420 = vmatprep.subr.mxu0 0.0
    %2421 = vmatpush1.msra.mxu0 0.0
    %2422 = vmatprep.subr.mxu0 0.0
    %2423 = vmatpush1.msra.mxu0 0.0
    %2424 = vmatprep.subr.mxu0 0.0
    %2425 = vmatpush1.msra.mxu0 0.0
    %2426 = vmatprep.subr.mxu0 0.0
    %2427 = vmatpush1.msra.mxu0 0.0
    %2428 = vmatprep.subr.mxu0 0.0
    %2429 = vmatpush1.msra.mxu0 0.0
    %2430 = vmatprep.subr.mxu0 0.0
    %2431 = vmatpush1.msra.mxu0 0.0
    %2432 = vmatprep.subr.mxu0 0.0
    %2433 = vmatpush1.msra.mxu0 0.0
    %2434 = vmatprep.subr.mxu0 0.0
    %2435 = vmatpush1.msra.mxu0 0.0
    %2436 = vmatprep.subr.mxu0 0.0
    %2437 = vmatpush1.msra.mxu0 0.0
    %2438 = vmatprep.mubr.f32.mxu0 0.0
    %2439 = vmatmul.mubr.f32.gmra.mrb[0].mxu0 %v2333
    %v2440 = vpop.f32.mrb[0].mxu0
    %v2441 = vadd.f32 %v2372, %v2440
    %v2442 = vpop.f32.mrb[0].mxu0
    %2443 = vmatprep.mubr.f32.mxu0 0.0
    %2444 = vmatmul.mubr.f32.gmra.mrb[0].mxu0 %v2334
    %v2445 = vpop.f32.mrb[0].mxu0
    %v2446 = vadd.f32 %v2372, %v2445
    %v2447 = vpop.f32.mrb[0].mxu0
    %2448 = vmatprep.mubr.f32.mxu0 0.0
    %2449 = vmatmul.mubr.f32.gmra.mrb[0].mxu0 %v2335
    %v2450 = vpop.f32.mrb[0].mxu0
    %v2451 = vadd.f32 %v2372, %v2450
    %v2452 = vpop.f32.mrb[0].mxu0
    %2453 = vmatprep.mubr.f32.mxu0 0.0
    %2454 = vmatmul.mubr.f32.gmra.mrb[0].mxu0 %v2336
    %v2455 = vpop.f32.mrb[0].mxu0
    %v2456 = vadd.f32 %v2372, %v2455
    %v2457 = vpop.f32.mrb[0].mxu0
    %2458 = vmatprep.mubr.f32.mxu0 0.0
    %2459 = vmatmul.mubr.f32.gmra.mrb[0].mxu0 %v2337
    %v2460 = vpop.f32.mrb[0].mxu0
    %v2461 = vadd.f32 %v2372, %v2460
    %v2462 = vpop.f32.mrb[0].mxu0
    %2463 = vmatprep.mubr.f32.mxu0 0.0
    %2464 = vmatmul.mubr.f32.gmra.mrb[0].mxu0 %v2338
    %v2465 = vpop.f32.mrb[0].mxu0
    %v2466 = vadd.f32 %v2372, %v2465
    %v2467 = vpop.f32.mrb[0].mxu0
    %2468 = vmatprep.mubr.f32.mxu0 0.0
    %2469 = vmatmul.mubr.f32.gmra.mrb[0].mxu0 %v2339
    %v2470 = vpop.f32.mrb[0].mxu0
    %v2471 = vadd.f32 %v2372, %v2470
    %v2472 = vpop.f32.mrb[0].mxu0
    %2473 = vmatprep.mubr.f32.mxu0 0.0
    %2474 = vmatmul.mubr.f32.gmra.mrb[0].mxu0 %v2340
    %v2475 = vpop.f32.mrb[0].mxu0
    %v2476 = vadd.f32 %v2372, %v2475
    %v2477 = vpop.f32.mrb[0].mxu0
    %2478 = vmatprep.mubr.f32.mxu0 0.0
    %2479 = vmatmul.mubr.f32.gmra.mrb[0].mxu0 %v2341
    %v2480 = vpop.f32.mrb[0].mxu0
    %v2481 = vadd.f32 %v2372, %v2480
    %v2482 = vpop.f32.mrb[0].mxu0
    %2483 = vmatprep.mubr.f32.mxu0 0.0
    %2484 = vmatmul.mubr.f32.gmra.mrb[0].mxu0 %v2342
    %v2485 = vpop.f32.mrb[0].mxu0
    %v2486 = vadd.f32 %v2372, %v2485
    %v2487 = vpop.f32.mrb[0].mxu0
    %2488 = vmatprep.mubr.f32.mxu0 0.0
    %2489 = vmatmul.mubr.f32.gmra.mrb[0].mxu0 %v2343
    %v2490 = vpop.f32.mrb[0].mxu0
    %v2491 = vadd.f32 %v2372, %v2490
    %v2492 = vpop.f32.mrb[0].mxu0
    %2493 = vmatprep.mubr.f32.mxu0 0.0
    %2494 = vmatmul.mubr.f32.gmra.mrb[0].mxu0 %v2344
    %v2495 = vpop.f32.mrb[0].mxu0
    %v2496 = vadd.f32 %v2372, %v2495
    %v2497 = vpop.f32.mrb[0].mxu0
    %2498 = vmatprep.mubr.f32.mxu0 0.0
    %2499 = vmatmul.mubr.f32.gmra.mrb[0].mxu0 %v2345
    %v2500 = vpop.f32.mrb[0].mxu0
    %v2501 = vadd.f32 %v2372, %v2500
    %v2502 = vpop.f32.mrb[0].mxu0
    %2503 = vmatprep.mubr.f32.mxu0 0.0
    %2504 = vmatmul.mubr.f32.gmra.mrb[0].mxu0 %v2346
    %v2505 = vpop.f32.mrb[0].mxu0
    %v2506 = vadd.f32 %v2372, %v2505
    %v2507 = vpop.f32.mrb[0].mxu0
    %2508 = vmatprep.mubr.f32.mxu0 0.0
    %2509 = vmatmul.mubr.f32.gmra.mrb[0].mxu0 %v2347
    %v2510 = vpop.f32.mrb[0].mxu0
    %v2511 = vadd.f32 %v2372, %v2510
    %v2512 = vpop.f32.mrb[0].mxu0
    %2513 = vmatprep.mubr.f32.mxu0 0.0
    %2514 = vmatmul.mubr.f32.gmra.mrb[0].mxu0 %v2348
    %v2515 = vpop.f32.mrb[0].mxu0
    %v2516 = vadd.f32 %v2372, %v2515
    %v2517 = vpop.f32.mrb[0].mxu0
    %2518 = vdwg.mxu0
    %v2519 = vmax.f32 %v2441, 0.0
    %v2520 = vmax.f32 %v2446, 0.0
    %v2521 = vmax.f32 %v2451, 0.0
    %v2522 = vmax.f32 %v2456, 0.0
    %v2523 = vmax.f32 %v2461, 0.0
    %v2524 = vmax.f32 %v2466, 0.0
    %v2525 = vmax.f32 %v2471, 0.0
    %v2526 = vmax.f32 %v2476, 0.0
    %v2527 = vmax.f32 %v2481, 0.0
    %v2528 = vmax.f32 %v2486, 0.0
    %v2529 = vmax.f32 %v2491, 0.0
    %v2530 = vmax.f32 %v2496, 0.0
    %v2531 = vmax.f32 %v2501, 0.0
    %v2532 = vmax.f32 %v2506, 0.0
    %v2533 = vmax.f32 %v2511, 0.0
    %v2534 = vmax.f32 %v2516, 0.0
    %2535 = vst [vmem:[#allocation9 + $0x10] sm:$0xff] %v2519
    %2536 = vst [vmem:[#allocation9 + $0x30] sm:$0xff] %v2520
    %2537 = vst [vmem:[#allocation9 + $0x50] sm:$0xff] %v2521
    %2538 = vst [vmem:[#allocation9 + $0x70] sm:$0xff] %v2522
    %2539 = vst [vmem:[#allocation9 + $0x90] sm:$0xff] %v2523
    %2540 = vst [vmem:[#allocation9 + $0xb0] sm:$0xff] %v2524
    %2541 = vst [vmem:[#allocation9 + $0xd0] sm:$0xff] %v2525
    %2542 = vst [vmem:[#allocation9 + $0xf0] sm:$0xff] %v2526
    %2543 = vst [vmem:[#allocation9 + $0x110] sm:$0xff] %v2527
    %2544 = vst [vmem:[#allocation9 + $0x130] sm:$0xff] %v2528
    %2545 = vst [vmem:[#allocation9 + $0x150] sm:$0xff] %v2529
    %2546 = vst [vmem:[#allocation9 + $0x170] sm:$0xff] %v2530
    %2547 = vst [vmem:[#allocation9 + $0x190] sm:$0xff] %v2531
    %2548 = vst [vmem:[#allocation9 + $0x1b0] sm:$0xff] %v2532
    %2549 = vst [vmem:[#allocation9 + $0x1d0] sm:$0xff] %v2533
    %2550 = vst [vmem:[#allocation9 + $0x1f0] sm:$0xff] %v2534
    %s2551 = scalar_lea.vmem %s6, 3
    %v2552 = vld [vmem:[%s2551] sm:$0x1]
    %v2554 = vlaneseq
    %v2555 = vshrl.u32 %v2554, 7
    %v2556 = vsub.s32 0, %v2555
    %v2557 = vrot.slane %v2552, %v2556
    %v2559 = vmul.f32 %v166, %v2557
    %v2560 = vmul.f32 %v171, %v2557
    %v2561 = vmul.f32 %v176, %v2557
    %v2562 = vmul.f32 %v181, %v2557
    %v2563 = vmul.f32 %v186, %v2557
    %v2564 = vmul.f32 %v191, %v2557
    %v2565 = vmul.f32 %v196, %v2557
    %v2566 = vmul.f32 %v201, %v2557
    %v2567 = vmul.f32 %v206, %v2557
    %v2568 = vmul.f32 %v211, %v2557
    %v2569 = vmul.f32 %v216, %v2557
    %v2570 = vmul.f32 %v221, %v2557
    %v2571 = vmul.f32 %v226, %v2557
    %v2572 = vmul.f32 %v231, %v2557
    %v2573 = vmul.f32 %v236, %v2557
    %v2574 = vmul.f32 %v241, %v2557
    %s2575 = scalar_lea.vmem %s7, 3
    %v2576 = vld [vmem:[%s2575] sm:$0x1]
    %v2578 = vlaneseq
    %v2579 = vshrl.u32 %v2578, 7
    %v2580 = vsub.s32 0, %v2579
    %v2581 = vrot.slane %v2576, %v2580
    %v2583 = vadd.f32 %v2559, %v2581
    %v2584 = vadd.f32 %v2560, %v2581
    %v2585 = vadd.f32 %v2561, %v2581
    %v2586 = vadd.f32 %v2562, %v2581
    %v2587 = vadd.f32 %v2563, %v2581
    %v2588 = vadd.f32 %v2564, %v2581
    %v2589 = vadd.f32 %v2565, %v2581
    %v2590 = vadd.f32 %v2566, %v2581
    %v2591 = vadd.f32 %v2567, %v2581
    %v2592 = vadd.f32 %v2568, %v2581
    %v2593 = vadd.f32 %v2569, %v2581
    %v2594 = vadd.f32 %v2570, %v2581
    %v2595 = vadd.f32 %v2571, %v2581
    %v2596 = vadd.f32 %v2572, %v2581
    %v2597 = vadd.f32 %v2573, %v2581
    %v2598 = vadd.f32 %v2574, %v2581
    %v2599 = vpack.c.bf16 %v2520, %v2519
    %v2600 = vpack.c.bf16 %v2522, %v2521
    %v2601 = vpack.c.bf16 %v2524, %v2523
    %v2602 = vpack.c.bf16 %v2526, %v2525
    %v2603 = vpack.c.bf16 %v2528, %v2527
    %v2604 = vpack.c.bf16 %v2530, %v2529
    %v2605 = vpack.c.bf16 %v2532, %v2531
    %v2606 = vpack.c.bf16 %v2534, %v2533
    %2607 = vmatprep.subr.bf16.mxu0 0
    %2608 = vmatpush1.bf16.msra.mxu0 %v2599
    %2609 = vmatprep.subr.bf16.mxu0 0
    %2610 = vmatpush1.bf16.msra.mxu0 %v2600
    %2611 = vmatprep.subr.bf16.mxu0 0
    %2612 = vmatpush1.bf16.msra.mxu0 %v2601
    %2613 = vmatprep.subr.bf16.mxu0 0
    %2614 = vmatpush1.bf16.msra.mxu0 %v2602
    %2615 = vmatprep.subr.bf16.mxu0 0
    %2616 = vmatpush1.bf16.msra.mxu0 %v2603
    %2617 = vmatprep.subr.bf16.mxu0 0
    %2618 = vmatpush1.bf16.msra.mxu0 %v2604
    %2619 = vmatprep.subr.bf16.mxu0 0
    %2620 = vmatpush1.bf16.msra.mxu0 %v2605
    %2621 = vmatprep.subr.bf16.mxu0 0
    %2622 = vmatpush1.bf16.msra.mxu0 %v2606
    %2623 = vmatprep.subr.bf16.mxu0 0
    %2624 = vmatpush1.bf16.msra.mxu0 0
    %2625 = vmatprep.subr.bf16.mxu0 0
    %2626 = vmatpush1.bf16.msra.mxu0 0
    %2627 = vmatprep.subr.bf16.mxu0 0
    %2628 = vmatpush1.bf16.msra.mxu0 0
    %2629 = vmatprep.subr.bf16.mxu0 0
    %2630 = vmatpush1.bf16.msra.mxu0 0
    %2631 = vmatprep.subr.bf16.mxu0 0
    %2632 = vmatpush1.bf16.msra.mxu0 0
    %2633 = vmatprep.subr.bf16.mxu0 0
    %2634 = vmatpush1.bf16.msra.mxu0 0
    %2635 = vmatprep.subr.bf16.mxu0 0
    %2636 = vmatpush1.bf16.msra.mxu0 0
    %2637 = vmatprep.subr.bf16.mxu0 0
    %2638 = vmatpush1.bf16.msra.mxu0 0
    %2639 = vmatprep.mubr.bf16.mxu0 0
    %2640 = vmatmul.mubr.bf16.gmra.mrb[0].mxu0 %v328
    %v2641 = vpop.f32.mrb[0].mxu0
    %v2642 = vadd.f32 %v2583, %v2641
    %v2643 = vpop.f32.mrb[0].mxu0
    %v2644 = vpop.f32.mrb[0].mxu0
    %v2645 = vadd.f32 %v2584, %v2644
    %v2646 = vpop.f32.mrb[0].mxu0
    %2647 = vmatprep.mubr.bf16.mxu0 0
    %2648 = vmatmul.mubr.bf16.gmra.mrb[0].mxu0 %v329
    %v2649 = vpop.f32.mrb[0].mxu0
    %v2650 = vadd.f32 %v2585, %v2649
    %v2651 = vpop.f32.mrb[0].mxu0
    %v2652 = vpop.f32.mrb[0].mxu0
    %v2653 = vadd.f32 %v2586, %v2652
    %v2654 = vpop.f32.mrb[0].mxu0
    %2655 = vmatprep.mubr.bf16.mxu0 0
    %2656 = vmatmul.mubr.bf16.gmra.mrb[0].mxu0 %v330
    %v2657 = vpop.f32.mrb[0].mxu0
    %v2658 = vadd.f32 %v2587, %v2657
    %v2659 = vpop.f32.mrb[0].mxu0
    %v2660 = vpop.f32.mrb[0].mxu0
    %v2661 = vadd.f32 %v2588, %v2660
    %v2662 = vpop.f32.mrb[0].mxu0
    %2663 = vmatprep.mubr.bf16.mxu0 0
    %2664 = vmatmul.mubr.bf16.gmra.mrb[0].mxu0 %v331
    %v2665 = vpop.f32.mrb[0].mxu0
    %v2666 = vadd.f32 %v2589, %v2665
    %v2667 = vpop.f32.mrb[0].mxu0
    %v2668 = vpop.f32.mrb[0].mxu0
    %v2669 = vadd.f32 %v2590, %v2668
    %v2670 = vpop.f32.mrb[0].mxu0
    %2671 = vmatprep.mubr.bf16.mxu0 0
    %2672 = vmatmul.mubr.bf16.gmra.mrb[0].mxu0 %v332
    %v2673 = vpop.f32.mrb[0].mxu0
    %v2674 = vadd.f32 %v2591, %v2673
    %v2675 = vpop.f32.mrb[0].mxu0
    %v2676 = vpop.f32.mrb[0].mxu0
    %v2677 = vadd.f32 %v2592, %v2676
    %v2678 = vpop.f32.mrb[0].mxu0
    %2679 = vmatprep.mubr.bf16.mxu0 0
    %2680 = vmatmul.mubr.bf16.gmra.mrb[0].mxu0 %v333
    %v2681 = vpop.f32.mrb[0].mxu0
    %v2682 = vadd.f32 %v2593, %v2681
    %v2683 = vpop.f32.mrb[0].mxu0
    %v2684 = vpop.f32.mrb[0].mxu0
    %v2685 = vadd.f32 %v2594, %v2684
    %v2686 = vpop.f32.mrb[0].mxu0
    %2687 = vmatprep.mubr.bf16.mxu0 0
    %2688 = vmatmul.mubr.bf16.gmra.mrb[0].mxu0 %v334
    %v2689 = vpop.f32.mrb[0].mxu0
    %v2690 = vadd.f32 %v2595, %v2689
    %v2691 = vpop.f32.mrb[0].mxu0
    %v2692 = vpop.f32.mrb[0].mxu0
    %v2693 = vadd.f32 %v2596, %v2692
    %v2694 = vpop.f32.mrb[0].mxu0
    %2695 = vmatprep.mubr.bf16.mxu0 0
    %2696 = vmatmul.mubr.bf16.gmra.mrb[0].mxu0 %v335
    %v2697 = vpop.f32.mrb[0].mxu0
    %v2698 = vadd.f32 %v2597, %v2697
    %v2699 = vpop.f32.mrb[0].mxu0
    %v2700 = vpop.f32.mrb[0].mxu0
    %v2701 = vadd.f32 %v2598, %v2700
    %v2702 = vpop.f32.mrb[0].mxu0
    %2703 = vdwg.mxu0
    %v2704 = vmax.f32 %v2642, 0.0
    %v2705 = vmax.f32 %v2645, 0.0
    %v2706 = vmax.f32 %v2650, 0.0
    %v2707 = vmax.f32 %v2653, 0.0
    %v2708 = vmax.f32 %v2658, 0.0
    %v2709 = vmax.f32 %v2661, 0.0
    %v2710 = vmax.f32 %v2666, 0.0
    %v2711 = vmax.f32 %v2669, 0.0
    %v2712 = vmax.f32 %v2674, 0.0
    %v2713 = vmax.f32 %v2677, 0.0
    %v2714 = vmax.f32 %v2682, 0.0
    %v2715 = vmax.f32 %v2685, 0.0
    %v2716 = vmax.f32 %v2690, 0.0
    %v2717 = vmax.f32 %v2693, 0.0
    %v2718 = vmax.f32 %v2698, 0.0
    %v2719 = vmax.f32 %v2701, 0.0
    %v2720 = vpack.c.bf16 %v2705, %v2704
    %v2721 = vpack.c.bf16 %v2707, %v2706
    %v2722 = vpack.c.bf16 %v2709, %v2708
    %v2723 = vpack.c.bf16 %v2711, %v2710
    %v2724 = vpack.c.bf16 %v2713, %v2712
    %v2725 = vpack.c.bf16 %v2715, %v2714
    %v2726 = vpack.c.bf16 %v2717, %v2716
    %v2727 = vpack.c.bf16 %v2719, %v2718
    %2728 = vmatprep.subr.bf16.mxu0 0
    %2729 = vmatpush1.bf16.msra.mxu0 %v2720
    %2730 = vmatprep.subr.bf16.mxu0 0
    %2731 = vmatpush1.bf16.msra.mxu0 %v2721
    %2732 = vmatprep.subr.bf16.mxu0 0
    %2733 = vmatpush1.bf16.msra.mxu0 %v2722
    %2734 = vmatprep.subr.bf16.mxu0 0
    %2735 = vmatpush1.bf16.msra.mxu0 %v2723
    %2736 = vmatprep.subr.bf16.mxu0 0
    %2737 = vmatpush1.bf16.msra.mxu0 %v2724
    %2738 = vmatprep.subr.bf16.mxu0 0
    %2739 = vmatpush1.bf16.msra.mxu0 %v2725
    %2740 = vmatprep.subr.bf16.mxu0 0
    %2741 = vmatpush1.bf16.msra.mxu0 %v2726
    %2742 = vmatprep.subr.bf16.mxu0 0
    %2743 = vmatpush1.bf16.msra.mxu0 %v2727
    %2744 = vmatprep.subr.bf16.mxu0 0
    %2745 = vmatpush1.bf16.msra.mxu0 0
    %2746 = vmatprep.subr.bf16.mxu0 0
    %2747 = vmatpush1.bf16.msra.mxu0 0
    %2748 = vmatprep.subr.bf16.mxu0 0
    %2749 = vmatpush1.bf16.msra.mxu0 0
    %2750 = vmatprep.subr.bf16.mxu0 0
    %2751 = vmatpush1.bf16.msra.mxu0 0
    %2752 = vmatprep.subr.bf16.mxu0 0
    %2753 = vmatpush1.bf16.msra.mxu0 0
    %2754 = vmatprep.subr.bf16.mxu0 0
    %2755 = vmatpush1.bf16.msra.mxu0 0
    %2756 = vmatprep.subr.bf16.mxu0 0
    %2757 = vmatpush1.bf16.msra.mxu0 0
    %2758 = vmatprep.subr.bf16.mxu0 0
    %2759 = vmatpush1.bf16.msra.mxu0 0
    %2760 = vmatprep.mubr.bf16.mxu0 0
    %2761 = vmatmul.mubr.bf16.gmra.mrb[0].mxu0 %v497
    %v2762 = vpop.f32.mrb[0].mxu0
    %v2763 = vadd.f32 0.0, %v2762
    %v2764 = vpop.f32.mrb[0].mxu0
    %v2765 = vpop.f32.mrb[0].mxu0
    %v2766 = vadd.f32 0.0, %v2765
    %v2767 = vpop.f32.mrb[0].mxu0
    %2768 = vmatprep.mubr.bf16.mxu0 0
    %2769 = vmatmul.mubr.bf16.gmra.mrb[0].mxu0 %v498
    %v2770 = vpop.f32.mrb[0].mxu0
    %v2771 = vadd.f32 0.0, %v2770
    %v2772 = vpop.f32.mrb[0].mxu0
    %v2773 = vpop.f32.mrb[0].mxu0
    %v2774 = vadd.f32 0.0, %v2773
    %v2775 = vpop.f32.mrb[0].mxu0
    %2776 = vmatprep.mubr.bf16.mxu0 0
    %2777 = vmatmul.mubr.bf16.gmra.mrb[0].mxu0 %v499
    %v2778 = vpop.f32.mrb[0].mxu0
    %v2779 = vadd.f32 0.0, %v2778
    %v2780 = vpop.f32.mrb[0].mxu0
    %v2781 = vpop.f32.mrb[0].mxu0
    %v2782 = vadd.f32 0.0, %v2781
    %v2783 = vpop.f32.mrb[0].mxu0
    %2784 = vmatprep.mubr.bf16.mxu0 0
    %2785 = vmatmul.mubr.bf16.gmra.mrb[0].mxu0 %v500
    %v2786 = vpop.f32.mrb[0].mxu0
    %v2787 = vadd.f32 0.0, %v2786
    %v2788 = vpop.f32.mrb[0].mxu0
    %v2789 = vpop.f32.mrb[0].mxu0
    %v2790 = vadd.f32 0.0, %v2789
    %v2791 = vpop.f32.mrb[0].mxu0
    %2792 = vmatprep.mubr.bf16.mxu0 0
    %2793 = vmatmul.mubr.bf16.gmra.mrb[0].mxu0 %v501
    %v2794 = vpop.f32.mrb[0].mxu0
    %v2795 = vadd.f32 0.0, %v2794
    %v2796 = vpop.f32.mrb[0].mxu0
    %v2797 = vpop.f32.mrb[0].mxu0
    %v2798 = vadd.f32 0.0, %v2797
    %v2799 = vpop.f32.mrb[0].mxu0
    %2800 = vmatprep.mubr.bf16.mxu0 0
    %2801 = vmatmul.mubr.bf16.gmra.mrb[0].mxu0 %v502
    %v2802 = vpop.f32.mrb[0].mxu0
    %v2803 = vadd.f32 0.0, %v2802
    %v2804 = vpop.f32.mrb[0].mxu0
    %v2805 = vpop.f32.mrb[0].mxu0
    %v2806 = vadd.f32 0.0, %v2805
    %v2807 = vpop.f32.mrb[0].mxu0
    %2808 = vmatprep.mubr.bf16.mxu0 0
    %2809 = vmatmul.mubr.bf16.gmra.mrb[0].mxu0 %v503
    %v2810 = vpop.f32.mrb[0].mxu0
    %v2811 = vadd.f32 0.0, %v2810
    %v2812 = vpop.f32.mrb[0].mxu0
    %v2813 = vpop.f32.mrb[0].mxu0
    %v2814 = vadd.f32 0.0, %v2813
    %v2815 = vpop.f32.mrb[0].mxu0
    %2816 = vmatprep.mubr.bf16.mxu0 0
    %2817 = vmatmul.mubr.bf16.gmra.mrb[0].mxu0 %v504
    %v2818 = vpop.f32.mrb[0].mxu0
    %v2819 = vadd.f32 0.0, %v2818
    %v2820 = vpop.f32.mrb[0].mxu0
    %v2821 = vpop.f32.mrb[0].mxu0
    %v2822 = vadd.f32 0.0, %v2821
    %v2823 = vpop.f32.mrb[0].mxu0
    %2824 = vdwg.mxu0
    %v2825 = vmul.f32 %v2763, %v613
    %v2826 = vmul.f32 %v2766, %v618
    %v2827 = vmul.f32 %v2771, %v623
    %v2828 = vmul.f32 %v2774, %v628
    %v2829 = vmul.f32 %v2779, %v633
    %v2830 = vmul.f32 %v2782, %v638
    %v2831 = vmul.f32 %v2787, %v643
    %v2832 = vmul.f32 %v2790, %v648
    %v2833 = vmul.f32 %v2795, %v653
    %v2834 = vmul.f32 %v2798, %v658
    %v2835 = vmul.f32 %v2803, %v663
    %v2836 = vmul.f32 %v2806, %v668
    %v2837 = vmul.f32 %v2811, %v673
    %v2838 = vmul.f32 %v2814, %v678
    %v2839 = vmul.f32 %v2819, %v683
    %v2840 = vmul.f32 %v2822, %v688
    %s2841 = sld [smem:[#allocation2 + $0x3]]
    %s2842 = sadd.f32 %s2841, 1.0
    %v2843 = vstv %s2842
    %v2844 = vmul.f32 %v2843, %v2519
    %v2845 = vmul.f32 %v2843, %v2520
    %v2846 = vmul.f32 %v2843, %v2521
    %v2847 = vmul.f32 %v2843, %v2522
    %v2848 = vmul.f32 %v2843, %v2523
    %v2849 = vmul.f32 %v2843, %v2524
    %v2850 = vmul.f32 %v2843, %v2525
    %v2851 = vmul.f32 %v2843, %v2526
    %v2852 = vmul.f32 %v2843, %v2527
    %v2853 = vmul.f32 %v2843, %v2528
    %v2854 = vmul.f32 %v2843, %v2529
    %v2855 = vmul.f32 %v2843, %v2530
    %v2856 = vmul.f32 %v2843, %v2531
    %v2857 = vmul.f32 %v2843, %v2532
    %v2858 = vmul.f32 %v2843, %v2533
    %v2859 = vmul.f32 %v2843, %v2534
    %v2860 = vadd.f32 %v2844, %v2825
    %v2861 = vadd.f32 %v2845, %v2826
    %v2862 = vadd.f32 %v2846, %v2827
    %v2863 = vadd.f32 %v2847, %v2828
    %v2864 = vadd.f32 %v2848, %v2829
    %v2865 = vadd.f32 %v2849, %v2830
    %v2866 = vadd.f32 %v2850, %v2831
    %v2867 = vadd.f32 %v2851, %v2832
    %v2868 = vadd.f32 %v2852, %v2833
    %v2869 = vadd.f32 %v2853, %v2834
    %v2870 = vadd.f32 %v2854, %v2835
    %v2871 = vadd.f32 %v2855, %v2836
    %v2872 = vadd.f32 %v2856, %v2837
    %v2873 = vadd.f32 %v2857, %v2838
    %v2874 = vadd.f32 %v2858, %v2839
    %v2875 = vadd.f32 %v2859, %v2840
    %s2876 = scalar_lea.vmem [#allocation6], 384
    %v2877 = vld [vmem:[%s2876] sm:$0xff]
    %v2878 = vld [vmem:[%s2876 + $0x8] sm:$0xff]
    %v2879 = vld [vmem:[%s2876 + $0x10] sm:$0xff]
    %v2880 = vld [vmem:[%s2876 + $0x18] sm:$0xff]
    %v2881 = vld [vmem:[%s2876 + $0x20] sm:$0xff]
    %v2882 = vld [vmem:[%s2876 + $0x28] sm:$0xff]
    %v2883 = vld [vmem:[%s2876 + $0x30] sm:$0xff]
    %v2884 = vld [vmem:[%s2876 + $0x38] sm:$0xff]
    %v2885 = vld [vmem:[%s2876 + $0x40] sm:$0xff]
    %v2886 = vld [vmem:[%s2876 + $0x48] sm:$0xff]
    %v2887 = vld [vmem:[%s2876 + $0x50] sm:$0xff]
    %v2888 = vld [vmem:[%s2876 + $0x58] sm:$0xff]
    %v2889 = vld [vmem:[%s2876 + $0x60] sm:$0xff]
    %v2890 = vld [vmem:[%s2876 + $0x68] sm:$0xff]
    %v2891 = vld [vmem:[%s2876 + $0x70] sm:$0xff]
    %v2892 = vld [vmem:[%s2876 + $0x78] sm:$0xff]
    %s2893 = scalar_lea.vmem %s9, 3
    %v2894 = vld [vmem:[%s2893] sm:$0x1]
    %v2896 = vlaneseq
    %v2897 = vshrl.u32 %v2896, 7
    %v2898 = vsub.s32 0, %v2897
    %v2899 = vrot.slane %v2894, %v2898
    %2901 = vmatprep.subr.mxu0 0.0
    %2902 = vmatpush1.msra.mxu0 %v2877
    %2903 = vmatprep.subr.mxu0 0.0
    %2904 = vmatpush1.msra.mxu0 %v2878
    %2905 = vmatprep.subr.mxu0 0.0
    %2906 = vmatpush1.msra.mxu0 %v2879
    %2907 = vmatprep.subr.mxu0 0.0
    %2908 = vmatpush1.msra.mxu0 %v2880
    %2909 = vmatprep.subr.mxu0 0.0
    %2910 = vmatpush1.msra.mxu0 %v2881
    %2911 = vmatprep.subr.mxu0 0.0
    %2912 = vmatpush1.msra.mxu0 %v2882
    %2913 = vmatprep.subr.mxu0 0.0
    %2914 = vmatpush1.msra.mxu0 %v2883
    %2915 = vmatprep.subr.mxu0 0.0
    %2916 = vmatpush1.msra.mxu0 %v2884
    %2917 = vmatprep.subr.mxu0 0.0
    %2918 = vmatpush1.msra.mxu0 %v2885
    %2919 = vmatprep.subr.mxu0 0.0
    %2920 = vmatpush1.msra.mxu0 %v2886
    %2921 = vmatprep.subr.mxu0 0.0
    %2922 = vmatpush1.msra.mxu0 %v2887
    %2923 = vmatprep.subr.mxu0 0.0
    %2924 = vmatpush1.msra.mxu0 %v2888
    %2925 = vmatprep.subr.mxu0 0.0
    %2926 = vmatpush1.msra.mxu0 %v2889
    %2927 = vmatprep.subr.mxu0 0.0
    %2928 = vmatpush1.msra.mxu0 %v2890
    %2929 = vmatprep.subr.mxu0 0.0
    %2930 = vmatpush1.msra.mxu0 %v2891
    %2931 = vmatprep.subr.mxu0 0.0
    %2932 = vmatpush1.msra.mxu0 %v2892
    %2933 = vmatprep.subr.mxu0 0.0
    %2934 = vmatpush1.msra.mxu0 0.0
    %2935 = vmatprep.subr.mxu0 0.0
    %2936 = vmatpush1.msra.mxu0 0.0
    %2937 = vmatprep.subr.mxu0 0.0
    %2938 = vmatpush1.msra.mxu0 0.0
    %2939 = vmatprep.subr.mxu0 0.0
    %2940 = vmatpush1.msra.mxu0 0.0
    %2941 = vmatprep.subr.mxu0 0.0
    %2942 = vmatpush1.msra.mxu0 0.0
    %2943 = vmatprep.subr.mxu0 0.0
    %2944 = vmatpush1.msra.mxu0 0.0
    %2945 = vmatprep.subr.mxu0 0.0
    %2946 = vmatpush1.msra.mxu0 0.0
    %2947 = vmatprep.subr.mxu0 0.0
    %2948 = vmatpush1.msra.mxu0 0.0
    %2949 = vmatprep.subr.mxu0 0.0
    %2950 = vmatpush1.msra.mxu0 0.0
    %2951 = vmatprep.subr.mxu0 0.0
    %2952 = vmatpush1.msra.mxu0 0.0
    %2953 = vmatprep.subr.mxu0 0.0
    %2954 = vmatpush1.msra.mxu0 0.0
    %2955 = vmatprep.subr.mxu0 0.0
    %2956 = vmatpush1.msra.mxu0 0.0
    %2957 = vmatprep.subr.mxu0 0.0
    %2958 = vmatpush1.msra.mxu0 0.0
    %2959 = vmatprep.subr.mxu0 0.0
    %2960 = vmatpush1.msra.mxu0 0.0
    %2961 = vmatprep.subr.mxu0 0.0
    %2962 = vmatpush1.msra.mxu0 0.0
    %2963 = vmatprep.subr.mxu0 0.0
    %2964 = vmatpush1.msra.mxu0 0.0
    %2965 = vmatprep.mubr.f32.mxu0 0.0
    %2966 = vmatmul.mubr.f32.gmra.mrb[0].mxu0 %v2860
    %v2967 = vpop.f32.mrb[0].mxu0
    %v2968 = vadd.f32 %v2899, %v2967
    %v2969 = vpop.f32.mrb[0].mxu0
    %2970 = vmatprep.mubr.f32.mxu0 0.0
    %2971 = vmatmul.mubr.f32.gmra.mrb[0].mxu0 %v2861
    %v2972 = vpop.f32.mrb[0].mxu0
    %v2973 = vadd.f32 %v2899, %v2972
    %v2974 = vpop.f32.mrb[0].mxu0
    %2975 = vmatprep.mubr.f32.mxu0 0.0
    %2976 = vmatmul.mubr.f32.gmra.mrb[0].mxu0 %v2862
    %v2977 = vpop.f32.mrb[0].mxu0
    %v2978 = vadd.f32 %v2899, %v2977
    %v2979 = vpop.f32.mrb[0].mxu0
    %2980 = vmatprep.mubr.f32.mxu0 0.0
    %2981 = vmatmul.mubr.f32.gmra.mrb[0].mxu0 %v2863
    %v2982 = vpop.f32.mrb[0].mxu0
    %v2983 = vadd.f32 %v2899, %v2982
    %v2984 = vpop.f32.mrb[0].mxu0
    %2985 = vmatprep.mubr.f32.mxu0 0.0
    %2986 = vmatmul.mubr.f32.gmra.mrb[0].mxu0 %v2864
    %v2987 = vpop.f32.mrb[0].mxu0
    %v2988 = vadd.f32 %v2899, %v2987
    %v2989 = vpop.f32.mrb[0].mxu0
    %2990 = vmatprep.mubr.f32.mxu0 0.0
    %2991 = vmatmul.mubr.f32.gmra.mrb[0].mxu0 %v2865
    %v2992 = vpop.f32.mrb[0].mxu0
    %v2993 = vadd.f32 %v2899, %v2992
    %v2994 = vpop.f32.mrb[0].mxu0
    %2995 = vmatprep.mubr.f32.mxu0 0.0
    %2996 = vmatmul.mubr.f32.gmra.mrb[0].mxu0 %v2866
    %v2997 = vpop.f32.mrb[0].mxu0
    %v2998 = vadd.f32 %v2899, %v2997
    %v2999 = vpop.f32.mrb[0].mxu0
    %3000 = vmatprep.mubr.f32.mxu0 0.0
    %3001 = vmatmul.mubr.f32.gmra.mrb[0].mxu0 %v2867
    %v3002 = vpop.f32.mrb[0].mxu0
    %v3003 = vadd.f32 %v2899, %v3002
    %v3004 = vpop.f32.mrb[0].mxu0
    %3005 = vmatprep.mubr.f32.mxu0 0.0
    %3006 = vmatmul.mubr.f32.gmra.mrb[0].mxu0 %v2868
    %v3007 = vpop.f32.mrb[0].mxu0
    %v3008 = vadd.f32 %v2899, %v3007
    %v3009 = vpop.f32.mrb[0].mxu0
    %3010 = vmatprep.mubr.f32.mxu0 0.0
    %3011 = vmatmul.mubr.f32.gmra.mrb[0].mxu0 %v2869
    %v3012 = vpop.f32.mrb[0].mxu0
    %v3013 = vadd.f32 %v2899, %v3012
    %v3014 = vpop.f32.mrb[0].mxu0
    %3015 = vmatprep.mubr.f32.mxu0 0.0
    %3016 = vmatmul.mubr.f32.gmra.mrb[0].mxu0 %v2870
    %v3017 = vpop.f32.mrb[0].mxu0
    %v3018 = vadd.f32 %v2899, %v3017
    %v3019 = vpop.f32.mrb[0].mxu0
    %3020 = vmatprep.mubr.f32.mxu0 0.0
    %3021 = vmatmul.mubr.f32.gmra.mrb[0].mxu0 %v2871
    %v3022 = vpop.f32.mrb[0].mxu0
    %v3023 = vadd.f32 %v2899, %v3022
    %v3024 = vpop.f32.mrb[0].mxu0
    %3025 = vmatprep.mubr.f32.mxu0 0.0
    %3026 = vmatmul.mubr.f32.gmra.mrb[0].mxu0 %v2872
    %v3027 = vpop.f32.mrb[0].mxu0
    %v3028 = vadd.f32 %v2899, %v3027
    %v3029 = vpop.f32.mrb[0].mxu0
    %3030 = vmatprep.mubr.f32.mxu0 0.0
    %3031 = vmatmul.mubr.f32.gmra.mrb[0].mxu0 %v2873
    %v3032 = vpop.f32.mrb[0].mxu0
    %v3033 = vadd.f32 %v2899, %v3032
    %v3034 = vpop.f32.mrb[0].mxu0
    %3035 = vmatprep.mubr.f32.mxu0 0.0
    %3036 = vmatmul.mubr.f32.gmra.mrb[0].mxu0 %v2874
    %v3037 = vpop.f32.mrb[0].mxu0
    %v3038 = vadd.f32 %v2899, %v3037
    %v3039 = vpop.f32.mrb[0].mxu0
    %3040 = vmatprep.mubr.f32.mxu0 0.0
    %3041 = vmatmul.mubr.f32.gmra.mrb[0].mxu0 %v2875
    %v3042 = vpop.f32.mrb[0].mxu0
    %v3043 = vadd.f32 %v2899, %v3042
    %v3044 = vpop.f32.mrb[0].mxu0
    %3045 = vdwg.mxu0
    %v3046 = vmax.f32 %v2968, 0.0
    %v3047 = vmax.f32 %v2973, 0.0
    %v3048 = vmax.f32 %v2978, 0.0
    %v3049 = vmax.f32 %v2983, 0.0
    %v3050 = vmax.f32 %v2988, 0.0
    %v3051 = vmax.f32 %v2993, 0.0
    %v3052 = vmax.f32 %v2998, 0.0
    %v3053 = vmax.f32 %v3003, 0.0
    %v3054 = vmax.f32 %v3008, 0.0
    %v3055 = vmax.f32 %v3013, 0.0
    %v3056 = vmax.f32 %v3018, 0.0
    %v3057 = vmax.f32 %v3023, 0.0
    %v3058 = vmax.f32 %v3028, 0.0
    %v3059 = vmax.f32 %v3033, 0.0
    %v3060 = vmax.f32 %v3038, 0.0
    %v3061 = vmax.f32 %v3043, 0.0
    %s3062 = scalar_lea.vmem [#allocation7], 384
    %v3063 = vld [vmem:[%s3062] sm:$0xff]
    %v3064 = vld [vmem:[%s3062 + $0x8] sm:$0xff]
    %v3065 = vld [vmem:[%s3062 + $0x10] sm:$0xff]
    %v3066 = vld [vmem:[%s3062 + $0x18] sm:$0xff]
    %v3067 = vld [vmem:[%s3062 + $0x20] sm:$0xff]
    %v3068 = vld [vmem:[%s3062 + $0x28] sm:$0xff]
    %v3069 = vld [vmem:[%s3062 + $0x30] sm:$0xff]
    %v3070 = vld [vmem:[%s3062 + $0x38] sm:$0xff]
    %v3071 = vld [vmem:[%s3062 + $0x40] sm:$0xff]
    %v3072 = vld [vmem:[%s3062 + $0x48] sm:$0xff]
    %v3073 = vld [vmem:[%s3062 + $0x50] sm:$0xff]
    %v3074 = vld [vmem:[%s3062 + $0x58] sm:$0xff]
    %v3075 = vld [vmem:[%s3062 + $0x60] sm:$0xff]
    %v3076 = vld [vmem:[%s3062 + $0x68] sm:$0xff]
    %v3077 = vld [vmem:[%s3062 + $0x70] sm:$0xff]
    %v3078 = vld [vmem:[%s3062 + $0x78] sm:$0xff]
    %s3079 = scalar_lea.vmem %s11, 3
    %v3080 = vld [vmem:[%s3079] sm:$0x1]
    %v3082 = vlaneseq
    %v3083 = vshrl.u32 %v3082, 7
    %v3084 = vsub.s32 0, %v3083
    %v3085 = vrot.slane %v3080, %v3084
    %3087 = vmatprep.subr.mxu0 0.0
    %3088 = vmatpush1.msra.mxu0 %v3063
    %3089 = vmatprep.subr.mxu0 0.0
    %3090 = vmatpush1.msra.mxu0 %v3064
    %3091 = vmatprep.subr.mxu0 0.0
    %3092 = vmatpush1.msra.mxu0 %v3065
    %3093 = vmatprep.subr.mxu0 0.0
    %3094 = vmatpush1.msra.mxu0 %v3066
    %3095 = vmatprep.subr.mxu0 0.0
    %3096 = vmatpush1.msra.mxu0 %v3067
    %3097 = vmatprep.subr.mxu0 0.0
    %3098 = vmatpush1.msra.mxu0 %v3068
    %3099 = vmatprep.subr.mxu0 0.0
    %3100 = vmatpush1.msra.mxu0 %v3069
    %3101 = vmatprep.subr.mxu0 0.0
    %3102 = vmatpush1.msra.mxu0 %v3070
    %3103 = vmatprep.subr.mxu0 0.0
    %3104 = vmatpush1.msra.mxu0 %v3071
    %3105 = vmatprep.subr.mxu0 0.0
    %3106 = vmatpush1.msra.mxu0 %v3072
    %3107 = vmatprep.subr.mxu0 0.0
    %3108 = vmatpush1.msra.mxu0 %v3073
    %3109 = vmatprep.subr.mxu0 0.0
    %3110 = vmatpush1.msra.mxu0 %v3074
    %3111 = vmatprep.subr.mxu0 0.0
    %3112 = vmatpush1.msra.mxu0 %v3075
    %3113 = vmatprep.subr.mxu0 0.0
    %3114 = vmatpush1.msra.mxu0 %v3076
    %3115 = vmatprep.subr.mxu0 0.0
    %3116 = vmatpush1.msra.mxu0 %v3077
    %3117 = vmatprep.subr.mxu0 0.0
    %3118 = vmatpush1.msra.mxu0 %v3078
    %3119 = vmatprep.subr.mxu0 0.0
    %3120 = vmatpush1.msra.mxu0 0.0
    %3121 = vmatprep.subr.mxu0 0.0
    %3122 = vmatpush1.msra.mxu0 0.0
    %3123 = vmatprep.subr.mxu0 0.0
    %3124 = vmatpush1.msra.mxu0 0.0
    %3125 = vmatprep.subr.mxu0 0.0
    %3126 = vmatpush1.msra.mxu0 0.0
    %3127 = vmatprep.subr.mxu0 0.0
    %3128 = vmatpush1.msra.mxu0 0.0
    %3129 = vmatprep.subr.mxu0 0.0
    %3130 = vmatpush1.msra.mxu0 0.0
    %3131 = vmatprep.subr.mxu0 0.0
    %3132 = vmatpush1.msra.mxu0 0.0
    %3133 = vmatprep.subr.mxu0 0.0
    %3134 = vmatpush1.msra.mxu0 0.0
    %3135 = vmatprep.subr.mxu0 0.0
    %3136 = vmatpush1.msra.mxu0 0.0
    %3137 = vmatprep.subr.mxu0 0.0
    %3138 = vmatpush1.msra.mxu0 0.0
    %3139 = vmatprep.subr.mxu0 0.0
    %3140 = vmatpush1.msra.mxu0 0.0
    %3141 = vmatprep.subr.mxu0 0.0
    %3142 = vmatpush1.msra.mxu0 0.0
    %3143 = vmatprep.subr.mxu0 0.0
    %3144 = vmatpush1.msra.mxu0 0.0
    %3145 = vmatprep.subr.mxu0 0.0
    %3146 = vmatpush1.msra.mxu0 0.0
    %3147 = vmatprep.subr.mxu0 0.0
    %3148 = vmatpush1.msra.mxu0 0.0
    %3149 = vmatprep.subr.mxu0 0.0
    %3150 = vmatpush1.msra.mxu0 0.0
    %3151 = vmatprep.mubr.f32.mxu0 0.0
    %3152 = vmatmul.mubr.f32.gmra.mrb[0].mxu0 %v3046
    %v3153 = vpop.f32.mrb[0].mxu0
    %v3154 = vadd.f32 %v3085, %v3153
    %v3155 = vpop.f32.mrb[0].mxu0
    %3156 = vmatprep.mubr.f32.mxu0 0.0
    %3157 = vmatmul.mubr.f32.gmra.mrb[0].mxu0 %v3047
    %v3158 = vpop.f32.mrb[0].mxu0
    %v3159 = vadd.f32 %v3085, %v3158
    %v3160 = vpop.f32.mrb[0].mxu0
    %3161 = vmatprep.mubr.f32.mxu0 0.0
    %3162 = vmatmul.mubr.f32.gmra.mrb[0].mxu0 %v3048
    %v3163 = vpop.f32.mrb[0].mxu0
    %v3164 = vadd.f32 %v3085, %v3163
    %v3165 = vpop.f32.mrb[0].mxu0
    %3166 = vmatprep.mubr.f32.mxu0 0.0
    %3167 = vmatmul.mubr.f32.gmra.mrb[0].mxu0 %v3049
    %v3168 = vpop.f32.mrb[0].mxu0
    %v3169 = vadd.f32 %v3085, %v3168
    %v3170 = vpop.f32.mrb[0].mxu0
    %3171 = vmatprep.mubr.f32.mxu0 0.0
    %3172 = vmatmul.mubr.f32.gmra.mrb[0].mxu0 %v3050
    %v3173 = vpop.f32.mrb[0].mxu0
    %v3174 = vadd.f32 %v3085, %v3173
    %v3175 = vpop.f32.mrb[0].mxu0
    %3176 = vmatprep.mubr.f32.mxu0 0.0
    %3177 = vmatmul.mubr.f32.gmra.mrb[0].mxu0 %v3051
    %v3178 = vpop.f32.mrb[0].mxu0
    %v3179 = vadd.f32 %v3085, %v3178
    %v3180 = vpop.f32.mrb[0].mxu0
    %3181 = vmatprep.mubr.f32.mxu0 0.0
    %3182 = vmatmul.mubr.f32.gmra.mrb[0].mxu0 %v3052
    %v3183 = vpop.f32.mrb[0].mxu0
    %v3184 = vadd.f32 %v3085, %v3183
    %v3185 = vpop.f32.mrb[0].mxu0
    %3186 = vmatprep.mubr.f32.mxu0 0.0
    %3187 = vmatmul.mubr.f32.gmra.mrb[0].mxu0 %v3053
    %v3188 = vpop.f32.mrb[0].mxu0
    %v3189 = vadd.f32 %v3085, %v3188
    %v3190 = vpop.f32.mrb[0].mxu0
    %3191 = vmatprep.mubr.f32.mxu0 0.0
    %3192 = vmatmul.mubr.f32.gmra.mrb[0].mxu0 %v3054
    %v3193 = vpop.f32.mrb[0].mxu0
    %v3194 = vadd.f32 %v3085, %v3193
    %v3195 = vpop.f32.mrb[0].mxu0
    %3196 = vmatprep.mubr.f32.mxu0 0.0
    %3197 = vmatmul.mubr.f32.gmra.mrb[0].mxu0 %v3055
    %v3198 = vpop.f32.mrb[0].mxu0
    %v3199 = vadd.f32 %v3085, %v3198
    %v3200 = vpop.f32.mrb[0].mxu0
    %3201 = vmatprep.mubr.f32.mxu0 0.0
    %3202 = vmatmul.mubr.f32.gmra.mrb[0].mxu0 %v3056
    %v3203 = vpop.f32.mrb[0].mxu0
    %v3204 = vadd.f32 %v3085, %v3203
    %v3205 = vpop.f32.mrb[0].mxu0
    %3206 = vmatprep.mubr.f32.mxu0 0.0
    %3207 = vmatmul.mubr.f32.gmra.mrb[0].mxu0 %v3057
    %v3208 = vpop.f32.mrb[0].mxu0
    %v3209 = vadd.f32 %v3085, %v3208
    %v3210 = vpop.f32.mrb[0].mxu0
    %3211 = vmatprep.mubr.f32.mxu0 0.0
    %3212 = vmatmul.mubr.f32.gmra.mrb[0].mxu0 %v3058
    %v3213 = vpop.f32.mrb[0].mxu0
    %v3214 = vadd.f32 %v3085, %v3213
    %v3215 = vpop.f32.mrb[0].mxu0
    %3216 = vmatprep.mubr.f32.mxu0 0.0
    %3217 = vmatmul.mubr.f32.gmra.mrb[0].mxu0 %v3059
    %v3218 = vpop.f32.mrb[0].mxu0
    %v3219 = vadd.f32 %v3085, %v3218
    %v3220 = vpop.f32.mrb[0].mxu0
    %3221 = vmatprep.mubr.f32.mxu0 0.0
    %3222 = vmatmul.mubr.f32.gmra.mrb[0].mxu0 %v3060
    %v3223 = vpop.f32.mrb[0].mxu0
    %v3224 = vadd.f32 %v3085, %v3223
    %v3225 = vpop.f32.mrb[0].mxu0
    %3226 = vmatprep.mubr.f32.mxu0 0.0
    %3227 = vmatmul.mubr.f32.gmra.mrb[0].mxu0 %v3061
    %v3228 = vpop.f32.mrb[0].mxu0
    %v3229 = vadd.f32 %v3085, %v3228
    %v3230 = vpop.f32.mrb[0].mxu0
    %3231 = vdwg.mxu0
    %v3232 = vmax.f32 %v3154, 0.0
    %v3233 = vmax.f32 %v3159, 0.0
    %v3234 = vmax.f32 %v3164, 0.0
    %v3235 = vmax.f32 %v3169, 0.0
    %v3236 = vmax.f32 %v3174, 0.0
    %v3237 = vmax.f32 %v3179, 0.0
    %v3238 = vmax.f32 %v3184, 0.0
    %v3239 = vmax.f32 %v3189, 0.0
    %v3240 = vmax.f32 %v3194, 0.0
    %v3241 = vmax.f32 %v3199, 0.0
    %v3242 = vmax.f32 %v3204, 0.0
    %v3243 = vmax.f32 %v3209, 0.0
    %v3244 = vmax.f32 %v3214, 0.0
    %v3245 = vmax.f32 %v3219, 0.0
    %v3246 = vmax.f32 %v3224, 0.0
    %v3247 = vmax.f32 %v3229, 0.0
    %3248 = vst [vmem:[#allocation9 + $0x18] sm:$0xff] %v3232
    %3249 = vst [vmem:[#allocation9 + $0x38] sm:$0xff] %v3233
    %3250 = vst [vmem:[#allocation9 + $0x58] sm:$0xff] %v3234
    %3251 = vst [vmem:[#allocation9 + $0x78] sm:$0xff] %v3235
    %3252 = vst [vmem:[#allocation9 + $0x98] sm:$0xff] %v3236
    %3253 = vst [vmem:[#allocation9 + $0xb8] sm:$0xff] %v3237
    %3254 = vst [vmem:[#allocation9 + $0xd8] sm:$0xff] %v3238
    %3255 = vst [vmem:[#allocation9 + $0xf8] sm:$0xff] %v3239
    %3256 = vst [vmem:[#allocation9 + $0x118] sm:$0xff] %v3240
    %3257 = vst [vmem:[#allocation9 + $0x138] sm:$0xff] %v3241
    %3258 = vst [vmem:[#allocation9 + $0x158] sm:$0xff] %v3242
    %3259 = vst [vmem:[#allocation9 + $0x178] sm:$0xff] %v3243
    %3260 = vst [vmem:[#allocation9 + $0x198] sm:$0xff] %v3244
    %3261 = vst [vmem:[#allocation9 + $0x1b8] sm:$0xff] %v3245
    %3262 = vst [vmem:[#allocation9 + $0x1d8] sm:$0xff] %v3246
    %3263 = vst [vmem:[#allocation9 + $0x1f8] sm:$0xff] %v3247
    // Predicated region
    $region62: #{tpu_custom_call.1} parent=1 // pred_check
      _
    $region63: #{tpu_custom_call.1} parent=1 // pred_check_branch
      %3265 = sbr.rel (0) target = $region65
    $region64: #{tpu_custom_call.1} parent=1 // pred_region
      %s3267 = ssub.s32 8192, 8192
      %3268 = vsyncadd [#allocation4], %s3267
      %s3269 = sshll.u32 [#allocation9], 4
      %s3270 = int_to_ptr.vmem [resolvable:$true] %s3269
      %3275 = dma.vmem_to_hbm [thread:$0]  %s3270, 8192, %s12, [#allocation4], 512, 512, 32
    $region65: #{tpu_custom_call.1} parent=1 // pred_fallthru
      _
    // Predicated region
    $region66: #{tpu_custom_call.1} parent=1 // pred_check
      _
    $region67: #{tpu_custom_call.1} parent=1 // pred_check_branch
      %3277 = sbr.rel (0) target = $region69
    $region68: #{tpu_custom_call.1} parent=1 // pred_region
      %3278 = dma.done [#allocation4], 8192
    $region69: #{tpu_custom_call.1} parent=1 // pred_fallthru
      _
    %3279 = vsyncpa [#allocation3], 1
    %3280 = vsyncpa [#allocation8], 1
    %3281 = vsyncpa [#allocation4], 1
    %3282 = vsyncpa [#allocation5], 1

</llo_original>
